<compile_context>
chip_gen: v5e
topology: v5e:2x2
jax: 0.10.0
libtpu: 0.0.40
codegen_flags: <defaults>
</compile_context>

<pallas_src>
import functools

import jax
import jax.numpy as jnp
from jax import lax
from jax.experimental import pallas as pl
from jax.experimental.pallas import tpu as pltpu


def _round_up(a, b):
    return (a + b - 1) // b * b


def _pick_tile(n_pad, target):
    """Largest multiple of 128 that divides n_pad and is <= target (n_pad % 128 == 0)."""
    t = max(128, min(target, n_pad))
    t = (t // 128) * 128
    while n_pad % t != 0:
        t -= 128
    return t


def _sage_kernel(adj_ref, xall_ref, xi_ref,
                 w1x_ref, w1m_ref, b1_ref, w2_ref, b2_ref,
                 o_ref, msg_acc, deg_acc, *, tile_k):
    k = pl.program_id(1)

    @pl.when(k == 0)
    def _():
        msg_acc[...] = jnp.zeros_like(msg_acc)
        deg_acc[...] = jnp.zeros_like(deg_acc)

    # int8 adjacency tile (0/1) -> bf16 is exact; the upcast runs on the VPU which
    # has slack in this HBM-bound kernel, while HBM streams half the bytes of bf16.
    adj = adj_ref[...].astype(jnp.bfloat16)                                  # (TM, TK)

    # Fused in-degree accumulation (row-sum of this adjacency tile). Cross-lane
    # reduce uses the XLU slot, which is idle under the DMA bound. f32 accumulate
    # keeps integer degrees exact.
    deg_acc[...] += jnp.sum(adj.astype(jnp.float32), axis=1, keepdims=True)  # (TM, 1)

    # x is fully resident in VMEM as bf16; slice the current K block in-kernel.
    start = pl.multiple_of(k * tile_k, tile_k)
    xk = xall_ref[pl.ds(start, tile_k), :]                                   # (TK, D)

    # Neighbor-sum: bf16 x bf16 -> f32 accumulation on the MXU.
    msg_acc[...] += jnp.dot(adj, xk, preferred_element_type=jnp.float32)

    @pl.when(k == pl.num_programs(1) - 1)
    def _():
        deg = deg_acc[...]
        inv_deg = jnp.where(deg > 0.0, 1.0 / deg, 0.0)
        msg = msg_acc[...] * inv_deg                         # copy_u_mean message

        # concat([x, msg], 1) @ W1 == x @ W1[:D] + msg @ W1[D:]  (no concat copy).
        h1 = (jnp.dot(xi_ref[...], w1x_ref[...], preferred_element_type=jnp.float32)
              + jnp.dot(msg, w1m_ref[...], preferred_element_type=jnp.float32)
              + b1_ref[...])

        # Exact (erf) GELU, matching torch.nn.GELU default. Dropout = identity (eval).
        h1 = 0.5 * h1 * (1.0 + lax.erf(h1 * jnp.float32(0.7071067811865476)))

        out = jnp.dot(h1, w2_ref[...], preferred_element_type=jnp.float32) + b2_ref[...]
        o_ref[...] = out.astype(o_ref.dtype)


def sage_forward(adj, x, w1, b1, w2, b2, *, tile_m=512, tile_k=1024):
    """adj: (N, N) dense adjacency, adj[i, j] = 1 iff edge j -> i. Pass it pre-packed
    as int8 (graph is static across calls); other dtypes are cast here (one pass).
    x: (N, D) f32. w1: (2D, H), b1: (H,), w2: (H, D), b2: (D,) in (in, out) layout."""
    N, D = x.shape
    H = w1.shape[1]
    assert w1.shape[0] == 2 * D

    # Compact adjacency stream. Ideally the caller provides int8 once; 0/1 is exact.
    adj_i8 = adj if adj.dtype == jnp.int8 else adj.astype(jnp.int8)

    # Pad N to a multiple of 128; padded rows/cols are all-zero so their degree is 0
    # and their message stays 0. Padded output rows are sliced off below.
    N_pad = _round_up(N, 128)
    tm = _pick_tile(N_pad, tile_m)
    tk = _pick_tile(N_pad, tile_k)
    if N_pad != N:
        pad = N_pad - N
        adj_i8 = jnp.pad(adj_i8, ((0, pad), (0, pad)))
        x_p = jnp.pad(x, ((0, pad), (0, 0)))
    else:
        x_p = x

    x_bf16 = x_p.astype(jnp.bfloat16)     # aggregation operand (documented precision)
    w1x = w1[:D]                          # acts on self features
    w1m = w1[D:]                          # acts on the aggregated message
    b1r = b1.reshape(1, H)
    b2r = b2.reshape(1, D)

    grid = (N_pad // tm, N_pad // tk)     # (row tiles : parallel, K tiles : reduction)
    kernel = functools.partial(_sage_kernel, tile_k=tk)

    out = pl.pallas_call(
        kernel,
        out_shape=jax.ShapeDtypeStruct((N_pad, D), x.dtype),
        grid_spec=pltpu.PrefetchScalarGridSpec(
            num_scalar_prefetch=0,
            grid=grid,
            in_specs=[
                pl.BlockSpec((tm, tk), lambda i, k: (i, k)),      # adj tile (int8)
                pl.BlockSpec((N_pad, D), lambda i, k: (0, 0)),    # resident bf16 x
                pl.BlockSpec((tm, D), lambda i, k: (i, 0)),       # self features (f32)
                pl.BlockSpec((D, H), lambda i, k: (0, 0)),        # W1 (self half)
                pl.BlockSpec((D, H), lambda i, k: (0, 0)),        # W1 (message half)
                pl.BlockSpec((1, H), lambda i, k: (0, 0)),        # b1
                pl.BlockSpec((H, D), lambda i, k: (0, 0)),        # W2
                pl.BlockSpec((1, D), lambda i, k: (0, 0)),        # b2
            ],
            out_specs=pl.BlockSpec((tm, D), lambda i, k: (i, 0)),
            scratch_shapes=[pltpu.VMEM((tm, D), jnp.float32),     # msg accumulator
                            pltpu.VMEM((tm, 1), jnp.float32)],    # degree accumulator
        ),
        compiler_params=pltpu.CompilerParams(
            dimension_semantics=("parallel", "arbitrary"),
            vmem_limit_bytes=48 * 1024 * 1024,   # safe on v7x (64 MiB physical VMEM)
        ),
    )(adj_i8, x_bf16, x_p, w1x, w1m, b1r, w2, b2r)

    return out[:N]


def sage_reference(adj, x, w1, b1, w2, b2, *, bf16_agg=True):
    """Pure-JAX reference. With bf16_agg=True the aggregation uses the same bf16-input
    / f32-accumulate precision as the kernel (adjacency 0/1 is exact in bf16)."""
    a = adj.astype(jnp.float32)
    deg = a.sum(axis=1, keepdims=True)
    inv_deg = jnp.where(deg > 0.0, 1.0 / deg, 0.0)
    if bf16_agg:
        msg = jnp.dot(a.astype(jnp.bfloat16), x.astype(jnp.bfloat16),
                      preferred_element_type=jnp.float32) * inv_deg
    else:
        msg = (a @ x) * inv_deg
    h = jnp.concatenate([x, msg], axis=1)
    h1 = h @ w1 + b1
    h1 = 0.5 * h1 * (1.0 + lax.erf(h1 * jnp.float32(0.7071067811865476)))
    return h1 @ w2 + b2


if __name__ == "__main__":
    # Small, deterministic configuration (SAGEModule: input_dim_multiplier = 2).
    N = 300                # number of nodes (deliberately NOT a multiple of 128)
    dim = 32               # node feature dim
    hidden_dim_multiplier = 2
    hidden = dim * hidden_dim_multiplier      # 64
    in_dim = 2 * dim                          # 64
    # dropout p is irrelevant in eval mode (identity).

    key = jax.random.PRNGKey(0)
    k_adj, k_x, k_w1, k_b1, k_w2, k_b2 = jax.random.split(key, 6)

    # Random sparse-ish directed graph, stored pre-packed as int8 (j -> i).
    adj = (jax.random.uniform(k_adj, (N, N)) < 0.15).astype(jnp.int8)

    x = jax.random.normal(k_x, (N, dim), dtype=jnp.float32)

    # "Linear" parameters, stored transposed: (in, out).
    w1 = jax.random.normal(k_w1, (in_dim, hidden), dtype=jnp.float32) * 0.1
    b1 = jax.random.normal(k_b1, (hidden,), dtype=jnp.float32) * 0.1
    w2 = jax.random.normal(k_w2, (hidden, dim), dtype=jnp.float32) * 0.1
    b2 = jax.random.normal(k_b2, (dim,), dtype=jnp.float32) * 0.1

    # Default (large-tile) path: single grid step for this small graph.
    out = sage_forward(adj, x, w1, b1, w2, b2)
    out = jax.block_until_ready(out)
    assert out.shape == (N, dim)

    # Small-tile path: exercises padding, the K-tiled accumulation and the fused
    # in-degree computation across multiple grid steps.
    out_small = sage_forward(adj, x, w1, b1, w2, b2, tile_m=128, tile_k=128)
    out_small = jax.block_until_ready(out_small)

    # Tight check vs. a reference using the same (documented) bf16 aggregation precision.
    ref_bf16 = sage_reference(adj, x, w1, b1, w2, b2, bf16_agg=True)
    assert jnp.allclose(out, ref_bf16, atol=1e-3, rtol=1e-3), "mismatch vs bf16-agg reference"
    assert jnp.allclose(out_small, ref_bf16, atol=1e-3, rtol=1e-3), "small-tile mismatch"

    # Loose sanity check vs. the full-f32 reference.
    ref_f32 = sage_reference(adj, x, w1, b1, w2, b2, bf16_agg=False)
    assert jnp.allclose(out, ref_f32, atol=5e-2, rtol=5e-2), "mismatch vs f32 reference"

    print("KERNEL_OK")
</pallas_src>

<mosaic_0001>
module attributes {stable_mosaic.version = 11 : i64} {
  func.func @_sage_kernel(%arg0: i32, %arg1: i32, %arg2: memref<384x384xi8, #tpu.memory_space<vmem>>, %arg3: memref<384x32xbf16, #tpu.memory_space<vmem>>, %arg4: memref<384x32xf32, #tpu.memory_space<vmem>>, %arg5: memref<32x64xf32, #tpu.memory_space<vmem>>, %arg6: memref<32x64xf32, #tpu.memory_space<vmem>>, %arg7: memref<1x64xf32, #tpu.memory_space<vmem>>, %arg8: memref<64x32xf32, #tpu.memory_space<vmem>>, %arg9: memref<1x32xf32, #tpu.memory_space<vmem>>, %arg10: memref<384x32xf32, #tpu.memory_space<vmem>>, %arg11: memref<384x32xf32, #tpu.memory_space<vmem>>, %arg12: memref<384x1xf32, #tpu.memory_space<vmem>>) attributes {dimension_semantics = [#tpu.dimension_semantics<parallel>, #tpu.dimension_semantics<arbitrary>], iteration_bounds = array<i64: 1, 1>, scalar_prefetch = 0 : i64, scratch_operands = 2 : i64, tpu.core_type = #tpu.core_type<tc>, window_params = [{transform_indices = @transform_0, window_bounds = array<i64: 384, 384>}, {pipeline_mode = #tpu.pipeline_mode<synchronous>, transform_indices = @transform_1, window_bounds = array<i64: 384, 32>}, {transform_indices = @transform_2, window_bounds = array<i64: 384, 32>}, {pipeline_mode = #tpu.pipeline_mode<synchronous>, transform_indices = @transform_3, window_bounds = array<i64: 32, 64>}, {pipeline_mode = #tpu.pipeline_mode<synchronous>, transform_indices = @transform_4, window_bounds = array<i64: 32, 64>}, {pipeline_mode = #tpu.pipeline_mode<synchronous>, transform_indices = @transform_5, window_bounds = array<i64: 1, 64>}, {pipeline_mode = #tpu.pipeline_mode<synchronous>, transform_indices = @transform_6, window_bounds = array<i64: 64, 32>}, {pipeline_mode = #tpu.pipeline_mode<synchronous>, transform_indices = @transform_7, window_bounds = array<i64: 1, 32>}, {transform_indices = @transform_8, window_bounds = array<i64: 384, 32>}]} {
    %c0_i32 = arith.constant 0 : i32
    %0 = arith.cmpi eq, %arg1, %c0_i32 : i32
    %1 = arith.extui %0 : i1 to i32
    %c0_i32_0 = arith.constant 0 : i32
    %2 = arith.cmpi ne, %1, %c0_i32_0 : i32
    scf.if %2 {
      %cst_14 = arith.constant 0.000000e+00 : f32
      %22 = vector.broadcast %cst_14 : f32 to vector<384x32xf32>
      %c0_15 = arith.constant 0 : index
      %c0_16 = arith.constant 0 : index
      %23 = vector.load %arg11[%c0_15, %c0_16] : memref<384x32xf32, #tpu.memory_space<vmem>>, vector<384x32xf32>
      tpu.vector_store %arg11[%c0_15, %c0_16], %22 {strides = array<i32>} : memref<384x32xf32, #tpu.memory_space<vmem>>, vector<384x32xf32>,
      %cst_17 = arith.constant 0.000000e+00 : f32
      %24 = vector.broadcast %cst_17 : f32 to vector<384x1xf32>
      %c0_18 = arith.constant 0 : index
      %c0_19 = arith.constant 0 : index
      %25 = vector.load %arg12[%c0_18, %c0_19] : memref<384x1xf32, #tpu.memory_space<vmem>>, vector<384x1xf32>
      tpu.vector_store %arg12[%c0_18, %c0_19], %24 {strides = array<i32>} : memref<384x1xf32, #tpu.memory_space<vmem>>, vector<384x1xf32>,
    } else {
    }
    %c0 = arith.constant 0 : index
    %c0_1 = arith.constant 0 : index
    %3 = vector.load %arg2[%c0, %c0_1] : memref<384x384xi8, #tpu.memory_space<vmem>>, vector<384x384xi8>
    %4 = arith.sitofp %3 : vector<384x384xi8> to vector<384x384xbf16>
    %c0_2 = arith.constant 0 : index
    %c0_3 = arith.constant 0 : index
    %5 = vector.load %arg12[%c0_2, %c0_3] : memref<384x1xf32, #tpu.memory_space<vmem>>, vector<384x1xf32>
    %6 = arith.extf %4 : vector<384x384xbf16> to vector<384x384xf32>
    %cst = arith.constant dense<0.000000e+00> : vector<384xf32>
    %7 = vector.multi_reduction <add>, %6, %cst [1] : vector<384x384xf32> to vector<384xf32>
    %8 = vector.shape_cast %7 : vector<384xf32> to vector<384x1xf32>
    %9 = arith.addf %5, %8 : vector<384x1xf32>
    %c0_4 = arith.constant 0 : index
    %c0_5 = arith.constant 0 : index
    %10 = vector.load %arg12[%c0_4, %c0_5] : memref<384x1xf32, #tpu.memory_space<vmem>>, vector<384x1xf32>
    tpu.vector_store %arg12[%c0_4, %c0_5], %9 {strides = array<i32>} : memref<384x1xf32, #tpu.memory_space<vmem>>, vector<384x1xf32>,
    %c384_i32 = arith.constant 384 : i32
    %11 = arith.muli %arg1, %c384_i32 : i32
    %12 = tpu.assume_multiple %11, 384 : i32
    %13 = arith.index_cast %12 : i32 to index
    %c0_6 = arith.constant 0 : index
    %14 = vector.load %arg3[%13, %c0_6] : memref<384x32xbf16, #tpu.memory_space<vmem>>, vector<384x32xbf16>
    %c0_7 = arith.constant 0 : index
    %c0_8 = arith.constant 0 : index
    %15 = vector.load %arg11[%c0_7, %c0_8] : memref<384x32xf32, #tpu.memory_space<vmem>>, vector<384x32xf32>
    %cst_9 = arith.constant dense<0.000000e+00> : vector<384x32xf32>
    %16 = tpu.matmul %4, %14, %cst_9 {dimension_numbers = #tpu.dot_dimension_numbers<[1], [0], [0], [1], [0, 0, 1, 1], [], []>} : vector<384x384xbf16>, vector<384x32xbf16>, vector<384x32xf32> -> vector<384x32xf32>
    %17 = arith.addf %15, %16 : vector<384x32xf32>
    %c0_10 = arith.constant 0 : index
    %c0_11 = arith.constant 0 : index
    %18 = vector.load %arg11[%c0_10, %c0_11] : memref<384x32xf32, #tpu.memory_space<vmem>>, vector<384x32xf32>
    tpu.vector_store %arg11[%c0_10, %c0_11], %17 {strides = array<i32>} : memref<384x32xf32, #tpu.memory_space<vmem>>, vector<384x32xf32>,
    %c0_i32_12 = arith.constant 0 : i32
    %19 = arith.cmpi eq, %arg1, %c0_i32_12 : i32
    %20 = arith.extui %19 : i1 to i32
    %c0_i32_13 = arith.constant 0 : i32
    %21 = arith.cmpi ne, %20, %c0_i32_13 : i32
    scf.if %21 {
      %c0_14 = arith.constant 0 : index
      %c0_15 = arith.constant 0 : index
      %22 = vector.load %arg12[%c0_14, %c0_15] : memref<384x1xf32, #tpu.memory_space<vmem>>, vector<384x1xf32>
      %cst_16 = arith.constant 0.000000e+00 : f32
      %23 = vector.broadcast %cst_16 : f32 to vector<384x1xf32>
      %24 = arith.cmpf ogt, %22, %23 : vector<384x1xf32>
      %cst_17 = arith.constant 1.000000e+00 : f32
      %25 = vector.broadcast %cst_17 : f32 to vector<384x1xf32>
      %26 = arith.divf %25, %22 : vector<384x1xf32>
      %cst_18 = arith.constant 0.000000e+00 : f32
      %27 = vector.broadcast %cst_18 : f32 to vector<384x1xf32>
      %28 = arith.select %24, %26, %27 : vector<384x1xi1>, vector<384x1xf32>
      %c0_19 = arith.constant 0 : index
      %c0_20 = arith.constant 0 : index
      %29 = vector.load %arg11[%c0_19, %c0_20] : memref<384x32xf32, #tpu.memory_space<vmem>>, vector<384x32xf32>
      %30 = vector.broadcast %28 : vector<384x1xf32> to vector<384x32xf32>
      %31 = arith.mulf %29, %30 : vector<384x32xf32>
      %c0_21 = arith.constant 0 : index
      %c0_22 = arith.constant 0 : index
      %32 = vector.load %arg4[%c0_21, %c0_22] : memref<384x32xf32, #tpu.memory_space<vmem>>, vector<384x32xf32>
      %c0_23 = arith.constant 0 : index
      %c0_24 = arith.constant 0 : index
      %33 = vector.load %arg5[%c0_23, %c0_24] : memref<32x64xf32, #tpu.memory_space<vmem>>, vector<32x64xf32>
      %cst_25 = arith.constant dense<0.000000e+00> : vector<384x64xf32>
      %34 = tpu.matmul %32, %33, %cst_25 {dimension_numbers = #tpu.dot_dimension_numbers<[1], [0], [0], [1], [0, 0, 1, 1], [], []>} : vector<384x32xf32>, vector<32x64xf32>, vector<384x64xf32> -> vector<384x64xf32>
      %c0_26 = arith.constant 0 : index
      %c0_27 = arith.constant 0 : index
      %35 = vector.load %arg6[%c0_26, %c0_27] : memref<32x64xf32, #tpu.memory_space<vmem>>, vector<32x64xf32>
      %cst_28 = arith.constant dense<0.000000e+00> : vector<384x64xf32>
      %36 = tpu.matmul %31, %35, %cst_28 {dimension_numbers = #tpu.dot_dimension_numbers<[1], [0], [0], [1], [0, 0, 1, 1], [], []>} : vector<384x32xf32>, vector<32x64xf32>, vector<384x64xf32> -> vector<384x64xf32>
      %37 = arith.addf %34, %36 : vector<384x64xf32>
      %c0_29 = arith.constant 0 : index
      %c0_30 = arith.constant 0 : index
      %38 = vector.load %arg7[%c0_29, %c0_30] : memref<1x64xf32, #tpu.memory_space<vmem>>, vector<1x64xf32>
      %39 = vector.broadcast %38 : vector<1x64xf32> to vector<384x64xf32>
      %40 = arith.addf %37, %39 : vector<384x64xf32>
      %cst_31 = arith.constant 5.000000e-01 : f32
      %41 = vector.broadcast %cst_31 : f32 to vector<384x64xf32>
      %42 = arith.mulf %41, %40 : vector<384x64xf32>
      %cst_32 = arith.constant 0.707106769 : f32
      %43 = vector.broadcast %cst_32 : f32 to vector<384x64xf32>
      %44 = arith.mulf %40, %43 : vector<384x64xf32>
      %45 = math.erf %44 : vector<384x64xf32>
      %cst_33 = arith.constant 1.000000e+00 : f32
      %46 = vector.broadcast %cst_33 : f32 to vector<384x64xf32>
      %47 = arith.addf %46, %45 : vector<384x64xf32>
      %48 = arith.mulf %42, %47 : vector<384x64xf32>
      %c0_34 = arith.constant 0 : index
      %c0_35 = arith.constant 0 : index
      %49 = vector.load %arg8[%c0_34, %c0_35] : memref<64x32xf32, #tpu.memory_space<vmem>>, vector<64x32xf32>
      %cst_36 = arith.constant dense<0.000000e+00> : vector<384x32xf32>
      %50 = tpu.matmul %48, %49, %cst_36 {dimension_numbers = #tpu.dot_dimension_numbers<[1], [0], [0], [1], [0, 0, 1, 1], [], []>} : vector<384x64xf32>, vector<64x32xf32>, vector<384x32xf32> -> vector<384x32xf32>
      %c0_37 = arith.constant 0 : index
      %c0_38 = arith.constant 0 : index
      %51 = vector.load %arg9[%c0_37, %c0_38] : memref<1x32xf32, #tpu.memory_space<vmem>>, vector<1x32xf32>
      %52 = vector.broadcast %51 : vector<1x32xf32> to vector<384x32xf32>
      %53 = arith.addf %50, %52 : vector<384x32xf32>
      %c0_39 = arith.constant 0 : index
      %c0_40 = arith.constant 0 : index
      %54 = vector.load %arg10[%c0_39, %c0_40] : memref<384x32xf32, #tpu.memory_space<vmem>>, vector<384x32xf32>
      tpu.vector_store %arg10[%c0_39, %c0_40], %53 {strides = array<i32>} : memref<384x32xf32, #tpu.memory_space<vmem>>, vector<384x32xf32>,
    } else {
    }
    return
  }
  func.func @transform_0(%arg0: i32, %arg1: i32) -> (i32, i32) {
    %c0_i32 = arith.constant 0 : i32
    return %arg0, %arg1 : i32, i32
  }
  func.func @transform_1(%arg0: i32, %arg1: i32) -> (i32, i32) {
    %c0_i32 = arith.constant 0 : i32
    %c0_i32_0 = arith.constant 0 : i32
    %c0_i32_1 = arith.constant 0 : i32
    return %c0_i32, %c0_i32_0 : i32, i32
  }
  func.func @transform_2(%arg0: i32, %arg1: i32) -> (i32, i32) {
    %c0_i32 = arith.constant 0 : i32
    %c0_i32_0 = arith.constant 0 : i32
    return %arg0, %c0_i32 : i32, i32
  }
  func.func @transform_3(%arg0: i32, %arg1: i32) -> (i32, i32) {
    %c0_i32 = arith.constant 0 : i32
    %c0_i32_0 = arith.constant 0 : i32
    %c0_i32_1 = arith.constant 0 : i32
    return %c0_i32, %c0_i32_0 : i32, i32
  }
  func.func @transform_4(%arg0: i32, %arg1: i32) -> (i32, i32) {
    %c0_i32 = arith.constant 0 : i32
    %c0_i32_0 = arith.constant 0 : i32
    %c0_i32_1 = arith.constant 0 : i32
    return %c0_i32, %c0_i32_0 : i32, i32
  }
  func.func @transform_5(%arg0: i32, %arg1: i32) -> (i32, i32) {
    %c0_i32 = arith.constant 0 : i32
    %c0_i32_0 = arith.constant 0 : i32
    %c0_i32_1 = arith.constant 0 : i32
    return %c0_i32, %c0_i32_0 : i32, i32
  }
  func.func @transform_6(%arg0: i32, %arg1: i32) -> (i32, i32) {
    %c0_i32 = arith.constant 0 : i32
    %c0_i32_0 = arith.constant 0 : i32
    %c0_i32_1 = arith.constant 0 : i32
    return %c0_i32, %c0_i32_0 : i32, i32
  }
  func.func @transform_7(%arg0: i32, %arg1: i32) -> (i32, i32) {
    %c0_i32 = arith.constant 0 : i32
    %c0_i32_0 = arith.constant 0 : i32
    %c0_i32_1 = arith.constant 0 : i32
    return %c0_i32, %c0_i32_0 : i32, i32
  }
  func.func @transform_8(%arg0: i32, %arg1: i32) -> (i32, i32) {
    %c0_i32 = arith.constant 0 : i32
    %c0_i32_0 = arith.constant 0 : i32
    return %arg0, %c0_i32 : i32, i32
  }
}

</mosaic_0001>

<llo_original>
// kernel: tpu_custom_call.1
$region0: #{tpu_custom_call.1}
  #allocation0 [shape = 'u32[]', space=smem, size = 0x4, offset = 0x4, fixed_abs, tag = 'smem constant byte address 0x4 - core index']
  #allocation1 [shape = 'u32[72,128]{1,0:T(1,128)}', space=vmem, size = 0x9000, scoped, tag = 'internal scratch']
  #allocation2 [shape = 'f32[384,32]{1,0:T(8,128)}', space=vmem, size = 0x30000, scoped, tag = 'scratch operand']
  #allocation3 [shape = 'f32[384,1]{1,0:T(8,128)}', space=vmem, size = 0x30000, scoped, tag = 'scratch operand']
  %s0 = inlined_call_operand.vmem [shape: s8[384,384], index: 0, kind: input, shape index: {}]
  %s1 = inlined_call_operand.vmem [shape: bf16[384,32], index: 1, kind: input, shape index: {}]
  %s2 = inlined_call_operand.vmem [shape: f32[384,32], index: 2, kind: input, shape index: {}]
  %s3 = inlined_call_operand.vmem [shape: f32[32,64], index: 3, kind: input, shape index: {}]
  %s4 = inlined_call_operand.vmem [shape: f32[32,64], index: 4, kind: input, shape index: {}]
  %s5 = inlined_call_operand.vmem [shape: f32[1,64], index: 5, kind: input, shape index: {}]
  %s6 = inlined_call_operand.vmem [shape: f32[64,32], index: 6, kind: input, shape index: {}]
  %s7 = inlined_call_operand.vmem [shape: f32[1,32], index: 7, kind: input, shape index: {}]
  %s8 = inlined_call_operand.vmem [shape: f32[384,32], index: 8, kind: output, shape index: {}]
  %s9 = sld [smem:[#allocation0]]
  $region50: #{tpu_custom_call.1} parent=0
    _
  %s11 = ssub.s32 1, %s9
  %s12 = scalar_select 0, %s11, %s9
  // Predicated region
  $region2: #{tpu_custom_call.1} parent=0 // pred_check
    _
  $region3: #{tpu_custom_call.1} parent=0 // pred_check_branch
    %14 = sbr.rel (0) target = $region5
  $region4: #{tpu_custom_call.1} parent=0 // pred_region
    _
  $region5: #{tpu_custom_call.1} parent=0 // pred_fallthru
    _
  // Predicated region
  $region6: #{tpu_custom_call.1} parent=0 // pred_check
    _
  $region7: #{tpu_custom_call.1} parent=0 // pred_check_branch
    %16 = sbr.rel (0) target = $region9
  $region8: #{tpu_custom_call.1} parent=0 // pred_region
    _
  $region9: #{tpu_custom_call.1} parent=0 // pred_fallthru
    _
  // Predicated region
  $region10: #{tpu_custom_call.1} parent=0 // pred_check
    _
  $region11: #{tpu_custom_call.1} parent=0 // pred_check_branch
    %18 = sbr.rel (0) target = $region13
  $region12: #{tpu_custom_call.1} parent=0 // pred_region
    _
  $region13: #{tpu_custom_call.1} parent=0 // pred_fallthru
    _
  // Predicated region
  $region14: #{tpu_custom_call.1} parent=0 // pred_check
    _
  $region15: #{tpu_custom_call.1} parent=0 // pred_check_branch
    %20 = sbr.rel (0) target = $region17
  $region16: #{tpu_custom_call.1} parent=0 // pred_region
    _
  $region17: #{tpu_custom_call.1} parent=0 // pred_fallthru
    _
  // Predicated region
  $region18: #{tpu_custom_call.1} parent=0 // pred_check
    _
  $region19: #{tpu_custom_call.1} parent=0 // pred_check_branch
    %22 = sbr.rel (0) target = $region21
  $region20: #{tpu_custom_call.1} parent=0 // pred_region
    _
  $region21: #{tpu_custom_call.1} parent=0 // pred_fallthru
    _
  // Predicated region
  $region22: #{tpu_custom_call.1} parent=0 // pred_check
    _
  $region23: #{tpu_custom_call.1} parent=0 // pred_check_branch
    %24 = sbr.rel (0) target = $region25
  $region24: #{tpu_custom_call.1} parent=0 // pred_region
    _
  $region25: #{tpu_custom_call.1} parent=0 // pred_fallthru
    _
  // Predicated region
  $region26: #{tpu_custom_call.1} parent=0 // pred_check
    _
  $region27: #{tpu_custom_call.1} parent=0 // pred_check_branch
    %26 = sbr.rel (0) target = $region29
  $region28: #{tpu_custom_call.1} parent=0 // pred_region
    _
  $region29: #{tpu_custom_call.1} parent=0 // pred_fallthru
    _
  // Predicated region
  $region30: #{tpu_custom_call.1} parent=0 // pred_check
    _
  $region31: #{tpu_custom_call.1} parent=0 // pred_check_branch
    %28 = sbr.rel (0) target = $region33
  $region32: #{tpu_custom_call.1} parent=0 // pred_region
    _
  $region33: #{tpu_custom_call.1} parent=0 // pred_fallthru
    _
  %p29 = scmp.eq.s32.totalorder 0, 0
  // Predicated region
  $region34: #{tpu_custom_call.1} parent=0 // pred_check
    %p30 = pneg %p29
  $region35: #{tpu_custom_call.1} parent=0 // pred_check_branch
    %32 = sbr.rel (%p30) target = $region37
  $region36: #{tpu_custom_call.1} parent=0 // pred_region
    %vm33 = vcmask 261120
    %34 = vst.msk [vmem:[#allocation2] sm:$0xff] %vm33, 0.0
    %35 = vst.msk [vmem:[#allocation2 + $0x8] sm:$0xff] %vm33, 0.0
    %36 = vst.msk [vmem:[#allocation2 + $0x10] sm:$0xff] %vm33, 0.0
    %37 = vst.msk [vmem:[#allocation2 + $0x18] sm:$0xff] %vm33, 0.0
    %38 = vst.msk [vmem:[#allocation2 + $0x20] sm:$0xff] %vm33, 0.0
    %39 = vst.msk [vmem:[#allocation2 + $0x28] sm:$0xff] %vm33, 0.0
    %40 = vst.msk [vmem:[#allocation2 + $0x30] sm:$0xff] %vm33, 0.0
    %41 = vst.msk [vmem:[#allocation2 + $0x38] sm:$0xff] %vm33, 0.0
    %42 = vst.msk [vmem:[#allocation2 + $0x40] sm:$0xff] %vm33, 0.0
    %43 = vst.msk [vmem:[#allocation2 + $0x48] sm:$0xff] %vm33, 0.0
    %44 = vst.msk [vmem:[#allocation2 + $0x50] sm:$0xff] %vm33, 0.0
    %45 = vst.msk [vmem:[#allocation2 + $0x58] sm:$0xff] %vm33, 0.0
    %46 = vst.msk [vmem:[#allocation2 + $0x60] sm:$0xff] %vm33, 0.0
    %47 = vst.msk [vmem:[#allocation2 + $0x68] sm:$0xff] %vm33, 0.0
    %48 = vst.msk [vmem:[#allocation2 + $0x70] sm:$0xff] %vm33, 0.0
    %49 = vst.msk [vmem:[#allocation2 + $0x78] sm:$0xff] %vm33, 0.0
    %50 = vst.msk [vmem:[#allocation2 + $0x80] sm:$0xff] %vm33, 0.0
    %51 = vst.msk [vmem:[#allocation2 + $0x88] sm:$0xff] %vm33, 0.0
    %52 = vst.msk [vmem:[#allocation2 + $0x90] sm:$0xff] %vm33, 0.0
    %53 = vst.msk [vmem:[#allocation2 + $0x98] sm:$0xff] %vm33, 0.0
    %54 = vst.msk [vmem:[#allocation2 + $0xa0] sm:$0xff] %vm33, 0.0
    %55 = vst.msk [vmem:[#allocation2 + $0xa8] sm:$0xff] %vm33, 0.0
    %56 = vst.msk [vmem:[#allocation2 + $0xb0] sm:$0xff] %vm33, 0.0
    %57 = vst.msk [vmem:[#allocation2 + $0xb8] sm:$0xff] %vm33, 0.0
    %58 = vst.msk [vmem:[#allocation2 + $0xc0] sm:$0xff] %vm33, 0.0
    %59 = vst.msk [vmem:[#allocation2 + $0xc8] sm:$0xff] %vm33, 0.0
    %60 = vst.msk [vmem:[#allocation2 + $0xd0] sm:$0xff] %vm33, 0.0
    %61 = vst.msk [vmem:[#allocation2 + $0xd8] sm:$0xff] %vm33, 0.0
    %62 = vst.msk [vmem:[#allocation2 + $0xe0] sm:$0xff] %vm33, 0.0
    %63 = vst.msk [vmem:[#allocation2 + $0xe8] sm:$0xff] %vm33, 0.0
    %64 = vst.msk [vmem:[#allocation2 + $0xf0] sm:$0xff] %vm33, 0.0
    %65 = vst.msk [vmem:[#allocation2 + $0xf8] sm:$0xff] %vm33, 0.0
    %66 = vst.msk [vmem:[#allocation2 + $0x100] sm:$0xff] %vm33, 0.0
    %67 = vst.msk [vmem:[#allocation2 + $0x108] sm:$0xff] %vm33, 0.0
    %68 = vst.msk [vmem:[#allocation2 + $0x110] sm:$0xff] %vm33, 0.0
    %69 = vst.msk [vmem:[#allocation2 + $0x118] sm:$0xff] %vm33, 0.0
    %70 = vst.msk [vmem:[#allocation2 + $0x120] sm:$0xff] %vm33, 0.0
    %71 = vst.msk [vmem:[#allocation2 + $0x128] sm:$0xff] %vm33, 0.0
    %72 = vst.msk [vmem:[#allocation2 + $0x130] sm:$0xff] %vm33, 0.0
    %73 = vst.msk [vmem:[#allocation2 + $0x138] sm:$0xff] %vm33, 0.0
    %74 = vst.msk [vmem:[#allocation2 + $0x140] sm:$0xff] %vm33, 0.0
    %75 = vst.msk [vmem:[#allocation2 + $0x148] sm:$0xff] %vm33, 0.0
    %76 = vst.msk [vmem:[#allocation2 + $0x150] sm:$0xff] %vm33, 0.0
    %77 = vst.msk [vmem:[#allocation2 + $0x158] sm:$0xff] %vm33, 0.0
    %78 = vst.msk [vmem:[#allocation2 + $0x160] sm:$0xff] %vm33, 0.0
    %79 = vst.msk [vmem:[#allocation2 + $0x168] sm:$0xff] %vm33, 0.0
    %80 = vst.msk [vmem:[#allocation2 + $0x170] sm:$0xff] %vm33, 0.0
    %81 = vst.msk [vmem:[#allocation2 + $0x178] sm:$0xff] %vm33, 0.0
    %vm82 = vcmask 7168
    %83 = vst.msk [vmem:[#allocation3] sm:$0xff] %vm82, 0.0
    %84 = vst.msk [vmem:[#allocation3 + $0x8] sm:$0xff] %vm82, 0.0
    %85 = vst.msk [vmem:[#allocation3 + $0x10] sm:$0xff] %vm82, 0.0
    %86 = vst.msk [vmem:[#allocation3 + $0x18] sm:$0xff] %vm82, 0.0
    %87 = vst.msk [vmem:[#allocation3 + $0x20] sm:$0xff] %vm82, 0.0
    %88 = vst.msk [vmem:[#allocation3 + $0x28] sm:$0xff] %vm82, 0.0
    %89 = vst.msk [vmem:[#allocation3 + $0x30] sm:$0xff] %vm82, 0.0
    %90 = vst.msk [vmem:[#allocation3 + $0x38] sm:$0xff] %vm82, 0.0
    %91 = vst.msk [vmem:[#allocation3 + $0x40] sm:$0xff] %vm82, 0.0
    %92 = vst.msk [vmem:[#allocation3 + $0x48] sm:$0xff] %vm82, 0.0
    %93 = vst.msk [vmem:[#allocation3 + $0x50] sm:$0xff] %vm82, 0.0
    %94 = vst.msk [vmem:[#allocation3 + $0x58] sm:$0xff] %vm82, 0.0
    %95 = vst.msk [vmem:[#allocation3 + $0x60] sm:$0xff] %vm82, 0.0
    %96 = vst.msk [vmem:[#allocation3 + $0x68] sm:$0xff] %vm82, 0.0
    %97 = vst.msk [vmem:[#allocation3 + $0x70] sm:$0xff] %vm82, 0.0
    %98 = vst.msk [vmem:[#allocation3 + $0x78] sm:$0xff] %vm82, 0.0
    %99 = vst.msk [vmem:[#allocation3 + $0x80] sm:$0xff] %vm82, 0.0
    %100 = vst.msk [vmem:[#allocation3 + $0x88] sm:$0xff] %vm82, 0.0
    %101 = vst.msk [vmem:[#allocation3 + $0x90] sm:$0xff] %vm82, 0.0
    %102 = vst.msk [vmem:[#allocation3 + $0x98] sm:$0xff] %vm82, 0.0
    %103 = vst.msk [vmem:[#allocation3 + $0xa0] sm:$0xff] %vm82, 0.0
    %104 = vst.msk [vmem:[#allocation3 + $0xa8] sm:$0xff] %vm82, 0.0
    %105 = vst.msk [vmem:[#allocation3 + $0xb0] sm:$0xff] %vm82, 0.0
    %106 = vst.msk [vmem:[#allocation3 + $0xb8] sm:$0xff] %vm82, 0.0
    %107 = vst.msk [vmem:[#allocation3 + $0xc0] sm:$0xff] %vm82, 0.0
    %108 = vst.msk [vmem:[#allocation3 + $0xc8] sm:$0xff] %vm82, 0.0
    %109 = vst.msk [vmem:[#allocation3 + $0xd0] sm:$0xff] %vm82, 0.0
    %110 = vst.msk [vmem:[#allocation3 + $0xd8] sm:$0xff] %vm82, 0.0
    %111 = vst.msk [vmem:[#allocation3 + $0xe0] sm:$0xff] %vm82, 0.0
    %112 = vst.msk [vmem:[#allocation3 + $0xe8] sm:$0xff] %vm82, 0.0
    %113 = vst.msk [vmem:[#allocation3 + $0xf0] sm:$0xff] %vm82, 0.0
    %114 = vst.msk [vmem:[#allocation3 + $0xf8] sm:$0xff] %vm82, 0.0
    %115 = vst.msk [vmem:[#allocation3 + $0x100] sm:$0xff] %vm82, 0.0
    %116 = vst.msk [vmem:[#allocation3 + $0x108] sm:$0xff] %vm82, 0.0
    %117 = vst.msk [vmem:[#allocation3 + $0x110] sm:$0xff] %vm82, 0.0
    %118 = vst.msk [vmem:[#allocation3 + $0x118] sm:$0xff] %vm82, 0.0
    %119 = vst.msk [vmem:[#allocation3 + $0x120] sm:$0xff] %vm82, 0.0
    %120 = vst.msk [vmem:[#allocation3 + $0x128] sm:$0xff] %vm82, 0.0
    %121 = vst.msk [vmem:[#allocation3 + $0x130] sm:$0xff] %vm82, 0.0
    %122 = vst.msk [vmem:[#allocation3 + $0x138] sm:$0xff] %vm82, 0.0
    %123 = vst.msk [vmem:[#allocation3 + $0x140] sm:$0xff] %vm82, 0.0
    %124 = vst.msk [vmem:[#allocation3 + $0x148] sm:$0xff] %vm82, 0.0
    %125 = vst.msk [vmem:[#allocation3 + $0x150] sm:$0xff] %vm82, 0.0
    %126 = vst.msk [vmem:[#allocation3 + $0x158] sm:$0xff] %vm82, 0.0
    %127 = vst.msk [vmem:[#allocation3 + $0x160] sm:$0xff] %vm82, 0.0
    %128 = vst.msk [vmem:[#allocation3 + $0x168] sm:$0xff] %vm82, 0.0
    %129 = vst.msk [vmem:[#allocation3 + $0x170] sm:$0xff] %vm82, 0.0
    %130 = vst.msk [vmem:[#allocation3 + $0x178] sm:$0xff] %vm82, 0.0
  $region37: #{tpu_custom_call.1} parent=0 // pred_fallthru
    _
  %v131 = vld [vmem:[%s0] sm:$0xff]
  %v132 = vld [vmem:[%s0 + $0x8] sm:$0xff]
  %v133 = vld [vmem:[%s0 + $0x10] sm:$0xff]
  %v134 = vld [vmem:[%s0 + $0x18] sm:$0xff]
  %v135 = vld [vmem:[%s0 + $0x20] sm:$0xff]
  %v136 = vld [vmem:[%s0 + $0x28] sm:$0xff]
  %v137 = vld [vmem:[%s0 + $0x30] sm:$0xff]
  %v138 = vld [vmem:[%s0 + $0x38] sm:$0xff]
  %v139 = vld [vmem:[%s0 + $0x40] sm:$0xff]
  %v140 = vld [vmem:[%s0 + $0x48] sm:$0xff]
  %v141 = vld [vmem:[%s0 + $0x50] sm:$0xff]
  %v142 = vld [vmem:[%s0 + $0x58] sm:$0xff]
  %v143 = vld [vmem:[%s0 + $0x60] sm:$0xff]
  %v144 = vld [vmem:[%s0 + $0x68] sm:$0xff]
  %v145 = vld [vmem:[%s0 + $0x70] sm:$0xff]
  %v146 = vld [vmem:[%s0 + $0x78] sm:$0xff]
  %v147 = vld [vmem:[%s0 + $0x80] sm:$0xff]
  %v148 = vld [vmem:[%s0 + $0x88] sm:$0xff]
  %v149 = vld [vmem:[%s0 + $0x90] sm:$0xff]
  %v150 = vld [vmem:[%s0 + $0x98] sm:$0xff]
  %v151 = vld [vmem:[%s0 + $0xa0] sm:$0xff]
  %v152 = vld [vmem:[%s0 + $0xa8] sm:$0xff]
  %v153 = vld [vmem:[%s0 + $0xb0] sm:$0xff]
  %v154 = vld [vmem:[%s0 + $0xb8] sm:$0xff]
  %v155 = vld [vmem:[%s0 + $0xc0] sm:$0xff]
  %v156 = vld [vmem:[%s0 + $0xc8] sm:$0xff]
  %v157 = vld [vmem:[%s0 + $0xd0] sm:$0xff]
  %v158 = vld [vmem:[%s0 + $0xd8] sm:$0xff]
  %v159 = vld [vmem:[%s0 + $0xe0] sm:$0xff]
  %v160 = vld [vmem:[%s0 + $0xe8] sm:$0xff]
  %v161 = vld [vmem:[%s0 + $0xf0] sm:$0xff]
  %v162 = vld [vmem:[%s0 + $0xf8] sm:$0xff]
  %v163 = vld [vmem:[%s0 + $0x100] sm:$0xff]
  %v164 = vld [vmem:[%s0 + $0x108] sm:$0xff]
  %v165 = vld [vmem:[%s0 + $0x110] sm:$0xff]
  %v166 = vld [vmem:[%s0 + $0x118] sm:$0xff]
  %v167 = vunpack.c.0.s8 %v131
  %v168 = vunpack.c.0.s8 %v132
  %v169 = vunpack.c.0.s8 %v133
  %v170 = vunpack.c.1.s8 %v131
  %v171 = vunpack.c.1.s8 %v132
  %v172 = vunpack.c.1.s8 %v133
  %v173 = vunpack.c.2.s8 %v131
  %v174 = vunpack.c.2.s8 %v132
  %v175 = vunpack.c.2.s8 %v133
  %v176 = vunpack.c.3.s8 %v131
  %v177 = vunpack.c.3.s8 %v132
  %v178 = vunpack.c.3.s8 %v133
  %v179 = vunpack.c.0.s8 %v134
  %v180 = vunpack.c.0.s8 %v135
  %v181 = vunpack.c.0.s8 %v136
  %v182 = vunpack.c.1.s8 %v134
  %v183 = vunpack.c.1.s8 %v135
  %v184 = vunpack.c.1.s8 %v136
  %v185 = vunpack.c.2.s8 %v134
  %v186 = vunpack.c.2.s8 %v135
  %v187 = vunpack.c.2.s8 %v136
  %v188 = vunpack.c.3.s8 %v134
  %v189 = vunpack.c.3.s8 %v135
  %v190 = vunpack.c.3.s8 %v136
  %v191 = vunpack.c.0.s8 %v137
  %v192 = vunpack.c.0.s8 %v138
  %v193 = vunpack.c.0.s8 %v139
  %v194 = vunpack.c.1.s8 %v137
  %v195 = vunpack.c.1.s8 %v138
  %v196 = vunpack.c.1.s8 %v139
  %v197 = vunpack.c.2.s8 %v137
  %v198 = vunpack.c.2.s8 %v138
  %v199 = vunpack.c.2.s8 %v139
  %v200 = vunpack.c.3.s8 %v137
  %v201 = vunpack.c.3.s8 %v138
  %v202 = vunpack.c.3.s8 %v139
  %v203 = vunpack.c.0.s8 %v140
  %v204 = vunpack.c.0.s8 %v141
  %v205 = vunpack.c.0.s8 %v142
  %v206 = vunpack.c.1.s8 %v140
  %v207 = vunpack.c.1.s8 %v141
  %v208 = vunpack.c.1.s8 %v142
  %v209 = vunpack.c.2.s8 %v140
  %v210 = vunpack.c.2.s8 %v141
  %v211 = vunpack.c.2.s8 %v142
  %v212 = vunpack.c.3.s8 %v140
  %v213 = vunpack.c.3.s8 %v141
  %v214 = vunpack.c.3.s8 %v142
  %v215 = vunpack.c.0.s8 %v143
  %v216 = vunpack.c.0.s8 %v144
  %v217 = vunpack.c.0.s8 %v145
  %v218 = vunpack.c.1.s8 %v143
  %v219 = vunpack.c.1.s8 %v144
  %v220 = vunpack.c.1.s8 %v145
  %v221 = vunpack.c.2.s8 %v143
  %v222 = vunpack.c.2.s8 %v144
  %v223 = vunpack.c.2.s8 %v145
  %v224 = vunpack.c.3.s8 %v143
  %v225 = vunpack.c.3.s8 %v144
  %v226 = vunpack.c.3.s8 %v145
  %v227 = vunpack.c.0.s8 %v146
  %v228 = vunpack.c.0.s8 %v147
  %v229 = vunpack.c.0.s8 %v148
  %v230 = vunpack.c.1.s8 %v146
  %v231 = vunpack.c.1.s8 %v147
  %v232 = vunpack.c.1.s8 %v148
  %v233 = vunpack.c.2.s8 %v146
  %v234 = vunpack.c.2.s8 %v147
  %v235 = vunpack.c.2.s8 %v148
  %v236 = vunpack.c.3.s8 %v146
  %v237 = vunpack.c.3.s8 %v147
  %v238 = vunpack.c.3.s8 %v148
  %v239 = vunpack.c.0.s8 %v149
  %v240 = vunpack.c.0.s8 %v150
  %v241 = vunpack.c.0.s8 %v151
  %v242 = vunpack.c.1.s8 %v149
  %v243 = vunpack.c.1.s8 %v150
  %v244 = vunpack.c.1.s8 %v151
  %v245 = vunpack.c.2.s8 %v149
  %v246 = vunpack.c.2.s8 %v150
  %v247 = vunpack.c.2.s8 %v151
  %v248 = vunpack.c.3.s8 %v149
  %v249 = vunpack.c.3.s8 %v150
  %v250 = vunpack.c.3.s8 %v151
  %v251 = vunpack.c.0.s8 %v152
  %v252 = vunpack.c.0.s8 %v153
  %v253 = vunpack.c.0.s8 %v154
  %v254 = vunpack.c.1.s8 %v152
  %v255 = vunpack.c.1.s8 %v153
  %v256 = vunpack.c.1.s8 %v154
  %v257 = vunpack.c.2.s8 %v152
  %v258 = vunpack.c.2.s8 %v153
  %v259 = vunpack.c.2.s8 %v154
  %v260 = vunpack.c.3.s8 %v152
  %v261 = vunpack.c.3.s8 %v153
  %v262 = vunpack.c.3.s8 %v154
  %v263 = vunpack.c.0.s8 %v155
  %v264 = vunpack.c.0.s8 %v156
  %v265 = vunpack.c.0.s8 %v157
  %v266 = vunpack.c.1.s8 %v155
  %v267 = vunpack.c.1.s8 %v156
  %v268 = vunpack.c.1.s8 %v157
  %v269 = vunpack.c.2.s8 %v155
  %v270 = vunpack.c.2.s8 %v156
  %v271 = vunpack.c.2.s8 %v157
  %v272 = vunpack.c.3.s8 %v155
  %v273 = vunpack.c.3.s8 %v156
  %v274 = vunpack.c.3.s8 %v157
  %v275 = vunpack.c.0.s8 %v158
  %v276 = vunpack.c.0.s8 %v159
  %v277 = vunpack.c.0.s8 %v160
  %v278 = vunpack.c.1.s8 %v158
  %v279 = vunpack.c.1.s8 %v159
  %v280 = vunpack.c.1.s8 %v160
  %v281 = vunpack.c.2.s8 %v158
  %v282 = vunpack.c.2.s8 %v159
  %v283 = vunpack.c.2.s8 %v160
  %v284 = vunpack.c.3.s8 %v158
  %v285 = vunpack.c.3.s8 %v159
  %v286 = vunpack.c.3.s8 %v160
  %v287 = vunpack.c.0.s8 %v161
  %v288 = vunpack.c.0.s8 %v162
  %v289 = vunpack.c.0.s8 %v163
  %v290 = vunpack.c.1.s8 %v161
  %v291 = vunpack.c.1.s8 %v162
  %v292 = vunpack.c.1.s8 %v163
  %v293 = vunpack.c.2.s8 %v161
  %v294 = vunpack.c.2.s8 %v162
  %v295 = vunpack.c.2.s8 %v163
  %v296 = vunpack.c.3.s8 %v161
  %v297 = vunpack.c.3.s8 %v162
  %v298 = vunpack.c.3.s8 %v163
  %v299 = vunpack.c.0.s8 %v164
  %v300 = vunpack.c.0.s8 %v165
  %v301 = vunpack.c.0.s8 %v166
  %v302 = vunpack.c.1.s8 %v164
  %v303 = vunpack.c.1.s8 %v165
  %v304 = vunpack.c.1.s8 %v166
  %v305 = vunpack.c.2.s8 %v164
  %v306 = vunpack.c.2.s8 %v165
  %v307 = vunpack.c.2.s8 %v166
  %v308 = vunpack.c.3.s8 %v164
  %v309 = vunpack.c.3.s8 %v165
  %v310 = vunpack.c.3.s8 %v166
  %v311 = vcvt.s32.f32 %v167
  %v312 = vcvt.s32.f32 %v168
  %v313 = vcvt.s32.f32 %v169
  %v314 = vcvt.s32.f32 %v170
  %v315 = vcvt.s32.f32 %v171
  %v316 = vcvt.s32.f32 %v172
  %v317 = vcvt.s32.f32 %v173
  %v318 = vcvt.s32.f32 %v174
  %v319 = vcvt.s32.f32 %v175
  %v320 = vcvt.s32.f32 %v176
  %v321 = vcvt.s32.f32 %v177
  %v322 = vcvt.s32.f32 %v178
  %v323 = vcvt.s32.f32 %v179
  %v324 = vcvt.s32.f32 %v180
  %v325 = vcvt.s32.f32 %v181
  %v326 = vcvt.s32.f32 %v182
  %v327 = vcvt.s32.f32 %v183
  %v328 = vcvt.s32.f32 %v184
  %v329 = vcvt.s32.f32 %v185
  %v330 = vcvt.s32.f32 %v186
  %v331 = vcvt.s32.f32 %v187
  %v332 = vcvt.s32.f32 %v188
  %v333 = vcvt.s32.f32 %v189
  %v334 = vcvt.s32.f32 %v190
  %v335 = vcvt.s32.f32 %v191
  %v336 = vcvt.s32.f32 %v192
  %v337 = vcvt.s32.f32 %v193
  %v338 = vcvt.s32.f32 %v194
  %v339 = vcvt.s32.f32 %v195
  %v340 = vcvt.s32.f32 %v196
  %v341 = vcvt.s32.f32 %v197
  %v342 = vcvt.s32.f32 %v198
  %v343 = vcvt.s32.f32 %v199
  %v344 = vcvt.s32.f32 %v200
  %v345 = vcvt.s32.f32 %v201
  %v346 = vcvt.s32.f32 %v202
  %v347 = vcvt.s32.f32 %v203
  %v348 = vcvt.s32.f32 %v204
  %v349 = vcvt.s32.f32 %v205
  %v350 = vcvt.s32.f32 %v206
  %v351 = vcvt.s32.f32 %v207
  %v352 = vcvt.s32.f32 %v208
  %v353 = vcvt.s32.f32 %v209
  %v354 = vcvt.s32.f32 %v210
  %v355 = vcvt.s32.f32 %v211
  %v356 = vcvt.s32.f32 %v212
  %v357 = vcvt.s32.f32 %v213
  %v358 = vcvt.s32.f32 %v214
  %v359 = vcvt.s32.f32 %v215
  %v360 = vcvt.s32.f32 %v216
  %v361 = vcvt.s32.f32 %v217
  %v362 = vcvt.s32.f32 %v218
  %v363 = vcvt.s32.f32 %v219
  %v364 = vcvt.s32.f32 %v220
  %v365 = vcvt.s32.f32 %v221
  %v366 = vcvt.s32.f32 %v222
  %v367 = vcvt.s32.f32 %v223
  %v368 = vcvt.s32.f32 %v224
  %v369 = vcvt.s32.f32 %v225
  %v370 = vcvt.s32.f32 %v226
  %v371 = vcvt.s32.f32 %v227
  %v372 = vcvt.s32.f32 %v228
  %v373 = vcvt.s32.f32 %v229
  %v374 = vcvt.s32.f32 %v230
  %v375 = vcvt.s32.f32 %v231
  %v376 = vcvt.s32.f32 %v232
  %v377 = vcvt.s32.f32 %v233
  %v378 = vcvt.s32.f32 %v234
  %v379 = vcvt.s32.f32 %v235
  %v380 = vcvt.s32.f32 %v236
  %v381 = vcvt.s32.f32 %v237
  %v382 = vcvt.s32.f32 %v238
  %v383 = vcvt.s32.f32 %v239
  %v384 = vcvt.s32.f32 %v240
  %v385 = vcvt.s32.f32 %v241
  %v386 = vcvt.s32.f32 %v242
  %v387 = vcvt.s32.f32 %v243
  %v388 = vcvt.s32.f32 %v244
  %v389 = vcvt.s32.f32 %v245
  %v390 = vcvt.s32.f32 %v246
  %v391 = vcvt.s32.f32 %v247
  %v392 = vcvt.s32.f32 %v248
  %v393 = vcvt.s32.f32 %v249
  %v394 = vcvt.s32.f32 %v250
  %v395 = vcvt.s32.f32 %v251
  %v396 = vcvt.s32.f32 %v252
  %v397 = vcvt.s32.f32 %v253
  %v398 = vcvt.s32.f32 %v254
  %v399 = vcvt.s32.f32 %v255
  %v400 = vcvt.s32.f32 %v256
  %v401 = vcvt.s32.f32 %v257
  %v402 = vcvt.s32.f32 %v258
  %v403 = vcvt.s32.f32 %v259
  %v404 = vcvt.s32.f32 %v260
  %v405 = vcvt.s32.f32 %v261
  %v406 = vcvt.s32.f32 %v262
  %v407 = vcvt.s32.f32 %v263
  %v408 = vcvt.s32.f32 %v264
  %v409 = vcvt.s32.f32 %v265
  %v410 = vcvt.s32.f32 %v266
  %v411 = vcvt.s32.f32 %v267
  %v412 = vcvt.s32.f32 %v268
  %v413 = vcvt.s32.f32 %v269
  %v414 = vcvt.s32.f32 %v270
  %v415 = vcvt.s32.f32 %v271
  %v416 = vcvt.s32.f32 %v272
  %v417 = vcvt.s32.f32 %v273
  %v418 = vcvt.s32.f32 %v274
  %v419 = vcvt.s32.f32 %v275
  %v420 = vcvt.s32.f32 %v276
  %v421 = vcvt.s32.f32 %v277
  %v422 = vcvt.s32.f32 %v278
  %v423 = vcvt.s32.f32 %v279
  %v424 = vcvt.s32.f32 %v280
  %v425 = vcvt.s32.f32 %v281
  %v426 = vcvt.s32.f32 %v282
  %v427 = vcvt.s32.f32 %v283
  %v428 = vcvt.s32.f32 %v284
  %v429 = vcvt.s32.f32 %v285
  %v430 = vcvt.s32.f32 %v286
  %v431 = vcvt.s32.f32 %v287
  %v432 = vcvt.s32.f32 %v288
  %v433 = vcvt.s32.f32 %v289
  %v434 = vcvt.s32.f32 %v290
  %v435 = vcvt.s32.f32 %v291
  %v436 = vcvt.s32.f32 %v292
  %v437 = vcvt.s32.f32 %v293
  %v438 = vcvt.s32.f32 %v294
  %v439 = vcvt.s32.f32 %v295
  %v440 = vcvt.s32.f32 %v296
  %v441 = vcvt.s32.f32 %v297
  %v442 = vcvt.s32.f32 %v298
  %v443 = vcvt.s32.f32 %v299
  %v444 = vcvt.s32.f32 %v300
  %v445 = vcvt.s32.f32 %v301
  %v446 = vcvt.s32.f32 %v302
  %v447 = vcvt.s32.f32 %v303
  %v448 = vcvt.s32.f32 %v304
  %v449 = vcvt.s32.f32 %v305
  %v450 = vcvt.s32.f32 %v306
  %v451 = vcvt.s32.f32 %v307
  %v452 = vcvt.s32.f32 %v308
  %v453 = vcvt.s32.f32 %v309
  %v454 = vcvt.s32.f32 %v310
  %v455 = vpack.c.bf16 %v314, %v311
  %v456 = vpack.c.bf16 %v315, %v312
  %v457 = vpack.c.bf16 %v316, %v313
  %v458 = vpack.c.bf16 %v320, %v317
  %v459 = vpack.c.bf16 %v321, %v318
  %v460 = vpack.c.bf16 %v322, %v319
  %v461 = vpack.c.bf16 %v326, %v323
  %v462 = vpack.c.bf16 %v327, %v324
  %v463 = vpack.c.bf16 %v328, %v325
  %v464 = vpack.c.bf16 %v332, %v329
  %v465 = vpack.c.bf16 %v333, %v330
  %v466 = vpack.c.bf16 %v334, %v331
  %v467 = vpack.c.bf16 %v338, %v335
  %v468 = vpack.c.bf16 %v339, %v336
  %v469 = vpack.c.bf16 %v340, %v337
  %v470 = vpack.c.bf16 %v344, %v341
  %v471 = vpack.c.bf16 %v345, %v342
  %v472 = vpack.c.bf16 %v346, %v343
  %v473 = vpack.c.bf16 %v350, %v347
  %v474 = vpack.c.bf16 %v351, %v348
  %v475 = vpack.c.bf16 %v352, %v349
  %v476 = vpack.c.bf16 %v356, %v353
  %v477 = vpack.c.bf16 %v357, %v354
  %v478 = vpack.c.bf16 %v358, %v355
  %v479 = vpack.c.bf16 %v362, %v359
  %v480 = vpack.c.bf16 %v363, %v360
  %v481 = vpack.c.bf16 %v364, %v361
  %v482 = vpack.c.bf16 %v368, %v365
  %v483 = vpack.c.bf16 %v369, %v366
  %v484 = vpack.c.bf16 %v370, %v367
  %v485 = vpack.c.bf16 %v374, %v371
  %v486 = vpack.c.bf16 %v375, %v372
  %v487 = vpack.c.bf16 %v376, %v373
  %v488 = vpack.c.bf16 %v380, %v377
  %v489 = vpack.c.bf16 %v381, %v378
  %v490 = vpack.c.bf16 %v382, %v379
  %v491 = vpack.c.bf16 %v386, %v383
  %v492 = vpack.c.bf16 %v387, %v384
  %v493 = vpack.c.bf16 %v388, %v385
  %v494 = vpack.c.bf16 %v392, %v389
  %v495 = vpack.c.bf16 %v393, %v390
  %v496 = vpack.c.bf16 %v394, %v391
  %v497 = vpack.c.bf16 %v398, %v395
  %v498 = vpack.c.bf16 %v399, %v396
  %v499 = vpack.c.bf16 %v400, %v397
  %v500 = vpack.c.bf16 %v404, %v401
  %v501 = vpack.c.bf16 %v405, %v402
  %v502 = vpack.c.bf16 %v406, %v403
  %v503 = vpack.c.bf16 %v410, %v407
  %v504 = vpack.c.bf16 %v411, %v408
  %v505 = vpack.c.bf16 %v412, %v409
  %v506 = vpack.c.bf16 %v416, %v413
  %v507 = vpack.c.bf16 %v417, %v414
  %v508 = vpack.c.bf16 %v418, %v415
  %v509 = vpack.c.bf16 %v422, %v419
  %v510 = vpack.c.bf16 %v423, %v420
  %v511 = vpack.c.bf16 %v424, %v421
  %v512 = vpack.c.bf16 %v428, %v425
  %v513 = vpack.c.bf16 %v429, %v426
  %v514 = vpack.c.bf16 %v430, %v427
  %v515 = vpack.c.bf16 %v434, %v431
  %v516 = vpack.c.bf16 %v435, %v432
  %v517 = vpack.c.bf16 %v436, %v433
  %v518 = vpack.c.bf16 %v440, %v437
  %v519 = vpack.c.bf16 %v441, %v438
  %v520 = vpack.c.bf16 %v442, %v439
  %v521 = vpack.c.bf16 %v446, %v443
  %v522 = vpack.c.bf16 %v447, %v444
  %v523 = vpack.c.bf16 %v448, %v445
  %v524 = vpack.c.bf16 %v452, %v449
  %v525 = vpack.c.bf16 %v453, %v450
  %v526 = vpack.c.bf16 %v454, %v451
  %v527 = vld [vmem:[#allocation3] sm:$0xff]
  %v528 = vld [vmem:[#allocation3 + $0x8] sm:$0xff]
  %v529 = vld [vmem:[#allocation3 + $0x10] sm:$0xff]
  %v530 = vld [vmem:[#allocation3 + $0x18] sm:$0xff]
  %v531 = vld [vmem:[#allocation3 + $0x20] sm:$0xff]
  %v532 = vld [vmem:[#allocation3 + $0x28] sm:$0xff]
  %v533 = vld [vmem:[#allocation3 + $0x30] sm:$0xff]
  %v534 = vld [vmem:[#allocation3 + $0x38] sm:$0xff]
  %v535 = vld [vmem:[#allocation3 + $0x40] sm:$0xff]
  %v536 = vld [vmem:[#allocation3 + $0x48] sm:$0xff]
  %v537 = vld [vmem:[#allocation3 + $0x50] sm:$0xff]
  %v538 = vld [vmem:[#allocation3 + $0x58] sm:$0xff]
  %v539 = vld [vmem:[#allocation3 + $0x60] sm:$0xff]
  %v540 = vld [vmem:[#allocation3 + $0x68] sm:$0xff]
  %v541 = vld [vmem:[#allocation3 + $0x70] sm:$0xff]
  %v542 = vld [vmem:[#allocation3 + $0x78] sm:$0xff]
  %v543 = vld [vmem:[#allocation3 + $0x80] sm:$0xff]
  %v544 = vld [vmem:[#allocation3 + $0x88] sm:$0xff]
  %v545 = vld [vmem:[#allocation3 + $0x90] sm:$0xff]
  %v546 = vld [vmem:[#allocation3 + $0x98] sm:$0xff]
  %v547 = vld [vmem:[#allocation3 + $0xa0] sm:$0xff]
  %v548 = vld [vmem:[#allocation3 + $0xa8] sm:$0xff]
  %v549 = vld [vmem:[#allocation3 + $0xb0] sm:$0xff]
  %v550 = vld [vmem:[#allocation3 + $0xb8] sm:$0xff]
  %v551 = vld [vmem:[#allocation3 + $0xc0] sm:$0xff]
  %v552 = vld [vmem:[#allocation3 + $0xc8] sm:$0xff]
  %v553 = vld [vmem:[#allocation3 + $0xd0] sm:$0xff]
  %v554 = vld [vmem:[#allocation3 + $0xd8] sm:$0xff]
  %v555 = vld [vmem:[#allocation3 + $0xe0] sm:$0xff]
  %v556 = vld [vmem:[#allocation3 + $0xe8] sm:$0xff]
  %v557 = vld [vmem:[#allocation3 + $0xf0] sm:$0xff]
  %v558 = vld [vmem:[#allocation3 + $0xf8] sm:$0xff]
  %v559 = vld [vmem:[#allocation3 + $0x100] sm:$0xff]
  %v560 = vld [vmem:[#allocation3 + $0x108] sm:$0xff]
  %v561 = vld [vmem:[#allocation3 + $0x110] sm:$0xff]
  %v562 = vld [vmem:[#allocation3 + $0x118] sm:$0xff]
  %v563 = vld [vmem:[#allocation3 + $0x120] sm:$0xff]
  %v564 = vld [vmem:[#allocation3 + $0x128] sm:$0xff]
  %v565 = vld [vmem:[#allocation3 + $0x130] sm:$0xff]
  %v566 = vld [vmem:[#allocation3 + $0x138] sm:$0xff]
  %v567 = vld [vmem:[#allocation3 + $0x140] sm:$0xff]
  %v568 = vld [vmem:[#allocation3 + $0x148] sm:$0xff]
  %v569 = vld [vmem:[#allocation3 + $0x150] sm:$0xff]
  %v570 = vld [vmem:[#allocation3 + $0x158] sm:$0xff]
  %v571 = vld [vmem:[#allocation3 + $0x160] sm:$0xff]
  %v572 = vld [vmem:[#allocation3 + $0x168] sm:$0xff]
  %v573 = vld [vmem:[#allocation3 + $0x170] sm:$0xff]
  %v574 = vld [vmem:[#allocation3 + $0x178] sm:$0xff]
  %v575 = vunpack.c.l.bf16 %v455
  %v576 = vunpack.c.l.bf16 %v456
  %v577 = vunpack.c.l.bf16 %v457
  %v578 = vunpack.c.h.bf16 %v455
  %v579 = vunpack.c.h.bf16 %v456
  %v580 = vunpack.c.h.bf16 %v457
  %v581 = vunpack.c.l.bf16 %v458
  %v582 = vunpack.c.l.bf16 %v459
  %v583 = vunpack.c.l.bf16 %v460
  %v584 = vunpack.c.h.bf16 %v458
  %v585 = vunpack.c.h.bf16 %v459
  %v586 = vunpack.c.h.bf16 %v460
  %v587 = vunpack.c.l.bf16 %v461
  %v588 = vunpack.c.l.bf16 %v462
  %v589 = vunpack.c.l.bf16 %v463
  %v590 = vunpack.c.h.bf16 %v461
  %v591 = vunpack.c.h.bf16 %v462
  %v592 = vunpack.c.h.bf16 %v463
  %v593 = vunpack.c.l.bf16 %v464
  %v594 = vunpack.c.l.bf16 %v465
  %v595 = vunpack.c.l.bf16 %v466
  %v596 = vunpack.c.h.bf16 %v464
  %v597 = vunpack.c.h.bf16 %v465
  %v598 = vunpack.c.h.bf16 %v466
  %v599 = vunpack.c.l.bf16 %v467
  %v600 = vunpack.c.l.bf16 %v468
  %v601 = vunpack.c.l.bf16 %v469
  %v602 = vunpack.c.h.bf16 %v467
  %v603 = vunpack.c.h.bf16 %v468
  %v604 = vunpack.c.h.bf16 %v469
  %v605 = vunpack.c.l.bf16 %v470
  %v606 = vunpack.c.l.bf16 %v471
  %v607 = vunpack.c.l.bf16 %v472
  %v608 = vunpack.c.h.bf16 %v470
  %v609 = vunpack.c.h.bf16 %v471
  %v610 = vunpack.c.h.bf16 %v472
  %v611 = vunpack.c.l.bf16 %v473
  %v612 = vunpack.c.l.bf16 %v474
  %v613 = vunpack.c.l.bf16 %v475
  %v614 = vunpack.c.h.bf16 %v473
  %v615 = vunpack.c.h.bf16 %v474
  %v616 = vunpack.c.h.bf16 %v475
  %v617 = vunpack.c.l.bf16 %v476
  %v618 = vunpack.c.l.bf16 %v477
  %v619 = vunpack.c.l.bf16 %v478
  %v620 = vunpack.c.h.bf16 %v476
  %v621 = vunpack.c.h.bf16 %v477
  %v622 = vunpack.c.h.bf16 %v478
  %v623 = vunpack.c.l.bf16 %v479
  %v624 = vunpack.c.l.bf16 %v480
  %v625 = vunpack.c.l.bf16 %v481
  %v626 = vunpack.c.h.bf16 %v479
  %v627 = vunpack.c.h.bf16 %v480
  %v628 = vunpack.c.h.bf16 %v481
  %v629 = vunpack.c.l.bf16 %v482
  %v630 = vunpack.c.l.bf16 %v483
  %v631 = vunpack.c.l.bf16 %v484
  %v632 = vunpack.c.h.bf16 %v482
  %v633 = vunpack.c.h.bf16 %v483
  %v634 = vunpack.c.h.bf16 %v484
  %v635 = vunpack.c.l.bf16 %v485
  %v636 = vunpack.c.l.bf16 %v486
  %v637 = vunpack.c.l.bf16 %v487
  %v638 = vunpack.c.h.bf16 %v485
  %v639 = vunpack.c.h.bf16 %v486
  %v640 = vunpack.c.h.bf16 %v487
  %v641 = vunpack.c.l.bf16 %v488
  %v642 = vunpack.c.l.bf16 %v489
  %v643 = vunpack.c.l.bf16 %v490
  %v644 = vunpack.c.h.bf16 %v488
  %v645 = vunpack.c.h.bf16 %v489
  %v646 = vunpack.c.h.bf16 %v490
  %v647 = vunpack.c.l.bf16 %v491
  %v648 = vunpack.c.l.bf16 %v492
  %v649 = vunpack.c.l.bf16 %v493
  %v650 = vunpack.c.h.bf16 %v491
  %v651 = vunpack.c.h.bf16 %v492
  %v652 = vunpack.c.h.bf16 %v493
  %v653 = vunpack.c.l.bf16 %v494
  %v654 = vunpack.c.l.bf16 %v495
  %v655 = vunpack.c.l.bf16 %v496
  %v656 = vunpack.c.h.bf16 %v494
  %v657 = vunpack.c.h.bf16 %v495
  %v658 = vunpack.c.h.bf16 %v496
  %v659 = vunpack.c.l.bf16 %v497
  %v660 = vunpack.c.l.bf16 %v498
  %v661 = vunpack.c.l.bf16 %v499
  %v662 = vunpack.c.h.bf16 %v497
  %v663 = vunpack.c.h.bf16 %v498
  %v664 = vunpack.c.h.bf16 %v499
  %v665 = vunpack.c.l.bf16 %v500
  %v666 = vunpack.c.l.bf16 %v501
  %v667 = vunpack.c.l.bf16 %v502
  %v668 = vunpack.c.h.bf16 %v500
  %v669 = vunpack.c.h.bf16 %v501
  %v670 = vunpack.c.h.bf16 %v502
  %v671 = vunpack.c.l.bf16 %v503
  %v672 = vunpack.c.l.bf16 %v504
  %v673 = vunpack.c.l.bf16 %v505
  %v674 = vunpack.c.h.bf16 %v503
  %v675 = vunpack.c.h.bf16 %v504
  %v676 = vunpack.c.h.bf16 %v505
  %v677 = vunpack.c.l.bf16 %v506
  %v678 = vunpack.c.l.bf16 %v507
  %v679 = vunpack.c.l.bf16 %v508
  %v680 = vunpack.c.h.bf16 %v506
  %v681 = vunpack.c.h.bf16 %v507
  %v682 = vunpack.c.h.bf16 %v508
  %v683 = vunpack.c.l.bf16 %v509
  %v684 = vunpack.c.l.bf16 %v510
  %v685 = vunpack.c.l.bf16 %v511
  %v686 = vunpack.c.h.bf16 %v509
  %v687 = vunpack.c.h.bf16 %v510
  %v688 = vunpack.c.h.bf16 %v511
  %v689 = vunpack.c.l.bf16 %v512
  %v690 = vunpack.c.l.bf16 %v513
  %v691 = vunpack.c.l.bf16 %v514
  %v692 = vunpack.c.h.bf16 %v512
  %v693 = vunpack.c.h.bf16 %v513
  %v694 = vunpack.c.h.bf16 %v514
  %v695 = vunpack.c.l.bf16 %v515
  %v696 = vunpack.c.l.bf16 %v516
  %v697 = vunpack.c.l.bf16 %v517
  %v698 = vunpack.c.h.bf16 %v515
  %v699 = vunpack.c.h.bf16 %v516
  %v700 = vunpack.c.h.bf16 %v517
  %v701 = vunpack.c.l.bf16 %v518
  %v702 = vunpack.c.l.bf16 %v519
  %v703 = vunpack.c.l.bf16 %v520
  %v704 = vunpack.c.h.bf16 %v518
  %v705 = vunpack.c.h.bf16 %v519
  %v706 = vunpack.c.h.bf16 %v520
  %v707 = vunpack.c.l.bf16 %v521
  %v708 = vunpack.c.l.bf16 %v522
  %v709 = vunpack.c.l.bf16 %v523
  %v710 = vunpack.c.h.bf16 %v521
  %v711 = vunpack.c.h.bf16 %v522
  %v712 = vunpack.c.h.bf16 %v523
  %v713 = vunpack.c.l.bf16 %v524
  %v714 = vunpack.c.l.bf16 %v525
  %v715 = vunpack.c.l.bf16 %v526
  %v716 = vunpack.c.h.bf16 %v524
  %v717 = vunpack.c.h.bf16 %v525
  %v718 = vunpack.c.h.bf16 %v526
  %v719 = vadd.f32 %v575, %v576
  %v720 = vadd.f32 %v719, %v577
  %721 = vadd.xlane.f32.xlu0 %v720
  %v722 = vpop.xlane.xlu0 %721
  %v723 = vadd.f32 %v578, %v579
  %v724 = vadd.f32 %v723, %v580
  %725 = vadd.xlane.f32.xlu0 %v724
  %v726 = vpop.xlane.xlu0 %725
  %v727 = vadd.f32 %v581, %v582
  %v728 = vadd.f32 %v727, %v583
  %729 = vadd.xlane.f32.xlu0 %v728
  %v730 = vpop.xlane.xlu0 %729
  %v731 = vadd.f32 %v584, %v585
  %v732 = vadd.f32 %v731, %v586
  %733 = vadd.xlane.f32.xlu0 %v732
  %v734 = vpop.xlane.xlu0 %733
  %v735 = vadd.f32 %v587, %v588
  %v736 = vadd.f32 %v735, %v589
  %737 = vadd.xlane.f32.xlu0 %v736
  %v738 = vpop.xlane.xlu0 %737
  %v739 = vadd.f32 %v590, %v591
  %v740 = vadd.f32 %v739, %v592
  %741 = vadd.xlane.f32.xlu0 %v740
  %v742 = vpop.xlane.xlu0 %741
  %v743 = vadd.f32 %v593, %v594
  %v744 = vadd.f32 %v743, %v595
  %745 = vadd.xlane.f32.xlu0 %v744
  %v746 = vpop.xlane.xlu0 %745
  %v747 = vadd.f32 %v596, %v597
  %v748 = vadd.f32 %v747, %v598
  %749 = vadd.xlane.f32.xlu0 %v748
  %v750 = vpop.xlane.xlu0 %749
  %v751 = vadd.f32 %v599, %v600
  %v752 = vadd.f32 %v751, %v601
  %753 = vadd.xlane.f32.xlu0 %v752
  %v754 = vpop.xlane.xlu0 %753
  %v755 = vadd.f32 %v602, %v603
  %v756 = vadd.f32 %v755, %v604
  %757 = vadd.xlane.f32.xlu0 %v756
  %v758 = vpop.xlane.xlu0 %757
  %v759 = vadd.f32 %v605, %v606
  %v760 = vadd.f32 %v759, %v607
  %761 = vadd.xlane.f32.xlu0 %v760
  %v762 = vpop.xlane.xlu0 %761
  %v763 = vadd.f32 %v608, %v609
  %v764 = vadd.f32 %v763, %v610
  %765 = vadd.xlane.f32.xlu0 %v764
  %v766 = vpop.xlane.xlu0 %765
  %v767 = vadd.f32 %v611, %v612
  %v768 = vadd.f32 %v767, %v613
  %769 = vadd.xlane.f32.xlu0 %v768
  %v770 = vpop.xlane.xlu0 %769
  %v771 = vadd.f32 %v614, %v615
  %v772 = vadd.f32 %v771, %v616
  %773 = vadd.xlane.f32.xlu0 %v772
  %v774 = vpop.xlane.xlu0 %773
  %v775 = vadd.f32 %v617, %v618
  %v776 = vadd.f32 %v775, %v619
  %777 = vadd.xlane.f32.xlu0 %v776
  %v778 = vpop.xlane.xlu0 %777
  %v779 = vadd.f32 %v620, %v621
  %v780 = vadd.f32 %v779, %v622
  %781 = vadd.xlane.f32.xlu0 %v780
  %v782 = vpop.xlane.xlu0 %781
  %v783 = vadd.f32 %v623, %v624
  %v784 = vadd.f32 %v783, %v625
  %785 = vadd.xlane.f32.xlu0 %v784
  %v786 = vpop.xlane.xlu0 %785
  %v787 = vadd.f32 %v626, %v627
  %v788 = vadd.f32 %v787, %v628
  %789 = vadd.xlane.f32.xlu0 %v788
  %v790 = vpop.xlane.xlu0 %789
  %v791 = vadd.f32 %v629, %v630
  %v792 = vadd.f32 %v791, %v631
  %793 = vadd.xlane.f32.xlu0 %v792
  %v794 = vpop.xlane.xlu0 %793
  %v795 = vadd.f32 %v632, %v633
  %v796 = vadd.f32 %v795, %v634
  %797 = vadd.xlane.f32.xlu0 %v796
  %v798 = vpop.xlane.xlu0 %797
  %v799 = vadd.f32 %v635, %v636
  %v800 = vadd.f32 %v799, %v637
  %801 = vadd.xlane.f32.xlu0 %v800
  %v802 = vpop.xlane.xlu0 %801
  %v803 = vadd.f32 %v638, %v639
  %v804 = vadd.f32 %v803, %v640
  %805 = vadd.xlane.f32.xlu0 %v804
  %v806 = vpop.xlane.xlu0 %805
  %v807 = vadd.f32 %v641, %v642
  %v808 = vadd.f32 %v807, %v643
  %809 = vadd.xlane.f32.xlu0 %v808
  %v810 = vpop.xlane.xlu0 %809
  %v811 = vadd.f32 %v644, %v645
  %v812 = vadd.f32 %v811, %v646
  %813 = vadd.xlane.f32.xlu0 %v812
  %v814 = vpop.xlane.xlu0 %813
  %v815 = vadd.f32 %v647, %v648
  %v816 = vadd.f32 %v815, %v649
  %817 = vadd.xlane.f32.xlu0 %v816
  %v818 = vpop.xlane.xlu0 %817
  %v819 = vadd.f32 %v650, %v651
  %v820 = vadd.f32 %v819, %v652
  %821 = vadd.xlane.f32.xlu0 %v820
  %v822 = vpop.xlane.xlu0 %821
  %v823 = vadd.f32 %v653, %v654
  %v824 = vadd.f32 %v823, %v655
  %825 = vadd.xlane.f32.xlu0 %v824
  %v826 = vpop.xlane.xlu0 %825
  %v827 = vadd.f32 %v656, %v657
  %v828 = vadd.f32 %v827, %v658
  %829 = vadd.xlane.f32.xlu0 %v828
  %v830 = vpop.xlane.xlu0 %829
  %v831 = vadd.f32 %v659, %v660
  %v832 = vadd.f32 %v831, %v661
  %833 = vadd.xlane.f32.xlu0 %v832
  %v834 = vpop.xlane.xlu0 %833
  %v835 = vadd.f32 %v662, %v663
  %v836 = vadd.f32 %v835, %v664
  %837 = vadd.xlane.f32.xlu0 %v836
  %v838 = vpop.xlane.xlu0 %837
  %v839 = vadd.f32 %v665, %v666
  %v840 = vadd.f32 %v839, %v667
  %841 = vadd.xlane.f32.xlu0 %v840
  %v842 = vpop.xlane.xlu0 %841
  %v843 = vadd.f32 %v668, %v669
  %v844 = vadd.f32 %v843, %v670
  %845 = vadd.xlane.f32.xlu0 %v844
  %v846 = vpop.xlane.xlu0 %845
  %v847 = vadd.f32 %v671, %v672
  %v848 = vadd.f32 %v847, %v673
  %849 = vadd.xlane.f32.xlu0 %v848
  %v850 = vpop.xlane.xlu0 %849
  %v851 = vadd.f32 %v674, %v675
  %v852 = vadd.f32 %v851, %v676
  %853 = vadd.xlane.f32.xlu0 %v852
  %v854 = vpop.xlane.xlu0 %853
  %v855 = vadd.f32 %v677, %v678
  %v856 = vadd.f32 %v855, %v679
  %857 = vadd.xlane.f32.xlu0 %v856
  %v858 = vpop.xlane.xlu0 %857
  %v859 = vadd.f32 %v680, %v681
  %v860 = vadd.f32 %v859, %v682
  %861 = vadd.xlane.f32.xlu0 %v860
  %v862 = vpop.xlane.xlu0 %861
  %v863 = vadd.f32 %v683, %v684
  %v864 = vadd.f32 %v863, %v685
  %865 = vadd.xlane.f32.xlu0 %v864
  %v866 = vpop.xlane.xlu0 %865
  %v867 = vadd.f32 %v686, %v687
  %v868 = vadd.f32 %v867, %v688
  %869 = vadd.xlane.f32.xlu0 %v868
  %v870 = vpop.xlane.xlu0 %869
  %v871 = vadd.f32 %v689, %v690
  %v872 = vadd.f32 %v871, %v691
  %873 = vadd.xlane.f32.xlu0 %v872
  %v874 = vpop.xlane.xlu0 %873
  %v875 = vadd.f32 %v692, %v693
  %v876 = vadd.f32 %v875, %v694
  %877 = vadd.xlane.f32.xlu0 %v876
  %v878 = vpop.xlane.xlu0 %877
  %v879 = vadd.f32 %v695, %v696
  %v880 = vadd.f32 %v879, %v697
  %881 = vadd.xlane.f32.xlu0 %v880
  %v882 = vpop.xlane.xlu0 %881
  %v883 = vadd.f32 %v698, %v699
  %v884 = vadd.f32 %v883, %v700
  %885 = vadd.xlane.f32.xlu0 %v884
  %v886 = vpop.xlane.xlu0 %885
  %v887 = vadd.f32 %v701, %v702
  %v888 = vadd.f32 %v887, %v703
  %889 = vadd.xlane.f32.xlu0 %v888
  %v890 = vpop.xlane.xlu0 %889
  %v891 = vadd.f32 %v704, %v705
  %v892 = vadd.f32 %v891, %v706
  %893 = vadd.xlane.f32.xlu0 %v892
  %v894 = vpop.xlane.xlu0 %893
  %v895 = vadd.f32 %v707, %v708
  %v896 = vadd.f32 %v895, %v709
  %897 = vadd.xlane.f32.xlu0 %v896
  %v898 = vpop.xlane.xlu0 %897
  %v899 = vadd.f32 %v710, %v711
  %v900 = vadd.f32 %v899, %v712
  %901 = vadd.xlane.f32.xlu0 %v900
  %v902 = vpop.xlane.xlu0 %901
  %v903 = vadd.f32 %v713, %v714
  %v904 = vadd.f32 %v903, %v715
  %905 = vadd.xlane.f32.xlu0 %v904
  %v906 = vpop.xlane.xlu0 %905
  %v907 = vadd.f32 %v716, %v717
  %v908 = vadd.f32 %v907, %v718
  %909 = vadd.xlane.f32.xlu0 %v908
  %v910 = vpop.xlane.xlu0 %909
  %v911 = vadd.f32 %v527, %v722
  %v912 = vadd.f32 %v528, %v726
  %v913 = vadd.f32 %v529, %v730
  %v914 = vadd.f32 %v530, %v734
  %v915 = vadd.f32 %v531, %v738
  %v916 = vadd.f32 %v532, %v742
  %v917 = vadd.f32 %v533, %v746
  %v918 = vadd.f32 %v534, %v750
  %v919 = vadd.f32 %v535, %v754
  %v920 = vadd.f32 %v536, %v758
  %v921 = vadd.f32 %v537, %v762
  %v922 = vadd.f32 %v538, %v766
  %v923 = vadd.f32 %v539, %v770
  %v924 = vadd.f32 %v540, %v774
  %v925 = vadd.f32 %v541, %v778
  %v926 = vadd.f32 %v542, %v782
  %v927 = vadd.f32 %v543, %v786
  %v928 = vadd.f32 %v544, %v790
  %v929 = vadd.f32 %v545, %v794
  %v930 = vadd.f32 %v546, %v798
  %v931 = vadd.f32 %v547, %v802
  %v932 = vadd.f32 %v548, %v806
  %v933 = vadd.f32 %v549, %v810
  %v934 = vadd.f32 %v550, %v814
  %v935 = vadd.f32 %v551, %v818
  %v936 = vadd.f32 %v552, %v822
  %v937 = vadd.f32 %v553, %v826
  %v938 = vadd.f32 %v554, %v830
  %v939 = vadd.f32 %v555, %v834
  %v940 = vadd.f32 %v556, %v838
  %v941 = vadd.f32 %v557, %v842
  %v942 = vadd.f32 %v558, %v846
  %v943 = vadd.f32 %v559, %v850
  %v944 = vadd.f32 %v560, %v854
  %v945 = vadd.f32 %v561, %v858
  %v946 = vadd.f32 %v562, %v862
  %v947 = vadd.f32 %v563, %v866
  %v948 = vadd.f32 %v564, %v870
  %v949 = vadd.f32 %v565, %v874
  %v950 = vadd.f32 %v566, %v878
  %v951 = vadd.f32 %v567, %v882
  %v952 = vadd.f32 %v568, %v886
  %v953 = vadd.f32 %v569, %v890
  %v954 = vadd.f32 %v570, %v894
  %v955 = vadd.f32 %v571, %v898
  %v956 = vadd.f32 %v572, %v902
  %v957 = vadd.f32 %v573, %v906
  %v958 = vadd.f32 %v574, %v910
  %vm959 = vcmask 7168
  %960 = vst.msk [vmem:[#allocation3] sm:$0xff] %vm959, %v911
  %961 = vst.msk [vmem:[#allocation3 + $0x8] sm:$0xff] %vm959, %v912
  %962 = vst.msk [vmem:[#allocation3 + $0x10] sm:$0xff] %vm959, %v913
  %963 = vst.msk [vmem:[#allocation3 + $0x18] sm:$0xff] %vm959, %v914
  %964 = vst.msk [vmem:[#allocation3 + $0x20] sm:$0xff] %vm959, %v915
  %965 = vst.msk [vmem:[#allocation3 + $0x28] sm:$0xff] %vm959, %v916
  %966 = vst.msk [vmem:[#allocation3 + $0x30] sm:$0xff] %vm959, %v917
  %967 = vst.msk [vmem:[#allocation3 + $0x38] sm:$0xff] %vm959, %v918
  %968 = vst.msk [vmem:[#allocation3 + $0x40] sm:$0xff] %vm959, %v919
  %969 = vst.msk [vmem:[#allocation3 + $0x48] sm:$0xff] %vm959, %v920
  %970 = vst.msk [vmem:[#allocation3 + $0x50] sm:$0xff] %vm959, %v921
  %971 = vst.msk [vmem:[#allocation3 + $0x58] sm:$0xff] %vm959, %v922
  %972 = vst.msk [vmem:[#allocation3 + $0x60] sm:$0xff] %vm959, %v923
  %973 = vst.msk [vmem:[#allocation3 + $0x68] sm:$0xff] %vm959, %v924
  %974 = vst.msk [vmem:[#allocation3 + $0x70] sm:$0xff] %vm959, %v925
  %975 = vst.msk [vmem:[#allocation3 + $0x78] sm:$0xff] %vm959, %v926
  %976 = vst.msk [vmem:[#allocation3 + $0x80] sm:$0xff] %vm959, %v927
  %977 = vst.msk [vmem:[#allocation3 + $0x88] sm:$0xff] %vm959, %v928
  %978 = vst.msk [vmem:[#allocation3 + $0x90] sm:$0xff] %vm959, %v929
  %979 = vst.msk [vmem:[#allocation3 + $0x98] sm:$0xff] %vm959, %v930
  %980 = vst.msk [vmem:[#allocation3 + $0xa0] sm:$0xff] %vm959, %v931
  %981 = vst.msk [vmem:[#allocation3 + $0xa8] sm:$0xff] %vm959, %v932
  %982 = vst.msk [vmem:[#allocation3 + $0xb0] sm:$0xff] %vm959, %v933
  %983 = vst.msk [vmem:[#allocation3 + $0xb8] sm:$0xff] %vm959, %v934
  %984 = vst.msk [vmem:[#allocation3 + $0xc0] sm:$0xff] %vm959, %v935
  %985 = vst.msk [vmem:[#allocation3 + $0xc8] sm:$0xff] %vm959, %v936
  %986 = vst.msk [vmem:[#allocation3 + $0xd0] sm:$0xff] %vm959, %v937
  %987 = vst.msk [vmem:[#allocation3 + $0xd8] sm:$0xff] %vm959, %v938
  %988 = vst.msk [vmem:[#allocation3 + $0xe0] sm:$0xff] %vm959, %v939
  %989 = vst.msk [vmem:[#allocation3 + $0xe8] sm:$0xff] %vm959, %v940
  %990 = vst.msk [vmem:[#allocation3 + $0xf0] sm:$0xff] %vm959, %v941
  %991 = vst.msk [vmem:[#allocation3 + $0xf8] sm:$0xff] %vm959, %v942
  %992 = vst.msk [vmem:[#allocation3 + $0x100] sm:$0xff] %vm959, %v943
  %993 = vst.msk [vmem:[#allocation3 + $0x108] sm:$0xff] %vm959, %v944
  %994 = vst.msk [vmem:[#allocation3 + $0x110] sm:$0xff] %vm959, %v945
  %995 = vst.msk [vmem:[#allocation3 + $0x118] sm:$0xff] %vm959, %v946
  %996 = vst.msk [vmem:[#allocation3 + $0x120] sm:$0xff] %vm959, %v947
  %997 = vst.msk [vmem:[#allocation3 + $0x128] sm:$0xff] %vm959, %v948
  %998 = vst.msk [vmem:[#allocation3 + $0x130] sm:$0xff] %vm959, %v949
  %999 = vst.msk [vmem:[#allocation3 + $0x138] sm:$0xff] %vm959, %v950
  %1000 = vst.msk [vmem:[#allocation3 + $0x140] sm:$0xff] %vm959, %v951
  %1001 = vst.msk [vmem:[#allocation3 + $0x148] sm:$0xff] %vm959, %v952
  %1002 = vst.msk [vmem:[#allocation3 + $0x150] sm:$0xff] %vm959, %v953
  %1003 = vst.msk [vmem:[#allocation3 + $0x158] sm:$0xff] %vm959, %v954
  %1004 = vst.msk [vmem:[#allocation3 + $0x160] sm:$0xff] %vm959, %v955
  %1005 = vst.msk [vmem:[#allocation3 + $0x168] sm:$0xff] %vm959, %v956
  %1006 = vst.msk [vmem:[#allocation3 + $0x170] sm:$0xff] %vm959, %v957
  %1007 = vst.msk [vmem:[#allocation3 + $0x178] sm:$0xff] %vm959, %v958
  %s1008 = smul.u32 0, 384
  %s1009 = sshra.s32 %s1008, 3
  %s1010 = sand.u32 %s1008, 7
  %s1011 = smul.addr %s1009, 4
  %s1012 = scalar_lea.vmem %s1, %s1011
  %v1013 = vld [vmem:[%s1012] sm:$0xf]
  %v1014 = vld [vmem:[%s1012 + $0x4] sm:$0xf]
  %v1015 = vld [vmem:[%s1012 + $0x8] sm:$0xf]
  %v1016 = vld [vmem:[%s1012 + $0xc] sm:$0xf]
  %v1017 = vld [vmem:[%s1012 + $0x10] sm:$0xf]
  %v1018 = vld [vmem:[%s1012 + $0x14] sm:$0xf]
  %v1019 = vld [vmem:[%s1012 + $0x18] sm:$0xf]
  %v1020 = vld [vmem:[%s1012 + $0x1c] sm:$0xf]
  %v1021 = vld [vmem:[%s1012 + $0x20] sm:$0xf]
  %v1022 = vld [vmem:[%s1012 + $0x24] sm:$0xf]
  %v1023 = vld [vmem:[%s1012 + $0x28] sm:$0xf]
  %v1024 = vld [vmem:[%s1012 + $0x2c] sm:$0xf]
  %v1025 = vld [vmem:[%s1012 + $0x30] sm:$0xf]
  %v1026 = vld [vmem:[%s1012 + $0x34] sm:$0xf]
  %v1027 = vld [vmem:[%s1012 + $0x38] sm:$0xf]
  %v1028 = vld [vmem:[%s1012 + $0x3c] sm:$0xf]
  %v1029 = vld [vmem:[%s1012 + $0x40] sm:$0xf]
  %v1030 = vld [vmem:[%s1012 + $0x44] sm:$0xf]
  %v1031 = vld [vmem:[%s1012 + $0x48] sm:$0xf]
  %v1032 = vld [vmem:[%s1012 + $0x4c] sm:$0xf]
  %v1033 = vld [vmem:[%s1012 + $0x50] sm:$0xf]
  %v1034 = vld [vmem:[%s1012 + $0x54] sm:$0xf]
  %v1035 = vld [vmem:[%s1012 + $0x58] sm:$0xf]
  %v1036 = vld [vmem:[%s1012 + $0x5c] sm:$0xf]
  %v1037 = vld [vmem:[%s1012 + $0x60] sm:$0xf]
  %v1038 = vld [vmem:[%s1012 + $0x64] sm:$0xf]
  %v1039 = vld [vmem:[%s1012 + $0x68] sm:$0xf]
  %v1040 = vld [vmem:[%s1012 + $0x6c] sm:$0xf]
  %v1041 = vld [vmem:[%s1012 + $0x70] sm:$0xf]
  %v1042 = vld [vmem:[%s1012 + $0x74] sm:$0xf]
  %v1043 = vld [vmem:[%s1012 + $0x78] sm:$0xf]
  %v1044 = vld [vmem:[%s1012 + $0x7c] sm:$0xf]
  %v1045 = vld [vmem:[%s1012 + $0x80] sm:$0xf]
  %v1046 = vld [vmem:[%s1012 + $0x84] sm:$0xf]
  %v1047 = vld [vmem:[%s1012 + $0x88] sm:$0xf]
  %v1048 = vld [vmem:[%s1012 + $0x8c] sm:$0xf]
  %v1049 = vld [vmem:[%s1012 + $0x90] sm:$0xf]
  %v1050 = vld [vmem:[%s1012 + $0x94] sm:$0xf]
  %v1051 = vld [vmem:[%s1012 + $0x98] sm:$0xf]
  %v1052 = vld [vmem:[%s1012 + $0x9c] sm:$0xf]
  %v1053 = vld [vmem:[%s1012 + $0xa0] sm:$0xf]
  %v1054 = vld [vmem:[%s1012 + $0xa4] sm:$0xf]
  %v1055 = vld [vmem:[%s1012 + $0xa8] sm:$0xf]
  %v1056 = vld [vmem:[%s1012 + $0xac] sm:$0xf]
  %v1057 = vld [vmem:[%s1012 + $0xb0] sm:$0xf]
  %v1058 = vld [vmem:[%s1012 + $0xb4] sm:$0xf]
  %v1059 = vld [vmem:[%s1012 + $0xb8] sm:$0xf]
  %v1060 = vld [vmem:[%s1012 + $0xbc] sm:$0xf]
  %v1061 = vld [vmem:[#allocation2] sm:$0xff]
  %v1062 = vld [vmem:[#allocation2 + $0x8] sm:$0xff]
  %v1063 = vld [vmem:[#allocation2 + $0x10] sm:$0xff]
  %v1064 = vld [vmem:[#allocation2 + $0x18] sm:$0xff]
  %v1065 = vld [vmem:[#allocation2 + $0x20] sm:$0xff]
  %v1066 = vld [vmem:[#allocation2 + $0x28] sm:$0xff]
  %v1067 = vld [vmem:[#allocation2 + $0x30] sm:$0xff]
  %v1068 = vld [vmem:[#allocation2 + $0x38] sm:$0xff]
  %v1069 = vld [vmem:[#allocation2 + $0x40] sm:$0xff]
  %v1070 = vld [vmem:[#allocation2 + $0x48] sm:$0xff]
  %v1071 = vld [vmem:[#allocation2 + $0x50] sm:$0xff]
  %v1072 = vld [vmem:[#allocation2 + $0x58] sm:$0xff]
  %v1073 = vld [vmem:[#allocation2 + $0x60] sm:$0xff]
  %v1074 = vld [vmem:[#allocation2 + $0x68] sm:$0xff]
  %v1075 = vld [vmem:[#allocation2 + $0x70] sm:$0xff]
  %v1076 = vld [vmem:[#allocation2 + $0x78] sm:$0xff]
  %v1077 = vld [vmem:[#allocation2 + $0x80] sm:$0xff]
  %v1078 = vld [vmem:[#allocation2 + $0x88] sm:$0xff]
  %v1079 = vld [vmem:[#allocation2 + $0x90] sm:$0xff]
  %v1080 = vld [vmem:[#allocation2 + $0x98] sm:$0xff]
  %v1081 = vld [vmem:[#allocation2 + $0xa0] sm:$0xff]
  %v1082 = vld [vmem:[#allocation2 + $0xa8] sm:$0xff]
  %v1083 = vld [vmem:[#allocation2 + $0xb0] sm:$0xff]
  %v1084 = vld [vmem:[#allocation2 + $0xb8] sm:$0xff]
  %v1085 = vld [vmem:[#allocation2 + $0xc0] sm:$0xff]
  %v1086 = vld [vmem:[#allocation2 + $0xc8] sm:$0xff]
  %v1087 = vld [vmem:[#allocation2 + $0xd0] sm:$0xff]
  %v1088 = vld [vmem:[#allocation2 + $0xd8] sm:$0xff]
  %v1089 = vld [vmem:[#allocation2 + $0xe0] sm:$0xff]
  %v1090 = vld [vmem:[#allocation2 + $0xe8] sm:$0xff]
  %v1091 = vld [vmem:[#allocation2 + $0xf0] sm:$0xff]
  %v1092 = vld [vmem:[#allocation2 + $0xf8] sm:$0xff]
  %v1093 = vld [vmem:[#allocation2 + $0x100] sm:$0xff]
  %v1094 = vld [vmem:[#allocation2 + $0x108] sm:$0xff]
  %v1095 = vld [vmem:[#allocation2 + $0x110] sm:$0xff]
  %v1096 = vld [vmem:[#allocation2 + $0x118] sm:$0xff]
  %v1097 = vld [vmem:[#allocation2 + $0x120] sm:$0xff]
  %v1098 = vld [vmem:[#allocation2 + $0x128] sm:$0xff]
  %v1099 = vld [vmem:[#allocation2 + $0x130] sm:$0xff]
  %v1100 = vld [vmem:[#allocation2 + $0x138] sm:$0xff]
  %v1101 = vld [vmem:[#allocation2 + $0x140] sm:$0xff]
  %v1102 = vld [vmem:[#allocation2 + $0x148] sm:$0xff]
  %v1103 = vld [vmem:[#allocation2 + $0x150] sm:$0xff]
  %v1104 = vld [vmem:[#allocation2 + $0x158] sm:$0xff]
  %v1105 = vld [vmem:[#allocation2 + $0x160] sm:$0xff]
  %v1106 = vld [vmem:[#allocation2 + $0x168] sm:$0xff]
  %v1107 = vld [vmem:[#allocation2 + $0x170] sm:$0xff]
  %v1108 = vld [vmem:[#allocation2 + $0x178] sm:$0xff]
  %v1157 = vunpack.c.l.b16 %v1013
  %v1158 = vunpack.c.l.b16 %v1014
  %v1159 = vunpack.c.l.b16 %v1015
  %v1160 = vunpack.c.l.b16 %v1016
  %v1161 = vunpack.c.l.b16 %v1017
  %v1162 = vunpack.c.l.b16 %v1018
  %v1163 = vunpack.c.l.b16 %v1019
  %v1164 = vunpack.c.l.b16 %v1020
  %v1165 = vunpack.c.l.b16 %v1021
  %v1166 = vunpack.c.l.b16 %v1022
  %v1167 = vunpack.c.l.b16 %v1023
  %v1168 = vunpack.c.l.b16 %v1024
  %v1169 = vunpack.c.l.b16 %v1025
  %v1170 = vunpack.c.l.b16 %v1026
  %v1171 = vunpack.c.l.b16 %v1027
  %v1172 = vunpack.c.l.b16 %v1028
  %v1173 = vunpack.c.l.b16 %v1029
  %v1174 = vunpack.c.l.b16 %v1030
  %v1175 = vunpack.c.l.b16 %v1031
  %v1176 = vunpack.c.l.b16 %v1032
  %v1177 = vunpack.c.l.b16 %v1033
  %v1178 = vunpack.c.l.b16 %v1034
  %v1179 = vunpack.c.l.b16 %v1035
  %v1180 = vunpack.c.l.b16 %v1036
  %v1181 = vunpack.c.l.b16 %v1037
  %v1182 = vunpack.c.l.b16 %v1038
  %v1183 = vunpack.c.l.b16 %v1039
  %v1184 = vunpack.c.l.b16 %v1040
  %v1185 = vunpack.c.l.b16 %v1041
  %v1186 = vunpack.c.l.b16 %v1042
  %v1187 = vunpack.c.l.b16 %v1043
  %v1188 = vunpack.c.l.b16 %v1044
  %v1189 = vunpack.c.l.b16 %v1045
  %v1190 = vunpack.c.l.b16 %v1046
  %v1191 = vunpack.c.l.b16 %v1047
  %v1192 = vunpack.c.l.b16 %v1048
  %v1193 = vunpack.c.l.b16 %v1049
  %v1194 = vunpack.c.l.b16 %v1050
  %v1195 = vunpack.c.l.b16 %v1051
  %v1196 = vunpack.c.l.b16 %v1052
  %v1197 = vunpack.c.l.b16 %v1053
  %v1198 = vunpack.c.l.b16 %v1054
  %v1199 = vunpack.c.l.b16 %v1055
  %v1200 = vunpack.c.l.b16 %v1056
  %v1201 = vunpack.c.l.b16 %v1057
  %v1202 = vunpack.c.l.b16 %v1058
  %v1203 = vunpack.c.l.b16 %v1059
  %v1204 = vunpack.c.l.b16 %v1060
  %v1205 = vpack.c.b16 %v1158, %v1157
  %v1206 = vpack.c.b16 %v1160, %v1159
  %v1207 = vpack.c.b16 %v1162, %v1161
  %v1208 = vpack.c.b16 %v1164, %v1163
  %v1209 = vpack.c.b16 %v1166, %v1165
  %v1210 = vpack.c.b16 %v1168, %v1167
  %v1211 = vpack.c.b16 %v1170, %v1169
  %v1212 = vpack.c.b16 %v1172, %v1171
  %v1213 = vpack.c.b16 %v1174, %v1173
  %v1214 = vpack.c.b16 %v1176, %v1175
  %v1215 = vpack.c.b16 %v1178, %v1177
  %v1216 = vpack.c.b16 %v1180, %v1179
  %v1217 = vpack.c.b16 %v1182, %v1181
  %v1218 = vpack.c.b16 %v1184, %v1183
  %v1219 = vpack.c.b16 %v1186, %v1185
  %v1220 = vpack.c.b16 %v1188, %v1187
  %v1221 = vpack.c.b16 %v1190, %v1189
  %v1222 = vpack.c.b16 %v1192, %v1191
  %v1223 = vpack.c.b16 %v1194, %v1193
  %v1224 = vpack.c.b16 %v1196, %v1195
  %v1225 = vpack.c.b16 %v1198, %v1197
  %v1226 = vpack.c.b16 %v1200, %v1199
  %v1227 = vpack.c.b16 %v1202, %v1201
  %v1228 = vpack.c.b16 %v1204, %v1203
  %1253 = vmatpush.bf16.msra.mxu0 %v1212
  %1254 = vmatpush.bf16.msra.mxu0 %v1211
  %1255 = vmatpush.bf16.msra.mxu0 %v1210
  %1256 = vmatpush.bf16.msra.mxu0 %v1209
  %1257 = vmatpush.bf16.msra.mxu0 %v1208
  %1258 = vmatpush.bf16.msra.mxu0 %v1207
  %1259 = vmatpush.bf16.msra.mxu0 %v1206
  %1260 = vmatpush.bf16.msra.mxu0 %v1205
  %1261 = vmatmul.bf16.gmra.mxu0 %v455
  %v1262 = vpop.f32.mrf.mxu0
  %v1263 = vadd.f32 0.0, %v1262
  %v1264 = vpop.f32.mrf.mxu0
  %v1265 = vadd.f32 0.0, %v1264
  %1266 = vmatmul.bf16.gmra.mxu0 %v458
  %v1267 = vpop.f32.mrf.mxu0
  %v1268 = vadd.f32 0.0, %v1267
  %v1269 = vpop.f32.mrf.mxu0
  %v1270 = vadd.f32 0.0, %v1269
  %1271 = vmatmul.bf16.gmra.mxu0 %v461
  %v1272 = vpop.f32.mrf.mxu0
  %v1273 = vadd.f32 0.0, %v1272
  %v1274 = vpop.f32.mrf.mxu0
  %v1275 = vadd.f32 0.0, %v1274
  %1276 = vmatmul.bf16.gmra.mxu0 %v464
  %v1277 = vpop.f32.mrf.mxu0
  %v1278 = vadd.f32 0.0, %v1277
  %v1279 = vpop.f32.mrf.mxu0
  %v1280 = vadd.f32 0.0, %v1279
  %1281 = vmatmul.bf16.gmra.mxu0 %v467
  %v1282 = vpop.f32.mrf.mxu0
  %v1283 = vadd.f32 0.0, %v1282
  %v1284 = vpop.f32.mrf.mxu0
  %v1285 = vadd.f32 0.0, %v1284
  %1286 = vmatmul.bf16.gmra.mxu0 %v470
  %v1287 = vpop.f32.mrf.mxu0
  %v1288 = vadd.f32 0.0, %v1287
  %v1289 = vpop.f32.mrf.mxu0
  %v1290 = vadd.f32 0.0, %v1289
  %1291 = vmatmul.bf16.gmra.mxu0 %v473
  %v1292 = vpop.f32.mrf.mxu0
  %v1293 = vadd.f32 0.0, %v1292
  %v1294 = vpop.f32.mrf.mxu0
  %v1295 = vadd.f32 0.0, %v1294
  %1296 = vmatmul.bf16.gmra.mxu0 %v476
  %v1297 = vpop.f32.mrf.mxu0
  %v1298 = vadd.f32 0.0, %v1297
  %v1299 = vpop.f32.mrf.mxu0
  %v1300 = vadd.f32 0.0, %v1299
  %1301 = vmatmul.bf16.gmra.mxu0 %v479
  %v1302 = vpop.f32.mrf.mxu0
  %v1303 = vadd.f32 0.0, %v1302
  %v1304 = vpop.f32.mrf.mxu0
  %v1305 = vadd.f32 0.0, %v1304
  %1306 = vmatmul.bf16.gmra.mxu0 %v482
  %v1307 = vpop.f32.mrf.mxu0
  %v1308 = vadd.f32 0.0, %v1307
  %v1309 = vpop.f32.mrf.mxu0
  %v1310 = vadd.f32 0.0, %v1309
  %1311 = vmatmul.bf16.gmra.mxu0 %v485
  %v1312 = vpop.f32.mrf.mxu0
  %v1313 = vadd.f32 0.0, %v1312
  %v1314 = vpop.f32.mrf.mxu0
  %v1315 = vadd.f32 0.0, %v1314
  %1316 = vmatmul.bf16.gmra.mxu0 %v488
  %v1317 = vpop.f32.mrf.mxu0
  %v1318 = vadd.f32 0.0, %v1317
  %v1319 = vpop.f32.mrf.mxu0
  %v1320 = vadd.f32 0.0, %v1319
  %1321 = vmatmul.bf16.gmra.mxu0 %v491
  %v1322 = vpop.f32.mrf.mxu0
  %v1323 = vadd.f32 0.0, %v1322
  %v1324 = vpop.f32.mrf.mxu0
  %v1325 = vadd.f32 0.0, %v1324
  %1326 = vmatmul.bf16.gmra.mxu0 %v494
  %v1327 = vpop.f32.mrf.mxu0
  %v1328 = vadd.f32 0.0, %v1327
  %v1329 = vpop.f32.mrf.mxu0
  %v1330 = vadd.f32 0.0, %v1329
  %1331 = vmatmul.bf16.gmra.mxu0 %v497
  %v1332 = vpop.f32.mrf.mxu0
  %v1333 = vadd.f32 0.0, %v1332
  %v1334 = vpop.f32.mrf.mxu0
  %v1335 = vadd.f32 0.0, %v1334
  %1336 = vmatmul.bf16.gmra.mxu0 %v500
  %v1337 = vpop.f32.mrf.mxu0
  %v1338 = vadd.f32 0.0, %v1337
  %v1339 = vpop.f32.mrf.mxu0
  %v1340 = vadd.f32 0.0, %v1339
  %1341 = vmatmul.bf16.gmra.mxu0 %v503
  %v1342 = vpop.f32.mrf.mxu0
  %v1343 = vadd.f32 0.0, %v1342
  %v1344 = vpop.f32.mrf.mxu0
  %v1345 = vadd.f32 0.0, %v1344
  %1346 = vmatmul.bf16.gmra.mxu0 %v506
  %v1347 = vpop.f32.mrf.mxu0
  %v1348 = vadd.f32 0.0, %v1347
  %v1349 = vpop.f32.mrf.mxu0
  %v1350 = vadd.f32 0.0, %v1349
  %1351 = vmatmul.bf16.gmra.mxu0 %v509
  %v1352 = vpop.f32.mrf.mxu0
  %v1353 = vadd.f32 0.0, %v1352
  %v1354 = vpop.f32.mrf.mxu0
  %v1355 = vadd.f32 0.0, %v1354
  %1356 = vmatmul.bf16.gmra.mxu0 %v512
  %v1357 = vpop.f32.mrf.mxu0
  %v1358 = vadd.f32 0.0, %v1357
  %v1359 = vpop.f32.mrf.mxu0
  %v1360 = vadd.f32 0.0, %v1359
  %1361 = vmatmul.bf16.gmra.mxu0 %v515
  %v1362 = vpop.f32.mrf.mxu0
  %v1363 = vadd.f32 0.0, %v1362
  %v1364 = vpop.f32.mrf.mxu0
  %v1365 = vadd.f32 0.0, %v1364
  %1366 = vmatmul.bf16.gmra.mxu0 %v518
  %v1367 = vpop.f32.mrf.mxu0
  %v1368 = vadd.f32 0.0, %v1367
  %v1369 = vpop.f32.mrf.mxu0
  %v1370 = vadd.f32 0.0, %v1369
  %1371 = vmatmul.bf16.gmra.mxu0 %v521
  %v1372 = vpop.f32.mrf.mxu0
  %v1373 = vadd.f32 0.0, %v1372
  %v1374 = vpop.f32.mrf.mxu0
  %v1375 = vadd.f32 0.0, %v1374
  %1376 = vmatmul.bf16.gmra.mxu0 %v524
  %v1377 = vpop.f32.mrf.mxu0
  %v1378 = vadd.f32 0.0, %v1377
  %v1379 = vpop.f32.mrf.mxu0
  %v1380 = vadd.f32 0.0, %v1379
  %1381 = vdwg.mxu0
  %1382 = vmatpush.bf16.msra.mxu0 %v1220
  %1383 = vmatpush.bf16.msra.mxu0 %v1219
  %1384 = vmatpush.bf16.msra.mxu0 %v1218
  %1385 = vmatpush.bf16.msra.mxu0 %v1217
  %1386 = vmatpush.bf16.msra.mxu0 %v1216
  %1387 = vmatpush.bf16.msra.mxu0 %v1215
  %1388 = vmatpush.bf16.msra.mxu0 %v1214
  %1389 = vmatpush.bf16.msra.mxu0 %v1213
  %1390 = vmatmul.bf16.gmra.mxu0 %v456
  %v1391 = vpop.f32.mrf.mxu0
  %v1392 = vadd.f32 %v1263, %v1391
  %v1393 = vpop.f32.mrf.mxu0
  %v1394 = vadd.f32 %v1265, %v1393
  %1395 = vmatmul.bf16.gmra.mxu0 %v459
  %v1396 = vpop.f32.mrf.mxu0
  %v1397 = vadd.f32 %v1268, %v1396
  %v1398 = vpop.f32.mrf.mxu0
  %v1399 = vadd.f32 %v1270, %v1398
  %1400 = vmatmul.bf16.gmra.mxu0 %v462
  %v1401 = vpop.f32.mrf.mxu0
  %v1402 = vadd.f32 %v1273, %v1401
  %v1403 = vpop.f32.mrf.mxu0
  %v1404 = vadd.f32 %v1275, %v1403
  %1405 = vmatmul.bf16.gmra.mxu0 %v465
  %v1406 = vpop.f32.mrf.mxu0
  %v1407 = vadd.f32 %v1278, %v1406
  %v1408 = vpop.f32.mrf.mxu0
  %v1409 = vadd.f32 %v1280, %v1408
  %1410 = vmatmul.bf16.gmra.mxu0 %v468
  %v1411 = vpop.f32.mrf.mxu0
  %v1412 = vadd.f32 %v1283, %v1411
  %v1413 = vpop.f32.mrf.mxu0
  %v1414 = vadd.f32 %v1285, %v1413
  %1415 = vmatmul.bf16.gmra.mxu0 %v471
  %v1416 = vpop.f32.mrf.mxu0
  %v1417 = vadd.f32 %v1288, %v1416
  %v1418 = vpop.f32.mrf.mxu0
  %v1419 = vadd.f32 %v1290, %v1418
  %1420 = vmatmul.bf16.gmra.mxu0 %v474
  %v1421 = vpop.f32.mrf.mxu0
  %v1422 = vadd.f32 %v1293, %v1421
  %v1423 = vpop.f32.mrf.mxu0
  %v1424 = vadd.f32 %v1295, %v1423
  %1425 = vmatmul.bf16.gmra.mxu0 %v477
  %v1426 = vpop.f32.mrf.mxu0
  %v1427 = vadd.f32 %v1298, %v1426
  %v1428 = vpop.f32.mrf.mxu0
  %v1429 = vadd.f32 %v1300, %v1428
  %1430 = vmatmul.bf16.gmra.mxu0 %v480
  %v1431 = vpop.f32.mrf.mxu0
  %v1432 = vadd.f32 %v1303, %v1431
  %v1433 = vpop.f32.mrf.mxu0
  %v1434 = vadd.f32 %v1305, %v1433
  %1435 = vmatmul.bf16.gmra.mxu0 %v483
  %v1436 = vpop.f32.mrf.mxu0
  %v1437 = vadd.f32 %v1308, %v1436
  %v1438 = vpop.f32.mrf.mxu0
  %v1439 = vadd.f32 %v1310, %v1438
  %1440 = vmatmul.bf16.gmra.mxu0 %v486
  %v1441 = vpop.f32.mrf.mxu0
  %v1442 = vadd.f32 %v1313, %v1441
  %v1443 = vpop.f32.mrf.mxu0
  %v1444 = vadd.f32 %v1315, %v1443
  %1445 = vmatmul.bf16.gmra.mxu0 %v489
  %v1446 = vpop.f32.mrf.mxu0
  %v1447 = vadd.f32 %v1318, %v1446
  %v1448 = vpop.f32.mrf.mxu0
  %v1449 = vadd.f32 %v1320, %v1448
  %1450 = vmatmul.bf16.gmra.mxu0 %v492
  %v1451 = vpop.f32.mrf.mxu0
  %v1452 = vadd.f32 %v1323, %v1451
  %v1453 = vpop.f32.mrf.mxu0
  %v1454 = vadd.f32 %v1325, %v1453
  %1455 = vmatmul.bf16.gmra.mxu0 %v495
  %v1456 = vpop.f32.mrf.mxu0
  %v1457 = vadd.f32 %v1328, %v1456
  %v1458 = vpop.f32.mrf.mxu0
  %v1459 = vadd.f32 %v1330, %v1458
  %1460 = vmatmul.bf16.gmra.mxu0 %v498
  %v1461 = vpop.f32.mrf.mxu0
  %v1462 = vadd.f32 %v1333, %v1461
  %v1463 = vpop.f32.mrf.mxu0
  %v1464 = vadd.f32 %v1335, %v1463
  %1465 = vmatmul.bf16.gmra.mxu0 %v501
  %v1466 = vpop.f32.mrf.mxu0
  %v1467 = vadd.f32 %v1338, %v1466
  %v1468 = vpop.f32.mrf.mxu0
  %v1469 = vadd.f32 %v1340, %v1468
  %1470 = vmatmul.bf16.gmra.mxu0 %v504
  %v1471 = vpop.f32.mrf.mxu0
  %v1472 = vadd.f32 %v1343, %v1471
  %v1473 = vpop.f32.mrf.mxu0
  %v1474 = vadd.f32 %v1345, %v1473
  %1475 = vmatmul.bf16.gmra.mxu0 %v507
  %v1476 = vpop.f32.mrf.mxu0
  %v1477 = vadd.f32 %v1348, %v1476
  %v1478 = vpop.f32.mrf.mxu0
  %v1479 = vadd.f32 %v1350, %v1478
  %1480 = vmatmul.bf16.gmra.mxu0 %v510
  %v1481 = vpop.f32.mrf.mxu0
  %v1482 = vadd.f32 %v1353, %v1481
  %v1483 = vpop.f32.mrf.mxu0
  %v1484 = vadd.f32 %v1355, %v1483
  %1485 = vmatmul.bf16.gmra.mxu0 %v513
  %v1486 = vpop.f32.mrf.mxu0
  %v1487 = vadd.f32 %v1358, %v1486
  %v1488 = vpop.f32.mrf.mxu0
  %v1489 = vadd.f32 %v1360, %v1488
  %1490 = vmatmul.bf16.gmra.mxu0 %v516
  %v1491 = vpop.f32.mrf.mxu0
  %v1492 = vadd.f32 %v1363, %v1491
  %v1493 = vpop.f32.mrf.mxu0
  %v1494 = vadd.f32 %v1365, %v1493
  %1495 = vmatmul.bf16.gmra.mxu0 %v519
  %v1496 = vpop.f32.mrf.mxu0
  %v1497 = vadd.f32 %v1368, %v1496
  %v1498 = vpop.f32.mrf.mxu0
  %v1499 = vadd.f32 %v1370, %v1498
  %1500 = vmatmul.bf16.gmra.mxu0 %v522
  %v1501 = vpop.f32.mrf.mxu0
  %v1502 = vadd.f32 %v1373, %v1501
  %v1503 = vpop.f32.mrf.mxu0
  %v1504 = vadd.f32 %v1375, %v1503
  %1505 = vmatmul.bf16.gmra.mxu0 %v525
  %v1506 = vpop.f32.mrf.mxu0
  %v1507 = vadd.f32 %v1378, %v1506
  %v1508 = vpop.f32.mrf.mxu0
  %v1509 = vadd.f32 %v1380, %v1508
  %1510 = vdwg.mxu0
  %1511 = vmatpush.bf16.msra.mxu0 %v1228
  %1512 = vmatpush.bf16.msra.mxu0 %v1227
  %1513 = vmatpush.bf16.msra.mxu0 %v1226
  %1514 = vmatpush.bf16.msra.mxu0 %v1225
  %1515 = vmatpush.bf16.msra.mxu0 %v1224
  %1516 = vmatpush.bf16.msra.mxu0 %v1223
  %1517 = vmatpush.bf16.msra.mxu0 %v1222
  %1518 = vmatpush.bf16.msra.mxu0 %v1221
  %1519 = vmatmul.bf16.gmra.mxu0 %v457
  %v1520 = vpop.f32.mrf.mxu0
  %v1521 = vadd.f32 %v1392, %v1520
  %v1522 = vpop.f32.mrf.mxu0
  %v1523 = vadd.f32 %v1394, %v1522
  %1524 = vmatmul.bf16.gmra.mxu0 %v460
  %v1525 = vpop.f32.mrf.mxu0
  %v1526 = vadd.f32 %v1397, %v1525
  %v1527 = vpop.f32.mrf.mxu0
  %v1528 = vadd.f32 %v1399, %v1527
  %1529 = vmatmul.bf16.gmra.mxu0 %v463
  %v1530 = vpop.f32.mrf.mxu0
  %v1531 = vadd.f32 %v1402, %v1530
  %v1532 = vpop.f32.mrf.mxu0
  %v1533 = vadd.f32 %v1404, %v1532
  %1534 = vmatmul.bf16.gmra.mxu0 %v466
  %v1535 = vpop.f32.mrf.mxu0
  %v1536 = vadd.f32 %v1407, %v1535
  %v1537 = vpop.f32.mrf.mxu0
  %v1538 = vadd.f32 %v1409, %v1537
  %1539 = vmatmul.bf16.gmra.mxu0 %v469
  %v1540 = vpop.f32.mrf.mxu0
  %v1541 = vadd.f32 %v1412, %v1540
  %v1542 = vpop.f32.mrf.mxu0
  %v1543 = vadd.f32 %v1414, %v1542
  %1544 = vmatmul.bf16.gmra.mxu0 %v472
  %v1545 = vpop.f32.mrf.mxu0
  %v1546 = vadd.f32 %v1417, %v1545
  %v1547 = vpop.f32.mrf.mxu0
  %v1548 = vadd.f32 %v1419, %v1547
  %1549 = vmatmul.bf16.gmra.mxu0 %v475
  %v1550 = vpop.f32.mrf.mxu0
  %v1551 = vadd.f32 %v1422, %v1550
  %v1552 = vpop.f32.mrf.mxu0
  %v1553 = vadd.f32 %v1424, %v1552
  %1554 = vmatmul.bf16.gmra.mxu0 %v478
  %v1555 = vpop.f32.mrf.mxu0
  %v1556 = vadd.f32 %v1427, %v1555
  %v1557 = vpop.f32.mrf.mxu0
  %v1558 = vadd.f32 %v1429, %v1557
  %1559 = vmatmul.bf16.gmra.mxu0 %v481
  %v1560 = vpop.f32.mrf.mxu0
  %v1561 = vadd.f32 %v1432, %v1560
  %v1562 = vpop.f32.mrf.mxu0
  %v1563 = vadd.f32 %v1434, %v1562
  %1564 = vmatmul.bf16.gmra.mxu0 %v484
  %v1565 = vpop.f32.mrf.mxu0
  %v1566 = vadd.f32 %v1437, %v1565
  %v1567 = vpop.f32.mrf.mxu0
  %v1568 = vadd.f32 %v1439, %v1567
  %1569 = vmatmul.bf16.gmra.mxu0 %v487
  %v1570 = vpop.f32.mrf.mxu0
  %v1571 = vadd.f32 %v1442, %v1570
  %v1572 = vpop.f32.mrf.mxu0
  %v1573 = vadd.f32 %v1444, %v1572
  %1574 = vmatmul.bf16.gmra.mxu0 %v490
  %v1575 = vpop.f32.mrf.mxu0
  %v1576 = vadd.f32 %v1447, %v1575
  %v1577 = vpop.f32.mrf.mxu0
  %v1578 = vadd.f32 %v1449, %v1577
  %1579 = vmatmul.bf16.gmra.mxu0 %v493
  %v1580 = vpop.f32.mrf.mxu0
  %v1581 = vadd.f32 %v1452, %v1580
  %v1582 = vpop.f32.mrf.mxu0
  %v1583 = vadd.f32 %v1454, %v1582
  %1584 = vmatmul.bf16.gmra.mxu0 %v496
  %v1585 = vpop.f32.mrf.mxu0
  %v1586 = vadd.f32 %v1457, %v1585
  %v1587 = vpop.f32.mrf.mxu0
  %v1588 = vadd.f32 %v1459, %v1587
  %1589 = vmatmul.bf16.gmra.mxu0 %v499
  %v1590 = vpop.f32.mrf.mxu0
  %v1591 = vadd.f32 %v1462, %v1590
  %v1592 = vpop.f32.mrf.mxu0
  %v1593 = vadd.f32 %v1464, %v1592
  %1594 = vmatmul.bf16.gmra.mxu0 %v502
  %v1595 = vpop.f32.mrf.mxu0
  %v1596 = vadd.f32 %v1467, %v1595
  %v1597 = vpop.f32.mrf.mxu0
  %v1598 = vadd.f32 %v1469, %v1597
  %1599 = vmatmul.bf16.gmra.mxu0 %v505
  %v1600 = vpop.f32.mrf.mxu0
  %v1601 = vadd.f32 %v1472, %v1600
  %v1602 = vpop.f32.mrf.mxu0
  %v1603 = vadd.f32 %v1474, %v1602
  %1604 = vmatmul.bf16.gmra.mxu0 %v508
  %v1605 = vpop.f32.mrf.mxu0
  %v1606 = vadd.f32 %v1477, %v1605
  %v1607 = vpop.f32.mrf.mxu0
  %v1608 = vadd.f32 %v1479, %v1607
  %1609 = vmatmul.bf16.gmra.mxu0 %v511
  %v1610 = vpop.f32.mrf.mxu0
  %v1611 = vadd.f32 %v1482, %v1610
  %v1612 = vpop.f32.mrf.mxu0
  %v1613 = vadd.f32 %v1484, %v1612
  %1614 = vmatmul.bf16.gmra.mxu0 %v514
  %v1615 = vpop.f32.mrf.mxu0
  %v1616 = vadd.f32 %v1487, %v1615
  %v1617 = vpop.f32.mrf.mxu0
  %v1618 = vadd.f32 %v1489, %v1617
  %1619 = vmatmul.bf16.gmra.mxu0 %v517
  %v1620 = vpop.f32.mrf.mxu0
  %v1621 = vadd.f32 %v1492, %v1620
  %v1622 = vpop.f32.mrf.mxu0
  %v1623 = vadd.f32 %v1494, %v1622
  %1624 = vmatmul.bf16.gmra.mxu0 %v520
  %v1625 = vpop.f32.mrf.mxu0
  %v1626 = vadd.f32 %v1497, %v1625
  %v1627 = vpop.f32.mrf.mxu0
  %v1628 = vadd.f32 %v1499, %v1627
  %1629 = vmatmul.bf16.gmra.mxu0 %v523
  %v1630 = vpop.f32.mrf.mxu0
  %v1631 = vadd.f32 %v1502, %v1630
  %v1632 = vpop.f32.mrf.mxu0
  %v1633 = vadd.f32 %v1504, %v1632
  %1634 = vmatmul.bf16.gmra.mxu0 %v526
  %v1635 = vpop.f32.mrf.mxu0
  %v1636 = vadd.f32 %v1507, %v1635
  %v1637 = vpop.f32.mrf.mxu0
  %v1638 = vadd.f32 %v1509, %v1637
  %1639 = vdwg.mxu0
  %v1640 = vadd.f32 %v1061, %v1521
  %v1641 = vadd.f32 %v1062, %v1523
  %v1642 = vadd.f32 %v1063, %v1526
  %v1643 = vadd.f32 %v1064, %v1528
  %v1644 = vadd.f32 %v1065, %v1531
  %v1645 = vadd.f32 %v1066, %v1533
  %v1646 = vadd.f32 %v1067, %v1536
  %v1647 = vadd.f32 %v1068, %v1538
  %v1648 = vadd.f32 %v1069, %v1541
  %v1649 = vadd.f32 %v1070, %v1543
  %v1650 = vadd.f32 %v1071, %v1546
  %v1651 = vadd.f32 %v1072, %v1548
  %v1652 = vadd.f32 %v1073, %v1551
  %v1653 = vadd.f32 %v1074, %v1553
  %v1654 = vadd.f32 %v1075, %v1556
  %v1655 = vadd.f32 %v1076, %v1558
  %v1656 = vadd.f32 %v1077, %v1561
  %v1657 = vadd.f32 %v1078, %v1563
  %v1658 = vadd.f32 %v1079, %v1566
  %v1659 = vadd.f32 %v1080, %v1568
  %v1660 = vadd.f32 %v1081, %v1571
  %v1661 = vadd.f32 %v1082, %v1573
  %v1662 = vadd.f32 %v1083, %v1576
  %v1663 = vadd.f32 %v1084, %v1578
  %v1664 = vadd.f32 %v1085, %v1581
  %v1665 = vadd.f32 %v1086, %v1583
  %v1666 = vadd.f32 %v1087, %v1586
  %v1667 = vadd.f32 %v1088, %v1588
  %v1668 = vadd.f32 %v1089, %v1591
  %v1669 = vadd.f32 %v1090, %v1593
  %v1670 = vadd.f32 %v1091, %v1596
  %v1671 = vadd.f32 %v1092, %v1598
  %v1672 = vadd.f32 %v1093, %v1601
  %v1673 = vadd.f32 %v1094, %v1603
  %v1674 = vadd.f32 %v1095, %v1606
  %v1675 = vadd.f32 %v1096, %v1608
  %v1676 = vadd.f32 %v1097, %v1611
  %v1677 = vadd.f32 %v1098, %v1613
  %v1678 = vadd.f32 %v1099, %v1616
  %v1679 = vadd.f32 %v1100, %v1618
  %v1680 = vadd.f32 %v1101, %v1621
  %v1681 = vadd.f32 %v1102, %v1623
  %v1682 = vadd.f32 %v1103, %v1626
  %v1683 = vadd.f32 %v1104, %v1628
  %v1684 = vadd.f32 %v1105, %v1631
  %v1685 = vadd.f32 %v1106, %v1633
  %v1686 = vadd.f32 %v1107, %v1636
  %v1687 = vadd.f32 %v1108, %v1638
  %vm1688 = vcmask 261120
  %1689 = vst.msk [vmem:[#allocation2] sm:$0xff] %vm1688, %v1640
  %1690 = vst.msk [vmem:[#allocation2 + $0x8] sm:$0xff] %vm1688, %v1641
  %1691 = vst.msk [vmem:[#allocation2 + $0x10] sm:$0xff] %vm1688, %v1642
  %1692 = vst.msk [vmem:[#allocation2 + $0x18] sm:$0xff] %vm1688, %v1643
  %1693 = vst.msk [vmem:[#allocation2 + $0x20] sm:$0xff] %vm1688, %v1644
  %1694 = vst.msk [vmem:[#allocation2 + $0x28] sm:$0xff] %vm1688, %v1645
  %1695 = vst.msk [vmem:[#allocation2 + $0x30] sm:$0xff] %vm1688, %v1646
  %1696 = vst.msk [vmem:[#allocation2 + $0x38] sm:$0xff] %vm1688, %v1647
  %1697 = vst.msk [vmem:[#allocation2 + $0x40] sm:$0xff] %vm1688, %v1648
  %1698 = vst.msk [vmem:[#allocation2 + $0x48] sm:$0xff] %vm1688, %v1649
  %1699 = vst.msk [vmem:[#allocation2 + $0x50] sm:$0xff] %vm1688, %v1650
  %1700 = vst.msk [vmem:[#allocation2 + $0x58] sm:$0xff] %vm1688, %v1651
  %1701 = vst.msk [vmem:[#allocation2 + $0x60] sm:$0xff] %vm1688, %v1652
  %1702 = vst.msk [vmem:[#allocation2 + $0x68] sm:$0xff] %vm1688, %v1653
  %1703 = vst.msk [vmem:[#allocation2 + $0x70] sm:$0xff] %vm1688, %v1654
  %1704 = vst.msk [vmem:[#allocation2 + $0x78] sm:$0xff] %vm1688, %v1655
  %1705 = vst.msk [vmem:[#allocation2 + $0x80] sm:$0xff] %vm1688, %v1656
  %1706 = vst.msk [vmem:[#allocation2 + $0x88] sm:$0xff] %vm1688, %v1657
  %1707 = vst.msk [vmem:[#allocation2 + $0x90] sm:$0xff] %vm1688, %v1658
  %1708 = vst.msk [vmem:[#allocation2 + $0x98] sm:$0xff] %vm1688, %v1659
  %1709 = vst.msk [vmem:[#allocation2 + $0xa0] sm:$0xff] %vm1688, %v1660
  %1710 = vst.msk [vmem:[#allocation2 + $0xa8] sm:$0xff] %vm1688, %v1661
  %1711 = vst.msk [vmem:[#allocation2 + $0xb0] sm:$0xff] %vm1688, %v1662
  %1712 = vst.msk [vmem:[#allocation2 + $0xb8] sm:$0xff] %vm1688, %v1663
  %1713 = vst.msk [vmem:[#allocation2 + $0xc0] sm:$0xff] %vm1688, %v1664
  %1714 = vst.msk [vmem:[#allocation2 + $0xc8] sm:$0xff] %vm1688, %v1665
  %1715 = vst.msk [vmem:[#allocation2 + $0xd0] sm:$0xff] %vm1688, %v1666
  %1716 = vst.msk [vmem:[#allocation2 + $0xd8] sm:$0xff] %vm1688, %v1667
  %1717 = vst.msk [vmem:[#allocation2 + $0xe0] sm:$0xff] %vm1688, %v1668
  %1718 = vst.msk [vmem:[#allocation2 + $0xe8] sm:$0xff] %vm1688, %v1669
  %1719 = vst.msk [vmem:[#allocation2 + $0xf0] sm:$0xff] %vm1688, %v1670
  %1720 = vst.msk [vmem:[#allocation2 + $0xf8] sm:$0xff] %vm1688, %v1671
  %1721 = vst.msk [vmem:[#allocation2 + $0x100] sm:$0xff] %vm1688, %v1672
  %1722 = vst.msk [vmem:[#allocation2 + $0x108] sm:$0xff] %vm1688, %v1673
  %1723 = vst.msk [vmem:[#allocation2 + $0x110] sm:$0xff] %vm1688, %v1674
  %1724 = vst.msk [vmem:[#allocation2 + $0x118] sm:$0xff] %vm1688, %v1675
  %1725 = vst.msk [vmem:[#allocation2 + $0x120] sm:$0xff] %vm1688, %v1676
  %1726 = vst.msk [vmem:[#allocation2 + $0x128] sm:$0xff] %vm1688, %v1677
  %1727 = vst.msk [vmem:[#allocation2 + $0x130] sm:$0xff] %vm1688, %v1678
  %1728 = vst.msk [vmem:[#allocation2 + $0x138] sm:$0xff] %vm1688, %v1679
  %1729 = vst.msk [vmem:[#allocation2 + $0x140] sm:$0xff] %vm1688, %v1680
  %1730 = vst.msk [vmem:[#allocation2 + $0x148] sm:$0xff] %vm1688, %v1681
  %1731 = vst.msk [vmem:[#allocation2 + $0x150] sm:$0xff] %vm1688, %v1682
  %1732 = vst.msk [vmem:[#allocation2 + $0x158] sm:$0xff] %vm1688, %v1683
  %1733 = vst.msk [vmem:[#allocation2 + $0x160] sm:$0xff] %vm1688, %v1684
  %1734 = vst.msk [vmem:[#allocation2 + $0x168] sm:$0xff] %vm1688, %v1685
  %1735 = vst.msk [vmem:[#allocation2 + $0x170] sm:$0xff] %vm1688, %v1686
  %1736 = vst.msk [vmem:[#allocation2 + $0x178] sm:$0xff] %vm1688, %v1687
  // Predicated region
  $region38: #{tpu_custom_call.1} parent=0 // pred_check
    %p1737 = pneg %p29
  $region39: #{tpu_custom_call.1} parent=0 // pred_check_branch
    %1739 = sbr.rel (%p1737) target = $region41
  $region40: #{tpu_custom_call.1} parent=0 // pred_region
    %v1740 = vld [vmem:[#allocation3] sm:$0xff]
    %v1741 = vld [vmem:[#allocation3 + $0x8] sm:$0xff]
    %v1742 = vld [vmem:[#allocation3 + $0x10] sm:$0xff]
    %v1743 = vld [vmem:[#allocation3 + $0x18] sm:$0xff]
    %v1744 = vld [vmem:[#allocation3 + $0x20] sm:$0xff]
    %v1745 = vld [vmem:[#allocation3 + $0x28] sm:$0xff]
    %v1746 = vld [vmem:[#allocation3 + $0x30] sm:$0xff]
    %v1747 = vld [vmem:[#allocation3 + $0x38] sm:$0xff]
    %v1748 = vld [vmem:[#allocation3 + $0x40] sm:$0xff]
    %v1749 = vld [vmem:[#allocation3 + $0x48] sm:$0xff]
    %v1750 = vld [vmem:[#allocation3 + $0x50] sm:$0xff]
    %v1751 = vld [vmem:[#allocation3 + $0x58] sm:$0xff]
    %v1752 = vld [vmem:[#allocation3 + $0x60] sm:$0xff]
    %v1753 = vld [vmem:[#allocation3 + $0x68] sm:$0xff]
    %v1754 = vld [vmem:[#allocation3 + $0x70] sm:$0xff]
    %v1755 = vld [vmem:[#allocation3 + $0x78] sm:$0xff]
    %v1756 = vld [vmem:[#allocation3 + $0x80] sm:$0xff]
    %v1757 = vld [vmem:[#allocation3 + $0x88] sm:$0xff]
    %v1758 = vld [vmem:[#allocation3 + $0x90] sm:$0xff]
    %v1759 = vld [vmem:[#allocation3 + $0x98] sm:$0xff]
    %v1760 = vld [vmem:[#allocation3 + $0xa0] sm:$0xff]
    %v1761 = vld [vmem:[#allocation3 + $0xa8] sm:$0xff]
    %v1762 = vld [vmem:[#allocation3 + $0xb0] sm:$0xff]
    %v1763 = vld [vmem:[#allocation3 + $0xb8] sm:$0xff]
    %v1764 = vld [vmem:[#allocation3 + $0xc0] sm:$0xff]
    %v1765 = vld [vmem:[#allocation3 + $0xc8] sm:$0xff]
    %v1766 = vld [vmem:[#allocation3 + $0xd0] sm:$0xff]
    %v1767 = vld [vmem:[#allocation3 + $0xd8] sm:$0xff]
    %v1768 = vld [vmem:[#allocation3 + $0xe0] sm:$0xff]
    %v1769 = vld [vmem:[#allocation3 + $0xe8] sm:$0xff]
    %v1770 = vld [vmem:[#allocation3 + $0xf0] sm:$0xff]
    %v1771 = vld [vmem:[#allocation3 + $0xf8] sm:$0xff]
    %v1772 = vld [vmem:[#allocation3 + $0x100] sm:$0xff]
    %v1773 = vld [vmem:[#allocation3 + $0x108] sm:$0xff]
    %v1774 = vld [vmem:[#allocation3 + $0x110] sm:$0xff]
    %v1775 = vld [vmem:[#allocation3 + $0x118] sm:$0xff]
    %v1776 = vld [vmem:[#allocation3 + $0x120] sm:$0xff]
    %v1777 = vld [vmem:[#allocation3 + $0x128] sm:$0xff]
    %v1778 = vld [vmem:[#allocation3 + $0x130] sm:$0xff]
    %v1779 = vld [vmem:[#allocation3 + $0x138] sm:$0xff]
    %v1780 = vld [vmem:[#allocation3 + $0x140] sm:$0xff]
    %v1781 = vld [vmem:[#allocation3 + $0x148] sm:$0xff]
    %v1782 = vld [vmem:[#allocation3 + $0x150] sm:$0xff]
    %v1783 = vld [vmem:[#allocation3 + $0x158] sm:$0xff]
    %v1784 = vld [vmem:[#allocation3 + $0x160] sm:$0xff]
    %v1785 = vld [vmem:[#allocation3 + $0x168] sm:$0xff]
    %v1786 = vld [vmem:[#allocation3 + $0x170] sm:$0xff]
    %v1787 = vld [vmem:[#allocation3 + $0x178] sm:$0xff]
    %vm1788 = vcmp.gt.f32.partialorder %v1740, 0.0
    %vm1789 = vcmp.gt.f32.partialorder %v1741, 0.0
    %vm1790 = vcmp.gt.f32.partialorder %v1742, 0.0
    %vm1791 = vcmp.gt.f32.partialorder %v1743, 0.0
    %vm1792 = vcmp.gt.f32.partialorder %v1744, 0.0
    %vm1793 = vcmp.gt.f32.partialorder %v1745, 0.0
    %vm1794 = vcmp.gt.f32.partialorder %v1746, 0.0
    %vm1795 = vcmp.gt.f32.partialorder %v1747, 0.0
    %vm1796 = vcmp.gt.f32.partialorder %v1748, 0.0
    %vm1797 = vcmp.gt.f32.partialorder %v1749, 0.0
    %vm1798 = vcmp.gt.f32.partialorder %v1750, 0.0
    %vm1799 = vcmp.gt.f32.partialorder %v1751, 0.0
    %vm1800 = vcmp.gt.f32.partialorder %v1752, 0.0
    %vm1801 = vcmp.gt.f32.partialorder %v1753, 0.0
    %vm1802 = vcmp.gt.f32.partialorder %v1754, 0.0
    %vm1803 = vcmp.gt.f32.partialorder %v1755, 0.0
    %vm1804 = vcmp.gt.f32.partialorder %v1756, 0.0
    %vm1805 = vcmp.gt.f32.partialorder %v1757, 0.0
    %vm1806 = vcmp.gt.f32.partialorder %v1758, 0.0
    %vm1807 = vcmp.gt.f32.partialorder %v1759, 0.0
    %vm1808 = vcmp.gt.f32.partialorder %v1760, 0.0
    %vm1809 = vcmp.gt.f32.partialorder %v1761, 0.0
    %vm1810 = vcmp.gt.f32.partialorder %v1762, 0.0
    %vm1811 = vcmp.gt.f32.partialorder %v1763, 0.0
    %vm1812 = vcmp.gt.f32.partialorder %v1764, 0.0
    %vm1813 = vcmp.gt.f32.partialorder %v1765, 0.0
    %vm1814 = vcmp.gt.f32.partialorder %v1766, 0.0
    %vm1815 = vcmp.gt.f32.partialorder %v1767, 0.0
    %vm1816 = vcmp.gt.f32.partialorder %v1768, 0.0
    %vm1817 = vcmp.gt.f32.partialorder %v1769, 0.0
    %vm1818 = vcmp.gt.f32.partialorder %v1770, 0.0
    %vm1819 = vcmp.gt.f32.partialorder %v1771, 0.0
    %vm1820 = vcmp.gt.f32.partialorder %v1772, 0.0
    %vm1821 = vcmp.gt.f32.partialorder %v1773, 0.0
    %vm1822 = vcmp.gt.f32.partialorder %v1774, 0.0
    %vm1823 = vcmp.gt.f32.partialorder %v1775, 0.0
    %vm1824 = vcmp.gt.f32.partialorder %v1776, 0.0
    %vm1825 = vcmp.gt.f32.partialorder %v1777, 0.0
    %vm1826 = vcmp.gt.f32.partialorder %v1778, 0.0
    %vm1827 = vcmp.gt.f32.partialorder %v1779, 0.0
    %vm1828 = vcmp.gt.f32.partialorder %v1780, 0.0
    %vm1829 = vcmp.gt.f32.partialorder %v1781, 0.0
    %vm1830 = vcmp.gt.f32.partialorder %v1782, 0.0
    %vm1831 = vcmp.gt.f32.partialorder %v1783, 0.0
    %vm1832 = vcmp.gt.f32.partialorder %v1784, 0.0
    %vm1833 = vcmp.gt.f32.partialorder %v1785, 0.0
    %vm1834 = vcmp.gt.f32.partialorder %v1786, 0.0
    %vm1835 = vcmp.gt.f32.partialorder %v1787, 0.0
    %v1836 = vrcp.pop %v1740
    %v1837 = vmul.f32 %v1740, %v1836
    %v1838 = vsub.f32 1.0, %v1837
    %v1839 = vmul.f32 %v1836, %v1838
    %v1840 = vadd.f32 %v1836, %v1839
    %vm1841 = vweird.f32 %v1740
    %vm1842 = vweird.f32 %v1836
    %vm1843 = vmor %vm1841, %vm1842
    %v1844 = vsel %vm1843, %v1836, %v1840
    %v1845 = vand.u32 2147483647, %v1740
    %vm1846 = vcmp.eq.f32.partialorder %v1845, 8.507059e+37
    %v1847 = vand.u32 %v1740, 2147483648
    %v1848 = vor.u32 1.1754944e-38, %v1847
    %v1849 = vsel %vm1846, %v1848, %v1844
    %v1850 = vmul.f32 1.0, %v1849
    %v1851 = vrcp.pop %v1741
    %v1852 = vmul.f32 %v1741, %v1851
    %v1853 = vsub.f32 1.0, %v1852
    %v1854 = vmul.f32 %v1851, %v1853
    %v1855 = vadd.f32 %v1851, %v1854
    %vm1856 = vweird.f32 %v1741
    %vm1857 = vweird.f32 %v1851
    %vm1858 = vmor %vm1856, %vm1857
    %v1859 = vsel %vm1858, %v1851, %v1855
    %v1860 = vand.u32 2147483647, %v1741
    %vm1861 = vcmp.eq.f32.partialorder %v1860, 8.507059e+37
    %v1862 = vand.u32 %v1741, 2147483648
    %v1863 = vor.u32 1.1754944e-38, %v1862
    %v1864 = vsel %vm1861, %v1863, %v1859
    %v1865 = vmul.f32 1.0, %v1864
    %v1866 = vrcp.pop %v1742
    %v1867 = vmul.f32 %v1742, %v1866
    %v1868 = vsub.f32 1.0, %v1867
    %v1869 = vmul.f32 %v1866, %v1868
    %v1870 = vadd.f32 %v1866, %v1869
    %vm1871 = vweird.f32 %v1742
    %vm1872 = vweird.f32 %v1866
    %vm1873 = vmor %vm1871, %vm1872
    %v1874 = vsel %vm1873, %v1866, %v1870
    %v1875 = vand.u32 2147483647, %v1742
    %vm1876 = vcmp.eq.f32.partialorder %v1875, 8.507059e+37
    %v1877 = vand.u32 %v1742, 2147483648
    %v1878 = vor.u32 1.1754944e-38, %v1877
    %v1879 = vsel %vm1876, %v1878, %v1874
    %v1880 = vmul.f32 1.0, %v1879
    %v1881 = vrcp.pop %v1743
    %v1882 = vmul.f32 %v1743, %v1881
    %v1883 = vsub.f32 1.0, %v1882
    %v1884 = vmul.f32 %v1881, %v1883
    %v1885 = vadd.f32 %v1881, %v1884
    %vm1886 = vweird.f32 %v1743
    %vm1887 = vweird.f32 %v1881
    %vm1888 = vmor %vm1886, %vm1887
    %v1889 = vsel %vm1888, %v1881, %v1885
    %v1890 = vand.u32 2147483647, %v1743
    %vm1891 = vcmp.eq.f32.partialorder %v1890, 8.507059e+37
    %v1892 = vand.u32 %v1743, 2147483648
    %v1893 = vor.u32 1.1754944e-38, %v1892
    %v1894 = vsel %vm1891, %v1893, %v1889
    %v1895 = vmul.f32 1.0, %v1894
    %v1896 = vrcp.pop %v1744
    %v1897 = vmul.f32 %v1744, %v1896
    %v1898 = vsub.f32 1.0, %v1897
    %v1899 = vmul.f32 %v1896, %v1898
    %v1900 = vadd.f32 %v1896, %v1899
    %vm1901 = vweird.f32 %v1744
    %vm1902 = vweird.f32 %v1896
    %vm1903 = vmor %vm1901, %vm1902
    %v1904 = vsel %vm1903, %v1896, %v1900
    %v1905 = vand.u32 2147483647, %v1744
    %vm1906 = vcmp.eq.f32.partialorder %v1905, 8.507059e+37
    %v1907 = vand.u32 %v1744, 2147483648
    %v1908 = vor.u32 1.1754944e-38, %v1907
    %v1909 = vsel %vm1906, %v1908, %v1904
    %v1910 = vmul.f32 1.0, %v1909
    %v1911 = vrcp.pop %v1745
    %v1912 = vmul.f32 %v1745, %v1911
    %v1913 = vsub.f32 1.0, %v1912
    %v1914 = vmul.f32 %v1911, %v1913
    %v1915 = vadd.f32 %v1911, %v1914
    %vm1916 = vweird.f32 %v1745
    %vm1917 = vweird.f32 %v1911
    %vm1918 = vmor %vm1916, %vm1917
    %v1919 = vsel %vm1918, %v1911, %v1915
    %v1920 = vand.u32 2147483647, %v1745
    %vm1921 = vcmp.eq.f32.partialorder %v1920, 8.507059e+37
    %v1922 = vand.u32 %v1745, 2147483648
    %v1923 = vor.u32 1.1754944e-38, %v1922
    %v1924 = vsel %vm1921, %v1923, %v1919
    %v1925 = vmul.f32 1.0, %v1924
    %v1926 = vrcp.pop %v1746
    %v1927 = vmul.f32 %v1746, %v1926
    %v1928 = vsub.f32 1.0, %v1927
    %v1929 = vmul.f32 %v1926, %v1928
    %v1930 = vadd.f32 %v1926, %v1929
    %vm1931 = vweird.f32 %v1746
    %vm1932 = vweird.f32 %v1926
    %vm1933 = vmor %vm1931, %vm1932
    %v1934 = vsel %vm1933, %v1926, %v1930
    %v1935 = vand.u32 2147483647, %v1746
    %vm1936 = vcmp.eq.f32.partialorder %v1935, 8.507059e+37
    %v1937 = vand.u32 %v1746, 2147483648
    %v1938 = vor.u32 1.1754944e-38, %v1937
    %v1939 = vsel %vm1936, %v1938, %v1934
    %v1940 = vmul.f32 1.0, %v1939
    %v1941 = vrcp.pop %v1747
    %v1942 = vmul.f32 %v1747, %v1941
    %v1943 = vsub.f32 1.0, %v1942
    %v1944 = vmul.f32 %v1941, %v1943
    %v1945 = vadd.f32 %v1941, %v1944
    %vm1946 = vweird.f32 %v1747
    %vm1947 = vweird.f32 %v1941
    %vm1948 = vmor %vm1946, %vm1947
    %v1949 = vsel %vm1948, %v1941, %v1945
    %v1950 = vand.u32 2147483647, %v1747
    %vm1951 = vcmp.eq.f32.partialorder %v1950, 8.507059e+37
    %v1952 = vand.u32 %v1747, 2147483648
    %v1953 = vor.u32 1.1754944e-38, %v1952
    %v1954 = vsel %vm1951, %v1953, %v1949
    %v1955 = vmul.f32 1.0, %v1954
    %v1956 = vrcp.pop %v1748
    %v1957 = vmul.f32 %v1748, %v1956
    %v1958 = vsub.f32 1.0, %v1957
    %v1959 = vmul.f32 %v1956, %v1958
    %v1960 = vadd.f32 %v1956, %v1959
    %vm1961 = vweird.f32 %v1748
    %vm1962 = vweird.f32 %v1956
    %vm1963 = vmor %vm1961, %vm1962
    %v1964 = vsel %vm1963, %v1956, %v1960
    %v1965 = vand.u32 2147483647, %v1748
    %vm1966 = vcmp.eq.f32.partialorder %v1965, 8.507059e+37
    %v1967 = vand.u32 %v1748, 2147483648
    %v1968 = vor.u32 1.1754944e-38, %v1967
    %v1969 = vsel %vm1966, %v1968, %v1964
    %v1970 = vmul.f32 1.0, %v1969
    %v1971 = vrcp.pop %v1749
    %v1972 = vmul.f32 %v1749, %v1971
    %v1973 = vsub.f32 1.0, %v1972
    %v1974 = vmul.f32 %v1971, %v1973
    %v1975 = vadd.f32 %v1971, %v1974
    %vm1976 = vweird.f32 %v1749
    %vm1977 = vweird.f32 %v1971
    %vm1978 = vmor %vm1976, %vm1977
    %v1979 = vsel %vm1978, %v1971, %v1975
    %v1980 = vand.u32 2147483647, %v1749
    %vm1981 = vcmp.eq.f32.partialorder %v1980, 8.507059e+37
    %v1982 = vand.u32 %v1749, 2147483648
    %v1983 = vor.u32 1.1754944e-38, %v1982
    %v1984 = vsel %vm1981, %v1983, %v1979
    %v1985 = vmul.f32 1.0, %v1984
    %v1986 = vrcp.pop %v1750
    %v1987 = vmul.f32 %v1750, %v1986
    %v1988 = vsub.f32 1.0, %v1987
    %v1989 = vmul.f32 %v1986, %v1988
    %v1990 = vadd.f32 %v1986, %v1989
    %vm1991 = vweird.f32 %v1750
    %vm1992 = vweird.f32 %v1986
    %vm1993 = vmor %vm1991, %vm1992
    %v1994 = vsel %vm1993, %v1986, %v1990
    %v1995 = vand.u32 2147483647, %v1750
    %vm1996 = vcmp.eq.f32.partialorder %v1995, 8.507059e+37
    %v1997 = vand.u32 %v1750, 2147483648
    %v1998 = vor.u32 1.1754944e-38, %v1997
    %v1999 = vsel %vm1996, %v1998, %v1994
    %v2000 = vmul.f32 1.0, %v1999
    %v2001 = vrcp.pop %v1751
    %v2002 = vmul.f32 %v1751, %v2001
    %v2003 = vsub.f32 1.0, %v2002
    %v2004 = vmul.f32 %v2001, %v2003
    %v2005 = vadd.f32 %v2001, %v2004
    %vm2006 = vweird.f32 %v1751
    %vm2007 = vweird.f32 %v2001
    %vm2008 = vmor %vm2006, %vm2007
    %v2009 = vsel %vm2008, %v2001, %v2005
    %v2010 = vand.u32 2147483647, %v1751
    %vm2011 = vcmp.eq.f32.partialorder %v2010, 8.507059e+37
    %v2012 = vand.u32 %v1751, 2147483648
    %v2013 = vor.u32 1.1754944e-38, %v2012
    %v2014 = vsel %vm2011, %v2013, %v2009
    %v2015 = vmul.f32 1.0, %v2014
    %v2016 = vrcp.pop %v1752
    %v2017 = vmul.f32 %v1752, %v2016
    %v2018 = vsub.f32 1.0, %v2017
    %v2019 = vmul.f32 %v2016, %v2018
    %v2020 = vadd.f32 %v2016, %v2019
    %vm2021 = vweird.f32 %v1752
    %vm2022 = vweird.f32 %v2016
    %vm2023 = vmor %vm2021, %vm2022
    %v2024 = vsel %vm2023, %v2016, %v2020
    %v2025 = vand.u32 2147483647, %v1752
    %vm2026 = vcmp.eq.f32.partialorder %v2025, 8.507059e+37
    %v2027 = vand.u32 %v1752, 2147483648
    %v2028 = vor.u32 1.1754944e-38, %v2027
    %v2029 = vsel %vm2026, %v2028, %v2024
    %v2030 = vmul.f32 1.0, %v2029
    %v2031 = vrcp.pop %v1753
    %v2032 = vmul.f32 %v1753, %v2031
    %v2033 = vsub.f32 1.0, %v2032
    %v2034 = vmul.f32 %v2031, %v2033
    %v2035 = vadd.f32 %v2031, %v2034
    %vm2036 = vweird.f32 %v1753
    %vm2037 = vweird.f32 %v2031
    %vm2038 = vmor %vm2036, %vm2037
    %v2039 = vsel %vm2038, %v2031, %v2035
    %v2040 = vand.u32 2147483647, %v1753
    %vm2041 = vcmp.eq.f32.partialorder %v2040, 8.507059e+37
    %v2042 = vand.u32 %v1753, 2147483648
    %v2043 = vor.u32 1.1754944e-38, %v2042
    %v2044 = vsel %vm2041, %v2043, %v2039
    %v2045 = vmul.f32 1.0, %v2044
    %v2046 = vrcp.pop %v1754
    %v2047 = vmul.f32 %v1754, %v2046
    %v2048 = vsub.f32 1.0, %v2047
    %v2049 = vmul.f32 %v2046, %v2048
    %v2050 = vadd.f32 %v2046, %v2049
    %vm2051 = vweird.f32 %v1754
    %vm2052 = vweird.f32 %v2046
    %vm2053 = vmor %vm2051, %vm2052
    %v2054 = vsel %vm2053, %v2046, %v2050
    %v2055 = vand.u32 2147483647, %v1754
    %vm2056 = vcmp.eq.f32.partialorder %v2055, 8.507059e+37
    %v2057 = vand.u32 %v1754, 2147483648
    %v2058 = vor.u32 1.1754944e-38, %v2057
    %v2059 = vsel %vm2056, %v2058, %v2054
    %v2060 = vmul.f32 1.0, %v2059
    %v2061 = vrcp.pop %v1755
    %v2062 = vmul.f32 %v1755, %v2061
    %v2063 = vsub.f32 1.0, %v2062
    %v2064 = vmul.f32 %v2061, %v2063
    %v2065 = vadd.f32 %v2061, %v2064
    %vm2066 = vweird.f32 %v1755
    %vm2067 = vweird.f32 %v2061
    %vm2068 = vmor %vm2066, %vm2067
    %v2069 = vsel %vm2068, %v2061, %v2065
    %v2070 = vand.u32 2147483647, %v1755
    %vm2071 = vcmp.eq.f32.partialorder %v2070, 8.507059e+37
    %v2072 = vand.u32 %v1755, 2147483648
    %v2073 = vor.u32 1.1754944e-38, %v2072
    %v2074 = vsel %vm2071, %v2073, %v2069
    %v2075 = vmul.f32 1.0, %v2074
    %v2076 = vrcp.pop %v1756
    %v2077 = vmul.f32 %v1756, %v2076
    %v2078 = vsub.f32 1.0, %v2077
    %v2079 = vmul.f32 %v2076, %v2078
    %v2080 = vadd.f32 %v2076, %v2079
    %vm2081 = vweird.f32 %v1756
    %vm2082 = vweird.f32 %v2076
    %vm2083 = vmor %vm2081, %vm2082
    %v2084 = vsel %vm2083, %v2076, %v2080
    %v2085 = vand.u32 2147483647, %v1756
    %vm2086 = vcmp.eq.f32.partialorder %v2085, 8.507059e+37
    %v2087 = vand.u32 %v1756, 2147483648
    %v2088 = vor.u32 1.1754944e-38, %v2087
    %v2089 = vsel %vm2086, %v2088, %v2084
    %v2090 = vmul.f32 1.0, %v2089
    %v2091 = vrcp.pop %v1757
    %v2092 = vmul.f32 %v1757, %v2091
    %v2093 = vsub.f32 1.0, %v2092
    %v2094 = vmul.f32 %v2091, %v2093
    %v2095 = vadd.f32 %v2091, %v2094
    %vm2096 = vweird.f32 %v1757
    %vm2097 = vweird.f32 %v2091
    %vm2098 = vmor %vm2096, %vm2097
    %v2099 = vsel %vm2098, %v2091, %v2095
    %v2100 = vand.u32 2147483647, %v1757
    %vm2101 = vcmp.eq.f32.partialorder %v2100, 8.507059e+37
    %v2102 = vand.u32 %v1757, 2147483648
    %v2103 = vor.u32 1.1754944e-38, %v2102
    %v2104 = vsel %vm2101, %v2103, %v2099
    %v2105 = vmul.f32 1.0, %v2104
    %v2106 = vrcp.pop %v1758
    %v2107 = vmul.f32 %v1758, %v2106
    %v2108 = vsub.f32 1.0, %v2107
    %v2109 = vmul.f32 %v2106, %v2108
    %v2110 = vadd.f32 %v2106, %v2109
    %vm2111 = vweird.f32 %v1758
    %vm2112 = vweird.f32 %v2106
    %vm2113 = vmor %vm2111, %vm2112
    %v2114 = vsel %vm2113, %v2106, %v2110
    %v2115 = vand.u32 2147483647, %v1758
    %vm2116 = vcmp.eq.f32.partialorder %v2115, 8.507059e+37
    %v2117 = vand.u32 %v1758, 2147483648
    %v2118 = vor.u32 1.1754944e-38, %v2117
    %v2119 = vsel %vm2116, %v2118, %v2114
    %v2120 = vmul.f32 1.0, %v2119
    %v2121 = vrcp.pop %v1759
    %v2122 = vmul.f32 %v1759, %v2121
    %v2123 = vsub.f32 1.0, %v2122
    %v2124 = vmul.f32 %v2121, %v2123
    %v2125 = vadd.f32 %v2121, %v2124
    %vm2126 = vweird.f32 %v1759
    %vm2127 = vweird.f32 %v2121
    %vm2128 = vmor %vm2126, %vm2127
    %v2129 = vsel %vm2128, %v2121, %v2125
    %v2130 = vand.u32 2147483647, %v1759
    %vm2131 = vcmp.eq.f32.partialorder %v2130, 8.507059e+37
    %v2132 = vand.u32 %v1759, 2147483648
    %v2133 = vor.u32 1.1754944e-38, %v2132
    %v2134 = vsel %vm2131, %v2133, %v2129
    %v2135 = vmul.f32 1.0, %v2134
    %v2136 = vrcp.pop %v1760
    %v2137 = vmul.f32 %v1760, %v2136
    %v2138 = vsub.f32 1.0, %v2137
    %v2139 = vmul.f32 %v2136, %v2138
    %v2140 = vadd.f32 %v2136, %v2139
    %vm2141 = vweird.f32 %v1760
    %vm2142 = vweird.f32 %v2136
    %vm2143 = vmor %vm2141, %vm2142
    %v2144 = vsel %vm2143, %v2136, %v2140
    %v2145 = vand.u32 2147483647, %v1760
    %vm2146 = vcmp.eq.f32.partialorder %v2145, 8.507059e+37
    %v2147 = vand.u32 %v1760, 2147483648
    %v2148 = vor.u32 1.1754944e-38, %v2147
    %v2149 = vsel %vm2146, %v2148, %v2144
    %v2150 = vmul.f32 1.0, %v2149
    %v2151 = vrcp.pop %v1761
    %v2152 = vmul.f32 %v1761, %v2151
    %v2153 = vsub.f32 1.0, %v2152
    %v2154 = vmul.f32 %v2151, %v2153
    %v2155 = vadd.f32 %v2151, %v2154
    %vm2156 = vweird.f32 %v1761
    %vm2157 = vweird.f32 %v2151
    %vm2158 = vmor %vm2156, %vm2157
    %v2159 = vsel %vm2158, %v2151, %v2155
    %v2160 = vand.u32 2147483647, %v1761
    %vm2161 = vcmp.eq.f32.partialorder %v2160, 8.507059e+37
    %v2162 = vand.u32 %v1761, 2147483648
    %v2163 = vor.u32 1.1754944e-38, %v2162
    %v2164 = vsel %vm2161, %v2163, %v2159
    %v2165 = vmul.f32 1.0, %v2164
    %v2166 = vrcp.pop %v1762
    %v2167 = vmul.f32 %v1762, %v2166
    %v2168 = vsub.f32 1.0, %v2167
    %v2169 = vmul.f32 %v2166, %v2168
    %v2170 = vadd.f32 %v2166, %v2169
    %vm2171 = vweird.f32 %v1762
    %vm2172 = vweird.f32 %v2166
    %vm2173 = vmor %vm2171, %vm2172
    %v2174 = vsel %vm2173, %v2166, %v2170
    %v2175 = vand.u32 2147483647, %v1762
    %vm2176 = vcmp.eq.f32.partialorder %v2175, 8.507059e+37
    %v2177 = vand.u32 %v1762, 2147483648
    %v2178 = vor.u32 1.1754944e-38, %v2177
    %v2179 = vsel %vm2176, %v2178, %v2174
    %v2180 = vmul.f32 1.0, %v2179
    %v2181 = vrcp.pop %v1763
    %v2182 = vmul.f32 %v1763, %v2181
    %v2183 = vsub.f32 1.0, %v2182
    %v2184 = vmul.f32 %v2181, %v2183
    %v2185 = vadd.f32 %v2181, %v2184
    %vm2186 = vweird.f32 %v1763
    %vm2187 = vweird.f32 %v2181
    %vm2188 = vmor %vm2186, %vm2187
    %v2189 = vsel %vm2188, %v2181, %v2185
    %v2190 = vand.u32 2147483647, %v1763
    %vm2191 = vcmp.eq.f32.partialorder %v2190, 8.507059e+37
    %v2192 = vand.u32 %v1763, 2147483648
    %v2193 = vor.u32 1.1754944e-38, %v2192
    %v2194 = vsel %vm2191, %v2193, %v2189
    %v2195 = vmul.f32 1.0, %v2194
    %v2196 = vrcp.pop %v1764
    %v2197 = vmul.f32 %v1764, %v2196
    %v2198 = vsub.f32 1.0, %v2197
    %v2199 = vmul.f32 %v2196, %v2198
    %v2200 = vadd.f32 %v2196, %v2199
    %vm2201 = vweird.f32 %v1764
    %vm2202 = vweird.f32 %v2196
    %vm2203 = vmor %vm2201, %vm2202
    %v2204 = vsel %vm2203, %v2196, %v2200
    %v2205 = vand.u32 2147483647, %v1764
    %vm2206 = vcmp.eq.f32.partialorder %v2205, 8.507059e+37
    %v2207 = vand.u32 %v1764, 2147483648
    %v2208 = vor.u32 1.1754944e-38, %v2207
    %v2209 = vsel %vm2206, %v2208, %v2204
    %v2210 = vmul.f32 1.0, %v2209
    %v2211 = vrcp.pop %v1765
    %v2212 = vmul.f32 %v1765, %v2211
    %v2213 = vsub.f32 1.0, %v2212
    %v2214 = vmul.f32 %v2211, %v2213
    %v2215 = vadd.f32 %v2211, %v2214
    %vm2216 = vweird.f32 %v1765
    %vm2217 = vweird.f32 %v2211
    %vm2218 = vmor %vm2216, %vm2217
    %v2219 = vsel %vm2218, %v2211, %v2215
    %v2220 = vand.u32 2147483647, %v1765
    %vm2221 = vcmp.eq.f32.partialorder %v2220, 8.507059e+37
    %v2222 = vand.u32 %v1765, 2147483648
    %v2223 = vor.u32 1.1754944e-38, %v2222
    %v2224 = vsel %vm2221, %v2223, %v2219
    %v2225 = vmul.f32 1.0, %v2224
    %v2226 = vrcp.pop %v1766
    %v2227 = vmul.f32 %v1766, %v2226
    %v2228 = vsub.f32 1.0, %v2227
    %v2229 = vmul.f32 %v2226, %v2228
    %v2230 = vadd.f32 %v2226, %v2229
    %vm2231 = vweird.f32 %v1766
    %vm2232 = vweird.f32 %v2226
    %vm2233 = vmor %vm2231, %vm2232
    %v2234 = vsel %vm2233, %v2226, %v2230
    %v2235 = vand.u32 2147483647, %v1766
    %vm2236 = vcmp.eq.f32.partialorder %v2235, 8.507059e+37
    %v2237 = vand.u32 %v1766, 2147483648
    %v2238 = vor.u32 1.1754944e-38, %v2237
    %v2239 = vsel %vm2236, %v2238, %v2234
    %v2240 = vmul.f32 1.0, %v2239
    %v2241 = vrcp.pop %v1767
    %v2242 = vmul.f32 %v1767, %v2241
    %v2243 = vsub.f32 1.0, %v2242
    %v2244 = vmul.f32 %v2241, %v2243
    %v2245 = vadd.f32 %v2241, %v2244
    %vm2246 = vweird.f32 %v1767
    %vm2247 = vweird.f32 %v2241
    %vm2248 = vmor %vm2246, %vm2247
    %v2249 = vsel %vm2248, %v2241, %v2245
    %v2250 = vand.u32 2147483647, %v1767
    %vm2251 = vcmp.eq.f32.partialorder %v2250, 8.507059e+37
    %v2252 = vand.u32 %v1767, 2147483648
    %v2253 = vor.u32 1.1754944e-38, %v2252
    %v2254 = vsel %vm2251, %v2253, %v2249
    %v2255 = vmul.f32 1.0, %v2254
    %v2256 = vrcp.pop %v1768
    %v2257 = vmul.f32 %v1768, %v2256
    %v2258 = vsub.f32 1.0, %v2257
    %v2259 = vmul.f32 %v2256, %v2258
    %v2260 = vadd.f32 %v2256, %v2259
    %vm2261 = vweird.f32 %v1768
    %vm2262 = vweird.f32 %v2256
    %vm2263 = vmor %vm2261, %vm2262
    %v2264 = vsel %vm2263, %v2256, %v2260
    %v2265 = vand.u32 2147483647, %v1768
    %vm2266 = vcmp.eq.f32.partialorder %v2265, 8.507059e+37
    %v2267 = vand.u32 %v1768, 2147483648
    %v2268 = vor.u32 1.1754944e-38, %v2267
    %v2269 = vsel %vm2266, %v2268, %v2264
    %v2270 = vmul.f32 1.0, %v2269
    %v2271 = vrcp.pop %v1769
    %v2272 = vmul.f32 %v1769, %v2271
    %v2273 = vsub.f32 1.0, %v2272
    %v2274 = vmul.f32 %v2271, %v2273
    %v2275 = vadd.f32 %v2271, %v2274
    %vm2276 = vweird.f32 %v1769
    %vm2277 = vweird.f32 %v2271
    %vm2278 = vmor %vm2276, %vm2277
    %v2279 = vsel %vm2278, %v2271, %v2275
    %v2280 = vand.u32 2147483647, %v1769
    %vm2281 = vcmp.eq.f32.partialorder %v2280, 8.507059e+37
    %v2282 = vand.u32 %v1769, 2147483648
    %v2283 = vor.u32 1.1754944e-38, %v2282
    %v2284 = vsel %vm2281, %v2283, %v2279
    %v2285 = vmul.f32 1.0, %v2284
    %v2286 = vrcp.pop %v1770
    %v2287 = vmul.f32 %v1770, %v2286
    %v2288 = vsub.f32 1.0, %v2287
    %v2289 = vmul.f32 %v2286, %v2288
    %v2290 = vadd.f32 %v2286, %v2289
    %vm2291 = vweird.f32 %v1770
    %vm2292 = vweird.f32 %v2286
    %vm2293 = vmor %vm2291, %vm2292
    %v2294 = vsel %vm2293, %v2286, %v2290
    %v2295 = vand.u32 2147483647, %v1770
    %vm2296 = vcmp.eq.f32.partialorder %v2295, 8.507059e+37
    %v2297 = vand.u32 %v1770, 2147483648
    %v2298 = vor.u32 1.1754944e-38, %v2297
    %v2299 = vsel %vm2296, %v2298, %v2294
    %v2300 = vmul.f32 1.0, %v2299
    %v2301 = vrcp.pop %v1771
    %v2302 = vmul.f32 %v1771, %v2301
    %v2303 = vsub.f32 1.0, %v2302
    %v2304 = vmul.f32 %v2301, %v2303
    %v2305 = vadd.f32 %v2301, %v2304
    %vm2306 = vweird.f32 %v1771
    %vm2307 = vweird.f32 %v2301
    %vm2308 = vmor %vm2306, %vm2307
    %v2309 = vsel %vm2308, %v2301, %v2305
    %v2310 = vand.u32 2147483647, %v1771
    %vm2311 = vcmp.eq.f32.partialorder %v2310, 8.507059e+37
    %v2312 = vand.u32 %v1771, 2147483648
    %v2313 = vor.u32 1.1754944e-38, %v2312
    %v2314 = vsel %vm2311, %v2313, %v2309
    %v2315 = vmul.f32 1.0, %v2314
    %v2316 = vrcp.pop %v1772
    %v2317 = vmul.f32 %v1772, %v2316
    %v2318 = vsub.f32 1.0, %v2317
    %v2319 = vmul.f32 %v2316, %v2318
    %v2320 = vadd.f32 %v2316, %v2319
    %vm2321 = vweird.f32 %v1772
    %vm2322 = vweird.f32 %v2316
    %vm2323 = vmor %vm2321, %vm2322
    %v2324 = vsel %vm2323, %v2316, %v2320
    %v2325 = vand.u32 2147483647, %v1772
    %vm2326 = vcmp.eq.f32.partialorder %v2325, 8.507059e+37
    %v2327 = vand.u32 %v1772, 2147483648
    %v2328 = vor.u32 1.1754944e-38, %v2327
    %v2329 = vsel %vm2326, %v2328, %v2324
    %v2330 = vmul.f32 1.0, %v2329
    %v2331 = vrcp.pop %v1773
    %v2332 = vmul.f32 %v1773, %v2331
    %v2333 = vsub.f32 1.0, %v2332
    %v2334 = vmul.f32 %v2331, %v2333
    %v2335 = vadd.f32 %v2331, %v2334
    %vm2336 = vweird.f32 %v1773
    %vm2337 = vweird.f32 %v2331
    %vm2338 = vmor %vm2336, %vm2337
    %v2339 = vsel %vm2338, %v2331, %v2335
    %v2340 = vand.u32 2147483647, %v1773
    %vm2341 = vcmp.eq.f32.partialorder %v2340, 8.507059e+37
    %v2342 = vand.u32 %v1773, 2147483648
    %v2343 = vor.u32 1.1754944e-38, %v2342
    %v2344 = vsel %vm2341, %v2343, %v2339
    %v2345 = vmul.f32 1.0, %v2344
    %v2346 = vrcp.pop %v1774
    %v2347 = vmul.f32 %v1774, %v2346
    %v2348 = vsub.f32 1.0, %v2347
    %v2349 = vmul.f32 %v2346, %v2348
    %v2350 = vadd.f32 %v2346, %v2349
    %vm2351 = vweird.f32 %v1774
    %vm2352 = vweird.f32 %v2346
    %vm2353 = vmor %vm2351, %vm2352
    %v2354 = vsel %vm2353, %v2346, %v2350
    %v2355 = vand.u32 2147483647, %v1774
    %vm2356 = vcmp.eq.f32.partialorder %v2355, 8.507059e+37
    %v2357 = vand.u32 %v1774, 2147483648
    %v2358 = vor.u32 1.1754944e-38, %v2357
    %v2359 = vsel %vm2356, %v2358, %v2354
    %v2360 = vmul.f32 1.0, %v2359
    %v2361 = vrcp.pop %v1775
    %v2362 = vmul.f32 %v1775, %v2361
    %v2363 = vsub.f32 1.0, %v2362
    %v2364 = vmul.f32 %v2361, %v2363
    %v2365 = vadd.f32 %v2361, %v2364
    %vm2366 = vweird.f32 %v1775
    %vm2367 = vweird.f32 %v2361
    %vm2368 = vmor %vm2366, %vm2367
    %v2369 = vsel %vm2368, %v2361, %v2365
    %v2370 = vand.u32 2147483647, %v1775
    %vm2371 = vcmp.eq.f32.partialorder %v2370, 8.507059e+37
    %v2372 = vand.u32 %v1775, 2147483648
    %v2373 = vor.u32 1.1754944e-38, %v2372
    %v2374 = vsel %vm2371, %v2373, %v2369
    %v2375 = vmul.f32 1.0, %v2374
    %v2376 = vrcp.pop %v1776
    %v2377 = vmul.f32 %v1776, %v2376
    %v2378 = vsub.f32 1.0, %v2377
    %v2379 = vmul.f32 %v2376, %v2378
    %v2380 = vadd.f32 %v2376, %v2379
    %vm2381 = vweird.f32 %v1776
    %vm2382 = vweird.f32 %v2376
    %vm2383 = vmor %vm2381, %vm2382
    %v2384 = vsel %vm2383, %v2376, %v2380
    %v2385 = vand.u32 2147483647, %v1776
    %vm2386 = vcmp.eq.f32.partialorder %v2385, 8.507059e+37
    %v2387 = vand.u32 %v1776, 2147483648
    %v2388 = vor.u32 1.1754944e-38, %v2387
    %v2389 = vsel %vm2386, %v2388, %v2384
    %v2390 = vmul.f32 1.0, %v2389
    %v2391 = vrcp.pop %v1777
    %v2392 = vmul.f32 %v1777, %v2391
    %v2393 = vsub.f32 1.0, %v2392
    %v2394 = vmul.f32 %v2391, %v2393
    %v2395 = vadd.f32 %v2391, %v2394
    %vm2396 = vweird.f32 %v1777
    %vm2397 = vweird.f32 %v2391
    %vm2398 = vmor %vm2396, %vm2397
    %v2399 = vsel %vm2398, %v2391, %v2395
    %v2400 = vand.u32 2147483647, %v1777
    %vm2401 = vcmp.eq.f32.partialorder %v2400, 8.507059e+37
    %v2402 = vand.u32 %v1777, 2147483648
    %v2403 = vor.u32 1.1754944e-38, %v2402
    %v2404 = vsel %vm2401, %v2403, %v2399
    %v2405 = vmul.f32 1.0, %v2404
    %v2406 = vrcp.pop %v1778
    %v2407 = vmul.f32 %v1778, %v2406
    %v2408 = vsub.f32 1.0, %v2407
    %v2409 = vmul.f32 %v2406, %v2408
    %v2410 = vadd.f32 %v2406, %v2409
    %vm2411 = vweird.f32 %v1778
    %vm2412 = vweird.f32 %v2406
    %vm2413 = vmor %vm2411, %vm2412
    %v2414 = vsel %vm2413, %v2406, %v2410
    %v2415 = vand.u32 2147483647, %v1778
    %vm2416 = vcmp.eq.f32.partialorder %v2415, 8.507059e+37
    %v2417 = vand.u32 %v1778, 2147483648
    %v2418 = vor.u32 1.1754944e-38, %v2417
    %v2419 = vsel %vm2416, %v2418, %v2414
    %v2420 = vmul.f32 1.0, %v2419
    %v2421 = vrcp.pop %v1779
    %v2422 = vmul.f32 %v1779, %v2421
    %v2423 = vsub.f32 1.0, %v2422
    %v2424 = vmul.f32 %v2421, %v2423
    %v2425 = vadd.f32 %v2421, %v2424
    %vm2426 = vweird.f32 %v1779
    %vm2427 = vweird.f32 %v2421
    %vm2428 = vmor %vm2426, %vm2427
    %v2429 = vsel %vm2428, %v2421, %v2425
    %v2430 = vand.u32 2147483647, %v1779
    %vm2431 = vcmp.eq.f32.partialorder %v2430, 8.507059e+37
    %v2432 = vand.u32 %v1779, 2147483648
    %v2433 = vor.u32 1.1754944e-38, %v2432
    %v2434 = vsel %vm2431, %v2433, %v2429
    %v2435 = vmul.f32 1.0, %v2434
    %v2436 = vrcp.pop %v1780
    %v2437 = vmul.f32 %v1780, %v2436
    %v2438 = vsub.f32 1.0, %v2437
    %v2439 = vmul.f32 %v2436, %v2438
    %v2440 = vadd.f32 %v2436, %v2439
    %vm2441 = vweird.f32 %v1780
    %vm2442 = vweird.f32 %v2436
    %vm2443 = vmor %vm2441, %vm2442
    %v2444 = vsel %vm2443, %v2436, %v2440
    %v2445 = vand.u32 2147483647, %v1780
    %vm2446 = vcmp.eq.f32.partialorder %v2445, 8.507059e+37
    %v2447 = vand.u32 %v1780, 2147483648
    %v2448 = vor.u32 1.1754944e-38, %v2447
    %v2449 = vsel %vm2446, %v2448, %v2444
    %v2450 = vmul.f32 1.0, %v2449
    %v2451 = vrcp.pop %v1781
    %v2452 = vmul.f32 %v1781, %v2451
    %v2453 = vsub.f32 1.0, %v2452
    %v2454 = vmul.f32 %v2451, %v2453
    %v2455 = vadd.f32 %v2451, %v2454
    %vm2456 = vweird.f32 %v1781
    %vm2457 = vweird.f32 %v2451
    %vm2458 = vmor %vm2456, %vm2457
    %v2459 = vsel %vm2458, %v2451, %v2455
    %v2460 = vand.u32 2147483647, %v1781
    %vm2461 = vcmp.eq.f32.partialorder %v2460, 8.507059e+37
    %v2462 = vand.u32 %v1781, 2147483648
    %v2463 = vor.u32 1.1754944e-38, %v2462
    %v2464 = vsel %vm2461, %v2463, %v2459
    %v2465 = vmul.f32 1.0, %v2464
    %v2466 = vrcp.pop %v1782
    %v2467 = vmul.f32 %v1782, %v2466
    %v2468 = vsub.f32 1.0, %v2467
    %v2469 = vmul.f32 %v2466, %v2468
    %v2470 = vadd.f32 %v2466, %v2469
    %vm2471 = vweird.f32 %v1782
    %vm2472 = vweird.f32 %v2466
    %vm2473 = vmor %vm2471, %vm2472
    %v2474 = vsel %vm2473, %v2466, %v2470
    %v2475 = vand.u32 2147483647, %v1782
    %vm2476 = vcmp.eq.f32.partialorder %v2475, 8.507059e+37
    %v2477 = vand.u32 %v1782, 2147483648
    %v2478 = vor.u32 1.1754944e-38, %v2477
    %v2479 = vsel %vm2476, %v2478, %v2474
    %v2480 = vmul.f32 1.0, %v2479
    %v2481 = vrcp.pop %v1783
    %v2482 = vmul.f32 %v1783, %v2481
    %v2483 = vsub.f32 1.0, %v2482
    %v2484 = vmul.f32 %v2481, %v2483
    %v2485 = vadd.f32 %v2481, %v2484
    %vm2486 = vweird.f32 %v1783
    %vm2487 = vweird.f32 %v2481
    %vm2488 = vmor %vm2486, %vm2487
    %v2489 = vsel %vm2488, %v2481, %v2485
    %v2490 = vand.u32 2147483647, %v1783
    %vm2491 = vcmp.eq.f32.partialorder %v2490, 8.507059e+37
    %v2492 = vand.u32 %v1783, 2147483648
    %v2493 = vor.u32 1.1754944e-38, %v2492
    %v2494 = vsel %vm2491, %v2493, %v2489
    %v2495 = vmul.f32 1.0, %v2494
    %v2496 = vrcp.pop %v1784
    %v2497 = vmul.f32 %v1784, %v2496
    %v2498 = vsub.f32 1.0, %v2497
    %v2499 = vmul.f32 %v2496, %v2498
    %v2500 = vadd.f32 %v2496, %v2499
    %vm2501 = vweird.f32 %v1784
    %vm2502 = vweird.f32 %v2496
    %vm2503 = vmor %vm2501, %vm2502
    %v2504 = vsel %vm2503, %v2496, %v2500
    %v2505 = vand.u32 2147483647, %v1784
    %vm2506 = vcmp.eq.f32.partialorder %v2505, 8.507059e+37
    %v2507 = vand.u32 %v1784, 2147483648
    %v2508 = vor.u32 1.1754944e-38, %v2507
    %v2509 = vsel %vm2506, %v2508, %v2504
    %v2510 = vmul.f32 1.0, %v2509
    %v2511 = vrcp.pop %v1785
    %v2512 = vmul.f32 %v1785, %v2511
    %v2513 = vsub.f32 1.0, %v2512
    %v2514 = vmul.f32 %v2511, %v2513
    %v2515 = vadd.f32 %v2511, %v2514
    %vm2516 = vweird.f32 %v1785
    %vm2517 = vweird.f32 %v2511
    %vm2518 = vmor %vm2516, %vm2517
    %v2519 = vsel %vm2518, %v2511, %v2515
    %v2520 = vand.u32 2147483647, %v1785
    %vm2521 = vcmp.eq.f32.partialorder %v2520, 8.507059e+37
    %v2522 = vand.u32 %v1785, 2147483648
    %v2523 = vor.u32 1.1754944e-38, %v2522
    %v2524 = vsel %vm2521, %v2523, %v2519
    %v2525 = vmul.f32 1.0, %v2524
    %v2526 = vrcp.pop %v1786
    %v2527 = vmul.f32 %v1786, %v2526
    %v2528 = vsub.f32 1.0, %v2527
    %v2529 = vmul.f32 %v2526, %v2528
    %v2530 = vadd.f32 %v2526, %v2529
    %vm2531 = vweird.f32 %v1786
    %vm2532 = vweird.f32 %v2526
    %vm2533 = vmor %vm2531, %vm2532
    %v2534 = vsel %vm2533, %v2526, %v2530
    %v2535 = vand.u32 2147483647, %v1786
    %vm2536 = vcmp.eq.f32.partialorder %v2535, 8.507059e+37
    %v2537 = vand.u32 %v1786, 2147483648
    %v2538 = vor.u32 1.1754944e-38, %v2537
    %v2539 = vsel %vm2536, %v2538, %v2534
    %v2540 = vmul.f32 1.0, %v2539
    %v2541 = vrcp.pop %v1787
    %v2542 = vmul.f32 %v1787, %v2541
    %v2543 = vsub.f32 1.0, %v2542
    %v2544 = vmul.f32 %v2541, %v2543
    %v2545 = vadd.f32 %v2541, %v2544
    %vm2546 = vweird.f32 %v1787
    %vm2547 = vweird.f32 %v2541
    %vm2548 = vmor %vm2546, %vm2547
    %v2549 = vsel %vm2548, %v2541, %v2545
    %v2550 = vand.u32 2147483647, %v1787
    %vm2551 = vcmp.eq.f32.partialorder %v2550, 8.507059e+37
    %v2552 = vand.u32 %v1787, 2147483648
    %v2553 = vor.u32 1.1754944e-38, %v2552
    %v2554 = vsel %vm2551, %v2553, %v2549
    %v2555 = vmul.f32 1.0, %v2554
    %v2556 = vsel %vm1788, %v1850, 0.0
    %v2557 = vsel %vm1789, %v1865, 0.0
    %v2558 = vsel %vm1790, %v1880, 0.0
    %v2559 = vsel %vm1791, %v1895, 0.0
    %v2560 = vsel %vm1792, %v1910, 0.0
    %v2561 = vsel %vm1793, %v1925, 0.0
    %v2562 = vsel %vm1794, %v1940, 0.0
    %v2563 = vsel %vm1795, %v1955, 0.0
    %v2564 = vsel %vm1796, %v1970, 0.0
    %v2565 = vsel %vm1797, %v1985, 0.0
    %v2566 = vsel %vm1798, %v2000, 0.0
    %v2567 = vsel %vm1799, %v2015, 0.0
    %v2568 = vsel %vm1800, %v2030, 0.0
    %v2569 = vsel %vm1801, %v2045, 0.0
    %v2570 = vsel %vm1802, %v2060, 0.0
    %v2571 = vsel %vm1803, %v2075, 0.0
    %v2572 = vsel %vm1804, %v2090, 0.0
    %v2573 = vsel %vm1805, %v2105, 0.0
    %v2574 = vsel %vm1806, %v2120, 0.0
    %v2575 = vsel %vm1807, %v2135, 0.0
    %v2576 = vsel %vm1808, %v2150, 0.0
    %v2577 = vsel %vm1809, %v2165, 0.0
    %v2578 = vsel %vm1810, %v2180, 0.0
    %v2579 = vsel %vm1811, %v2195, 0.0
    %v2580 = vsel %vm1812, %v2210, 0.0
    %v2581 = vsel %vm1813, %v2225, 0.0
    %v2582 = vsel %vm1814, %v2240, 0.0
    %v2583 = vsel %vm1815, %v2255, 0.0
    %v2584 = vsel %vm1816, %v2270, 0.0
    %v2585 = vsel %vm1817, %v2285, 0.0
    %v2586 = vsel %vm1818, %v2300, 0.0
    %v2587 = vsel %vm1819, %v2315, 0.0
    %v2588 = vsel %vm1820, %v2330, 0.0
    %v2589 = vsel %vm1821, %v2345, 0.0
    %v2590 = vsel %vm1822, %v2360, 0.0
    %v2591 = vsel %vm1823, %v2375, 0.0
    %v2592 = vsel %vm1824, %v2390, 0.0
    %v2593 = vsel %vm1825, %v2405, 0.0
    %v2594 = vsel %vm1826, %v2420, 0.0
    %v2595 = vsel %vm1827, %v2435, 0.0
    %v2596 = vsel %vm1828, %v2450, 0.0
    %v2597 = vsel %vm1829, %v2465, 0.0
    %v2598 = vsel %vm1830, %v2480, 0.0
    %v2599 = vsel %vm1831, %v2495, 0.0
    %v2600 = vsel %vm1832, %v2510, 0.0
    %v2601 = vsel %vm1833, %v2525, 0.0
    %v2602 = vsel %vm1834, %v2540, 0.0
    %v2603 = vsel %vm1835, %v2555, 0.0
    %v2604 = vld [vmem:[#allocation2] sm:$0xff]
    %v2605 = vld [vmem:[#allocation2 + $0x8] sm:$0xff]
    %v2606 = vld [vmem:[#allocation2 + $0x10] sm:$0xff]
    %v2607 = vld [vmem:[#allocation2 + $0x18] sm:$0xff]
    %v2608 = vld [vmem:[#allocation2 + $0x20] sm:$0xff]
    %v2609 = vld [vmem:[#allocation2 + $0x28] sm:$0xff]
    %v2610 = vld [vmem:[#allocation2 + $0x30] sm:$0xff]
    %v2611 = vld [vmem:[#allocation2 + $0x38] sm:$0xff]
    %v2612 = vld [vmem:[#allocation2 + $0x40] sm:$0xff]
    %v2613 = vld [vmem:[#allocation2 + $0x48] sm:$0xff]
    %v2614 = vld [vmem:[#allocation2 + $0x50] sm:$0xff]
    %v2615 = vld [vmem:[#allocation2 + $0x58] sm:$0xff]
    %v2616 = vld [vmem:[#allocation2 + $0x60] sm:$0xff]
    %v2617 = vld [vmem:[#allocation2 + $0x68] sm:$0xff]
    %v2618 = vld [vmem:[#allocation2 + $0x70] sm:$0xff]
    %v2619 = vld [vmem:[#allocation2 + $0x78] sm:$0xff]
    %v2620 = vld [vmem:[#allocation2 + $0x80] sm:$0xff]
    %v2621 = vld [vmem:[#allocation2 + $0x88] sm:$0xff]
    %v2622 = vld [vmem:[#allocation2 + $0x90] sm:$0xff]
    %v2623 = vld [vmem:[#allocation2 + $0x98] sm:$0xff]
    %v2624 = vld [vmem:[#allocation2 + $0xa0] sm:$0xff]
    %v2625 = vld [vmem:[#allocation2 + $0xa8] sm:$0xff]
    %v2626 = vld [vmem:[#allocation2 + $0xb0] sm:$0xff]
    %v2627 = vld [vmem:[#allocation2 + $0xb8] sm:$0xff]
    %v2628 = vld [vmem:[#allocation2 + $0xc0] sm:$0xff]
    %v2629 = vld [vmem:[#allocation2 + $0xc8] sm:$0xff]
    %v2630 = vld [vmem:[#allocation2 + $0xd0] sm:$0xff]
    %v2631 = vld [vmem:[#allocation2 + $0xd8] sm:$0xff]
    %v2632 = vld [vmem:[#allocation2 + $0xe0] sm:$0xff]
    %v2633 = vld [vmem:[#allocation2 + $0xe8] sm:$0xff]
    %v2634 = vld [vmem:[#allocation2 + $0xf0] sm:$0xff]
    %v2635 = vld [vmem:[#allocation2 + $0xf8] sm:$0xff]
    %v2636 = vld [vmem:[#allocation2 + $0x100] sm:$0xff]
    %v2637 = vld [vmem:[#allocation2 + $0x108] sm:$0xff]
    %v2638 = vld [vmem:[#allocation2 + $0x110] sm:$0xff]
    %v2639 = vld [vmem:[#allocation2 + $0x118] sm:$0xff]
    %v2640 = vld [vmem:[#allocation2 + $0x120] sm:$0xff]
    %v2641 = vld [vmem:[#allocation2 + $0x128] sm:$0xff]
    %v2642 = vld [vmem:[#allocation2 + $0x130] sm:$0xff]
    %v2643 = vld [vmem:[#allocation2 + $0x138] sm:$0xff]
    %v2644 = vld [vmem:[#allocation2 + $0x140] sm:$0xff]
    %v2645 = vld [vmem:[#allocation2 + $0x148] sm:$0xff]
    %v2646 = vld [vmem:[#allocation2 + $0x150] sm:$0xff]
    %v2647 = vld [vmem:[#allocation2 + $0x158] sm:$0xff]
    %v2648 = vld [vmem:[#allocation2 + $0x160] sm:$0xff]
    %v2649 = vld [vmem:[#allocation2 + $0x168] sm:$0xff]
    %v2650 = vld [vmem:[#allocation2 + $0x170] sm:$0xff]
    %v2651 = vld [vmem:[#allocation2 + $0x178] sm:$0xff]
    %2653 = vset.pattern.permute.xlu0 0
    %2654 = vperm.xlu0 %2653, %v2556
    %v2655 = vpop.permute.xlu0 %2654
    %2658 = vset.pattern.permute.xlu0 0
    %2659 = vperm.xlu0 %2658, %v2557
    %v2660 = vpop.permute.xlu0 %2659
    %2663 = vset.pattern.permute.xlu0 0
    %2664 = vperm.xlu0 %2663, %v2558
    %v2665 = vpop.permute.xlu0 %2664
    %2668 = vset.pattern.permute.xlu0 0
    %2669 = vperm.xlu0 %2668, %v2559
    %v2670 = vpop.permute.xlu0 %2669
    %2673 = vset.pattern.permute.xlu0 0
    %2674 = vperm.xlu0 %2673, %v2560
    %v2675 = vpop.permute.xlu0 %2674
    %2678 = vset.pattern.permute.xlu0 0
    %2679 = vperm.xlu0 %2678, %v2561
    %v2680 = vpop.permute.xlu0 %2679
    %2683 = vset.pattern.permute.xlu0 0
    %2684 = vperm.xlu0 %2683, %v2562
    %v2685 = vpop.permute.xlu0 %2684
    %2688 = vset.pattern.permute.xlu0 0
    %2689 = vperm.xlu0 %2688, %v2563
    %v2690 = vpop.permute.xlu0 %2689
    %2693 = vset.pattern.permute.xlu0 0
    %2694 = vperm.xlu0 %2693, %v2564
    %v2695 = vpop.permute.xlu0 %2694
    %2698 = vset.pattern.permute.xlu0 0
    %2699 = vperm.xlu0 %2698, %v2565
    %v2700 = vpop.permute.xlu0 %2699
    %2703 = vset.pattern.permute.xlu0 0
    %2704 = vperm.xlu0 %2703, %v2566
    %v2705 = vpop.permute.xlu0 %2704
    %2708 = vset.pattern.permute.xlu0 0
    %2709 = vperm.xlu0 %2708, %v2567
    %v2710 = vpop.permute.xlu0 %2709
    %2713 = vset.pattern.permute.xlu0 0
    %2714 = vperm.xlu0 %2713, %v2568
    %v2715 = vpop.permute.xlu0 %2714
    %2718 = vset.pattern.permute.xlu0 0
    %2719 = vperm.xlu0 %2718, %v2569
    %v2720 = vpop.permute.xlu0 %2719
    %2723 = vset.pattern.permute.xlu0 0
    %2724 = vperm.xlu0 %2723, %v2570
    %v2725 = vpop.permute.xlu0 %2724
    %2728 = vset.pattern.permute.xlu0 0
    %2729 = vperm.xlu0 %2728, %v2571
    %v2730 = vpop.permute.xlu0 %2729
    %2733 = vset.pattern.permute.xlu0 0
    %2734 = vperm.xlu0 %2733, %v2572
    %v2735 = vpop.permute.xlu0 %2734
    %2738 = vset.pattern.permute.xlu0 0
    %2739 = vperm.xlu0 %2738, %v2573
    %v2740 = vpop.permute.xlu0 %2739
    %2743 = vset.pattern.permute.xlu0 0
    %2744 = vperm.xlu0 %2743, %v2574
    %v2745 = vpop.permute.xlu0 %2744
    %2748 = vset.pattern.permute.xlu0 0
    %2749 = vperm.xlu0 %2748, %v2575
    %v2750 = vpop.permute.xlu0 %2749
    %2753 = vset.pattern.permute.xlu0 0
    %2754 = vperm.xlu0 %2753, %v2576
    %v2755 = vpop.permute.xlu0 %2754
    %2758 = vset.pattern.permute.xlu0 0
    %2759 = vperm.xlu0 %2758, %v2577
    %v2760 = vpop.permute.xlu0 %2759
    %2763 = vset.pattern.permute.xlu0 0
    %2764 = vperm.xlu0 %2763, %v2578
    %v2765 = vpop.permute.xlu0 %2764
    %2768 = vset.pattern.permute.xlu0 0
    %2769 = vperm.xlu0 %2768, %v2579
    %v2770 = vpop.permute.xlu0 %2769
    %2773 = vset.pattern.permute.xlu0 0
    %2774 = vperm.xlu0 %2773, %v2580
    %v2775 = vpop.permute.xlu0 %2774
    %2778 = vset.pattern.permute.xlu0 0
    %2779 = vperm.xlu0 %2778, %v2581
    %v2780 = vpop.permute.xlu0 %2779
    %2783 = vset.pattern.permute.xlu0 0
    %2784 = vperm.xlu0 %2783, %v2582
    %v2785 = vpop.permute.xlu0 %2784
    %2788 = vset.pattern.permute.xlu0 0
    %2789 = vperm.xlu0 %2788, %v2583
    %v2790 = vpop.permute.xlu0 %2789
    %2793 = vset.pattern.permute.xlu0 0
    %2794 = vperm.xlu0 %2793, %v2584
    %v2795 = vpop.permute.xlu0 %2794
    %2798 = vset.pattern.permute.xlu0 0
    %2799 = vperm.xlu0 %2798, %v2585
    %v2800 = vpop.permute.xlu0 %2799
    %2803 = vset.pattern.permute.xlu0 0
    %2804 = vperm.xlu0 %2803, %v2586
    %v2805 = vpop.permute.xlu0 %2804
    %2808 = vset.pattern.permute.xlu0 0
    %2809 = vperm.xlu0 %2808, %v2587
    %v2810 = vpop.permute.xlu0 %2809
    %2813 = vset.pattern.permute.xlu0 0
    %2814 = vperm.xlu0 %2813, %v2588
    %v2815 = vpop.permute.xlu0 %2814
    %2818 = vset.pattern.permute.xlu0 0
    %2819 = vperm.xlu0 %2818, %v2589
    %v2820 = vpop.permute.xlu0 %2819
    %2823 = vset.pattern.permute.xlu0 0
    %2824 = vperm.xlu0 %2823, %v2590
    %v2825 = vpop.permute.xlu0 %2824
    %2828 = vset.pattern.permute.xlu0 0
    %2829 = vperm.xlu0 %2828, %v2591
    %v2830 = vpop.permute.xlu0 %2829
    %2833 = vset.pattern.permute.xlu0 0
    %2834 = vperm.xlu0 %2833, %v2592
    %v2835 = vpop.permute.xlu0 %2834
    %2838 = vset.pattern.permute.xlu0 0
    %2839 = vperm.xlu0 %2838, %v2593
    %v2840 = vpop.permute.xlu0 %2839
    %2843 = vset.pattern.permute.xlu0 0
    %2844 = vperm.xlu0 %2843, %v2594
    %v2845 = vpop.permute.xlu0 %2844
    %2848 = vset.pattern.permute.xlu0 0
    %2849 = vperm.xlu0 %2848, %v2595
    %v2850 = vpop.permute.xlu0 %2849
    %2853 = vset.pattern.permute.xlu0 0
    %2854 = vperm.xlu0 %2853, %v2596
    %v2855 = vpop.permute.xlu0 %2854
    %2858 = vset.pattern.permute.xlu0 0
    %2859 = vperm.xlu0 %2858, %v2597
    %v2860 = vpop.permute.xlu0 %2859
    %2863 = vset.pattern.permute.xlu0 0
    %2864 = vperm.xlu0 %2863, %v2598
    %v2865 = vpop.permute.xlu0 %2864
    %2868 = vset.pattern.permute.xlu0 0
    %2869 = vperm.xlu0 %2868, %v2599
    %v2870 = vpop.permute.xlu0 %2869
    %2873 = vset.pattern.permute.xlu0 0
    %2874 = vperm.xlu0 %2873, %v2600
    %v2875 = vpop.permute.xlu0 %2874
    %2878 = vset.pattern.permute.xlu0 0
    %2879 = vperm.xlu0 %2878, %v2601
    %v2880 = vpop.permute.xlu0 %2879
    %2883 = vset.pattern.permute.xlu0 0
    %2884 = vperm.xlu0 %2883, %v2602
    %v2885 = vpop.permute.xlu0 %2884
    %2888 = vset.pattern.permute.xlu0 0
    %2889 = vperm.xlu0 %2888, %v2603
    %v2890 = vpop.permute.xlu0 %2889
    %v2892 = vmul.f32 %v2604, %v2655
    %v2893 = vmul.f32 %v2605, %v2660
    %v2894 = vmul.f32 %v2606, %v2665
    %v2895 = vmul.f32 %v2607, %v2670
    %v2896 = vmul.f32 %v2608, %v2675
    %v2897 = vmul.f32 %v2609, %v2680
    %v2898 = vmul.f32 %v2610, %v2685
    %v2899 = vmul.f32 %v2611, %v2690
    %v2900 = vmul.f32 %v2612, %v2695
    %v2901 = vmul.f32 %v2613, %v2700
    %v2902 = vmul.f32 %v2614, %v2705
    %v2903 = vmul.f32 %v2615, %v2710
    %v2904 = vmul.f32 %v2616, %v2715
    %v2905 = vmul.f32 %v2617, %v2720
    %v2906 = vmul.f32 %v2618, %v2725
    %v2907 = vmul.f32 %v2619, %v2730
    %v2908 = vmul.f32 %v2620, %v2735
    %v2909 = vmul.f32 %v2621, %v2740
    %v2910 = vmul.f32 %v2622, %v2745
    %v2911 = vmul.f32 %v2623, %v2750
    %v2912 = vmul.f32 %v2624, %v2755
    %v2913 = vmul.f32 %v2625, %v2760
    %v2914 = vmul.f32 %v2626, %v2765
    %v2915 = vmul.f32 %v2627, %v2770
    %v2916 = vmul.f32 %v2628, %v2775
    %v2917 = vmul.f32 %v2629, %v2780
    %v2918 = vmul.f32 %v2630, %v2785
    %v2919 = vmul.f32 %v2631, %v2790
    %v2920 = vmul.f32 %v2632, %v2795
    %v2921 = vmul.f32 %v2633, %v2800
    %v2922 = vmul.f32 %v2634, %v2805
    %v2923 = vmul.f32 %v2635, %v2810
    %v2924 = vmul.f32 %v2636, %v2815
    %v2925 = vmul.f32 %v2637, %v2820
    %v2926 = vmul.f32 %v2638, %v2825
    %v2927 = vmul.f32 %v2639, %v2830
    %v2928 = vmul.f32 %v2640, %v2835
    %v2929 = vmul.f32 %v2641, %v2840
    %v2930 = vmul.f32 %v2642, %v2845
    %v2931 = vmul.f32 %v2643, %v2850
    %v2932 = vmul.f32 %v2644, %v2855
    %v2933 = vmul.f32 %v2645, %v2860
    %v2934 = vmul.f32 %v2646, %v2865
    %v2935 = vmul.f32 %v2647, %v2870
    %v2936 = vmul.f32 %v2648, %v2875
    %v2937 = vmul.f32 %v2649, %v2880
    %v2938 = vmul.f32 %v2650, %v2885
    %v2939 = vmul.f32 %v2651, %v2890
    %v2940 = vld [vmem:[%s2] sm:$0xff]
    %v2941 = vld [vmem:[%s2 + $0x8] sm:$0xff]
    %v2942 = vld [vmem:[%s2 + $0x10] sm:$0xff]
    %v2943 = vld [vmem:[%s2 + $0x18] sm:$0xff]
    %v2944 = vld [vmem:[%s2 + $0x20] sm:$0xff]
    %v2945 = vld [vmem:[%s2 + $0x28] sm:$0xff]
    %v2946 = vld [vmem:[%s2 + $0x30] sm:$0xff]
    %v2947 = vld [vmem:[%s2 + $0x38] sm:$0xff]
    %v2948 = vld [vmem:[%s2 + $0x40] sm:$0xff]
    %v2949 = vld [vmem:[%s2 + $0x48] sm:$0xff]
    %v2950 = vld [vmem:[%s2 + $0x50] sm:$0xff]
    %v2951 = vld [vmem:[%s2 + $0x58] sm:$0xff]
    %v2952 = vld [vmem:[%s2 + $0x60] sm:$0xff]
    %v2953 = vld [vmem:[%s2 + $0x68] sm:$0xff]
    %v2954 = vld [vmem:[%s2 + $0x70] sm:$0xff]
    %v2955 = vld [vmem:[%s2 + $0x78] sm:$0xff]
    %v2956 = vld [vmem:[%s2 + $0x80] sm:$0xff]
    %v2957 = vld [vmem:[%s2 + $0x88] sm:$0xff]
    %v2958 = vld [vmem:[%s2 + $0x90] sm:$0xff]
    %v2959 = vld [vmem:[%s2 + $0x98] sm:$0xff]
    %v2960 = vld [vmem:[%s2 + $0xa0] sm:$0xff]
    %v2961 = vld [vmem:[%s2 + $0xa8] sm:$0xff]
    %v2962 = vld [vmem:[%s2 + $0xb0] sm:$0xff]
    %v2963 = vld [vmem:[%s2 + $0xb8] sm:$0xff]
    %v2964 = vld [vmem:[%s2 + $0xc0] sm:$0xff]
    %v2965 = vld [vmem:[%s2 + $0xc8] sm:$0xff]
    %v2966 = vld [vmem:[%s2 + $0xd0] sm:$0xff]
    %v2967 = vld [vmem:[%s2 + $0xd8] sm:$0xff]
    %v2968 = vld [vmem:[%s2 + $0xe0] sm:$0xff]
    %v2969 = vld [vmem:[%s2 + $0xe8] sm:$0xff]
    %v2970 = vld [vmem:[%s2 + $0xf0] sm:$0xff]
    %v2971 = vld [vmem:[%s2 + $0xf8] sm:$0xff]
    %v2972 = vld [vmem:[%s2 + $0x100] sm:$0xff]
    %v2973 = vld [vmem:[%s2 + $0x108] sm:$0xff]
    %v2974 = vld [vmem:[%s2 + $0x110] sm:$0xff]
    %v2975 = vld [vmem:[%s2 + $0x118] sm:$0xff]
    %v2976 = vld [vmem:[%s2 + $0x120] sm:$0xff]
    %v2977 = vld [vmem:[%s2 + $0x128] sm:$0xff]
    %v2978 = vld [vmem:[%s2 + $0x130] sm:$0xff]
    %v2979 = vld [vmem:[%s2 + $0x138] sm:$0xff]
    %v2980 = vld [vmem:[%s2 + $0x140] sm:$0xff]
    %v2981 = vld [vmem:[%s2 + $0x148] sm:$0xff]
    %v2982 = vld [vmem:[%s2 + $0x150] sm:$0xff]
    %v2983 = vld [vmem:[%s2 + $0x158] sm:$0xff]
    %v2984 = vld [vmem:[%s2 + $0x160] sm:$0xff]
    %v2985 = vld [vmem:[%s2 + $0x168] sm:$0xff]
    %v2986 = vld [vmem:[%s2 + $0x170] sm:$0xff]
    %v2987 = vld [vmem:[%s2 + $0x178] sm:$0xff]
    %v2988 = vld [vmem:[%s3] sm:$0xff]
    %v2989 = vld [vmem:[%s3 + $0x8] sm:$0xff]
    %v2990 = vld [vmem:[%s3 + $0x10] sm:$0xff]
    %v2991 = vld [vmem:[%s3 + $0x18] sm:$0xff]
    %v2992 = vld [vmem:[%s4] sm:$0xff]
    %v2993 = vld [vmem:[%s4 + $0x8] sm:$0xff]
    %v2994 = vld [vmem:[%s4 + $0x10] sm:$0xff]
    %v2995 = vld [vmem:[%s4 + $0x18] sm:$0xff]
    %v2997 = vsel %vm1688, %v2892, 0
    %v3000 = vsel %vm1688, %v2893, 0
    %v3003 = vsel %vm1688, %v2894, 0
    %v3006 = vsel %vm1688, %v2895, 0
    %v3009 = vsel %vm1688, %v2896, 0
    %v3012 = vsel %vm1688, %v2897, 0
    %v3015 = vsel %vm1688, %v2898, 0
    %v3018 = vsel %vm1688, %v2899, 0
    %v3021 = vsel %vm1688, %v2900, 0
    %v3024 = vsel %vm1688, %v2901, 0
    %v3027 = vsel %vm1688, %v2902, 0
    %v3030 = vsel %vm1688, %v2903, 0
    %v3033 = vsel %vm1688, %v2904, 0
    %v3036 = vsel %vm1688, %v2905, 0
    %v3039 = vsel %vm1688, %v2906, 0
    %v3042 = vsel %vm1688, %v2907, 0
    %v3045 = vsel %vm1688, %v2908, 0
    %v3048 = vsel %vm1688, %v2909, 0
    %v3051 = vsel %vm1688, %v2910, 0
    %v3054 = vsel %vm1688, %v2911, 0
    %v3057 = vsel %vm1688, %v2912, 0
    %v3060 = vsel %vm1688, %v2913, 0
    %v3063 = vsel %vm1688, %v2914, 0
    %v3066 = vsel %vm1688, %v2915, 0
    %v3069 = vsel %vm1688, %v2916, 0
    %v3072 = vsel %vm1688, %v2917, 0
    %v3075 = vsel %vm1688, %v2918, 0
    %v3078 = vsel %vm1688, %v2919, 0
    %v3081 = vsel %vm1688, %v2920, 0
    %v3084 = vsel %vm1688, %v2921, 0
    %v3087 = vsel %vm1688, %v2922, 0
    %v3090 = vsel %vm1688, %v2923, 0
    %v3093 = vsel %vm1688, %v2924, 0
    %v3096 = vsel %vm1688, %v2925, 0
    %v3099 = vsel %vm1688, %v2926, 0
    %v3102 = vsel %vm1688, %v2927, 0
    %v3105 = vsel %vm1688, %v2928, 0
    %v3108 = vsel %vm1688, %v2929, 0
    %v3111 = vsel %vm1688, %v2930, 0
    %v3114 = vsel %vm1688, %v2931, 0
    %v3117 = vsel %vm1688, %v2932, 0
    %v3120 = vsel %vm1688, %v2933, 0
    %v3123 = vsel %vm1688, %v2934, 0
    %v3126 = vsel %vm1688, %v2935, 0
    %v3129 = vsel %vm1688, %v2936, 0
    %v3132 = vsel %vm1688, %v2937, 0
    %v3135 = vsel %vm1688, %v2938, 0
    %v3138 = vsel %vm1688, %v2939, 0
    %3140 = vmatpush.msra.mxu0 0.0
    %3141 = vmatpush.msra.mxu0 0.0
    %3142 = vmatpush.msra.mxu0 0.0
    %3143 = vmatpush.msra.mxu0 0.0
    %3144 = vmatpush.msra.mxu0 0.0
    %3145 = vmatpush.msra.mxu0 0.0
    %3146 = vmatpush.msra.mxu0 0.0
    %3147 = vmatpush.msra.mxu0 0.0
    %3148 = vmatpush.msra.mxu0 0.0
    %3149 = vmatpush.msra.mxu0 0.0
    %3150 = vmatpush.msra.mxu0 0.0
    %3151 = vmatpush.msra.mxu0 0.0
    %3152 = vmatpush.msra.mxu0 %v2995
    %3153 = vmatpush.msra.mxu0 %v2994
    %3154 = vmatpush.msra.mxu0 %v2993
    %3155 = vmatpush.msra.mxu0 %v2992
    %3156 = vmatmul.f32.gmra.mxu0 %v2997
    %v3157 = vpop.f32.mrf.mxu0
    %v3158 = vadd.f32 0.0, %v3157
    %3159 = vmatmul.f32.gmra.mxu0 %v3000
    %v3160 = vpop.f32.mrf.mxu0
    %v3161 = vadd.f32 0.0, %v3160
    %3162 = vmatmul.f32.gmra.mxu0 %v3003
    %v3163 = vpop.f32.mrf.mxu0
    %v3164 = vadd.f32 0.0, %v3163
    %3165 = vmatmul.f32.gmra.mxu0 %v3006
    %v3166 = vpop.f32.mrf.mxu0
    %v3167 = vadd.f32 0.0, %v3166
    %3168 = vmatmul.f32.gmra.mxu0 %v3009
    %v3169 = vpop.f32.mrf.mxu0
    %v3170 = vadd.f32 0.0, %v3169
    %3171 = vmatmul.f32.gmra.mxu0 %v3012
    %v3172 = vpop.f32.mrf.mxu0
    %v3173 = vadd.f32 0.0, %v3172
    %3174 = vmatmul.f32.gmra.mxu0 %v3015
    %v3175 = vpop.f32.mrf.mxu0
    %v3176 = vadd.f32 0.0, %v3175
    %3177 = vmatmul.f32.gmra.mxu0 %v3018
    %v3178 = vpop.f32.mrf.mxu0
    %v3179 = vadd.f32 0.0, %v3178
    %3180 = vmatmul.f32.gmra.mxu0 %v3021
    %v3181 = vpop.f32.mrf.mxu0
    %v3182 = vadd.f32 0.0, %v3181
    %3183 = vmatmul.f32.gmra.mxu0 %v3024
    %v3184 = vpop.f32.mrf.mxu0
    %v3185 = vadd.f32 0.0, %v3184
    %3186 = vmatmul.f32.gmra.mxu0 %v3027
    %v3187 = vpop.f32.mrf.mxu0
    %v3188 = vadd.f32 0.0, %v3187
    %3189 = vmatmul.f32.gmra.mxu0 %v3030
    %v3190 = vpop.f32.mrf.mxu0
    %v3191 = vadd.f32 0.0, %v3190
    %3192 = vmatmul.f32.gmra.mxu0 %v3033
    %v3193 = vpop.f32.mrf.mxu0
    %v3194 = vadd.f32 0.0, %v3193
    %3195 = vmatmul.f32.gmra.mxu0 %v3036
    %v3196 = vpop.f32.mrf.mxu0
    %v3197 = vadd.f32 0.0, %v3196
    %3198 = vmatmul.f32.gmra.mxu0 %v3039
    %v3199 = vpop.f32.mrf.mxu0
    %v3200 = vadd.f32 0.0, %v3199
    %3201 = vmatmul.f32.gmra.mxu0 %v3042
    %v3202 = vpop.f32.mrf.mxu0
    %v3203 = vadd.f32 0.0, %v3202
    %3204 = vmatmul.f32.gmra.mxu0 %v3045
    %v3205 = vpop.f32.mrf.mxu0
    %v3206 = vadd.f32 0.0, %v3205
    %3207 = vmatmul.f32.gmra.mxu0 %v3048
    %v3208 = vpop.f32.mrf.mxu0
    %v3209 = vadd.f32 0.0, %v3208
    %3210 = vmatmul.f32.gmra.mxu0 %v3051
    %v3211 = vpop.f32.mrf.mxu0
    %v3212 = vadd.f32 0.0, %v3211
    %3213 = vmatmul.f32.gmra.mxu0 %v3054
    %v3214 = vpop.f32.mrf.mxu0
    %v3215 = vadd.f32 0.0, %v3214
    %3216 = vmatmul.f32.gmra.mxu0 %v3057
    %v3217 = vpop.f32.mrf.mxu0
    %v3218 = vadd.f32 0.0, %v3217
    %3219 = vmatmul.f32.gmra.mxu0 %v3060
    %v3220 = vpop.f32.mrf.mxu0
    %v3221 = vadd.f32 0.0, %v3220
    %3222 = vmatmul.f32.gmra.mxu0 %v3063
    %v3223 = vpop.f32.mrf.mxu0
    %v3224 = vadd.f32 0.0, %v3223
    %3225 = vmatmul.f32.gmra.mxu0 %v3066
    %v3226 = vpop.f32.mrf.mxu0
    %v3227 = vadd.f32 0.0, %v3226
    %3228 = vmatmul.f32.gmra.mxu0 %v3069
    %v3229 = vpop.f32.mrf.mxu0
    %v3230 = vadd.f32 0.0, %v3229
    %3231 = vmatmul.f32.gmra.mxu0 %v3072
    %v3232 = vpop.f32.mrf.mxu0
    %v3233 = vadd.f32 0.0, %v3232
    %3234 = vmatmul.f32.gmra.mxu0 %v3075
    %v3235 = vpop.f32.mrf.mxu0
    %v3236 = vadd.f32 0.0, %v3235
    %3237 = vmatmul.f32.gmra.mxu0 %v3078
    %v3238 = vpop.f32.mrf.mxu0
    %v3239 = vadd.f32 0.0, %v3238
    %3240 = vmatmul.f32.gmra.mxu0 %v3081
    %v3241 = vpop.f32.mrf.mxu0
    %v3242 = vadd.f32 0.0, %v3241
    %3243 = vmatmul.f32.gmra.mxu0 %v3084
    %v3244 = vpop.f32.mrf.mxu0
    %v3245 = vadd.f32 0.0, %v3244
    %3246 = vmatmul.f32.gmra.mxu0 %v3087
    %v3247 = vpop.f32.mrf.mxu0
    %v3248 = vadd.f32 0.0, %v3247
    %3249 = vmatmul.f32.gmra.mxu0 %v3090
    %v3250 = vpop.f32.mrf.mxu0
    %v3251 = vadd.f32 0.0, %v3250
    %3252 = vmatmul.f32.gmra.mxu0 %v3093
    %v3253 = vpop.f32.mrf.mxu0
    %v3254 = vadd.f32 0.0, %v3253
    %3255 = vmatmul.f32.gmra.mxu0 %v3096
    %v3256 = vpop.f32.mrf.mxu0
    %v3257 = vadd.f32 0.0, %v3256
    %3258 = vmatmul.f32.gmra.mxu0 %v3099
    %v3259 = vpop.f32.mrf.mxu0
    %v3260 = vadd.f32 0.0, %v3259
    %3261 = vmatmul.f32.gmra.mxu0 %v3102
    %v3262 = vpop.f32.mrf.mxu0
    %v3263 = vadd.f32 0.0, %v3262
    %3264 = vmatmul.f32.gmra.mxu0 %v3105
    %v3265 = vpop.f32.mrf.mxu0
    %v3266 = vadd.f32 0.0, %v3265
    %3267 = vmatmul.f32.gmra.mxu0 %v3108
    %v3268 = vpop.f32.mrf.mxu0
    %v3269 = vadd.f32 0.0, %v3268
    %3270 = vmatmul.f32.gmra.mxu0 %v3111
    %v3271 = vpop.f32.mrf.mxu0
    %v3272 = vadd.f32 0.0, %v3271
    %3273 = vmatmul.f32.gmra.mxu0 %v3114
    %v3274 = vpop.f32.mrf.mxu0
    %v3275 = vadd.f32 0.0, %v3274
    %3276 = vmatmul.f32.gmra.mxu0 %v3117
    %v3277 = vpop.f32.mrf.mxu0
    %v3278 = vadd.f32 0.0, %v3277
    %3279 = vmatmul.f32.gmra.mxu0 %v3120
    %v3280 = vpop.f32.mrf.mxu0
    %v3281 = vadd.f32 0.0, %v3280
    %3282 = vmatmul.f32.gmra.mxu0 %v3123
    %v3283 = vpop.f32.mrf.mxu0
    %v3284 = vadd.f32 0.0, %v3283
    %3285 = vmatmul.f32.gmra.mxu0 %v3126
    %v3286 = vpop.f32.mrf.mxu0
    %v3287 = vadd.f32 0.0, %v3286
    %3288 = vmatmul.f32.gmra.mxu0 %v3129
    %v3289 = vpop.f32.mrf.mxu0
    %v3290 = vadd.f32 0.0, %v3289
    %3291 = vmatmul.f32.gmra.mxu0 %v3132
    %v3292 = vpop.f32.mrf.mxu0
    %v3293 = vadd.f32 0.0, %v3292
    %3294 = vmatmul.f32.gmra.mxu0 %v3135
    %v3295 = vpop.f32.mrf.mxu0
    %v3296 = vadd.f32 0.0, %v3295
    %3297 = vmatmul.f32.gmra.mxu0 %v3138
    %v3298 = vpop.f32.mrf.mxu0
    %v3299 = vadd.f32 0.0, %v3298
    %3300 = vdwg.mxu0
    %v3302 = vsel %vm1688, %v2940, 0
    %v3305 = vsel %vm1688, %v2941, 0
    %v3308 = vsel %vm1688, %v2942, 0
    %v3311 = vsel %vm1688, %v2943, 0
    %v3314 = vsel %vm1688, %v2944, 0
    %v3317 = vsel %vm1688, %v2945, 0
    %v3320 = vsel %vm1688, %v2946, 0
    %v3323 = vsel %vm1688, %v2947, 0
    %v3326 = vsel %vm1688, %v2948, 0
    %v3329 = vsel %vm1688, %v2949, 0
    %v3332 = vsel %vm1688, %v2950, 0
    %v3335 = vsel %vm1688, %v2951, 0
    %v3338 = vsel %vm1688, %v2952, 0
    %v3341 = vsel %vm1688, %v2953, 0
    %v3344 = vsel %vm1688, %v2954, 0
    %v3347 = vsel %vm1688, %v2955, 0
    %v3350 = vsel %vm1688, %v2956, 0
    %v3353 = vsel %vm1688, %v2957, 0
    %v3356 = vsel %vm1688, %v2958, 0
    %v3359 = vsel %vm1688, %v2959, 0
    %v3362 = vsel %vm1688, %v2960, 0
    %v3365 = vsel %vm1688, %v2961, 0
    %v3368 = vsel %vm1688, %v2962, 0
    %v3371 = vsel %vm1688, %v2963, 0
    %v3374 = vsel %vm1688, %v2964, 0
    %v3377 = vsel %vm1688, %v2965, 0
    %v3380 = vsel %vm1688, %v2966, 0
    %v3383 = vsel %vm1688, %v2967, 0
    %v3386 = vsel %vm1688, %v2968, 0
    %v3389 = vsel %vm1688, %v2969, 0
    %v3392 = vsel %vm1688, %v2970, 0
    %v3395 = vsel %vm1688, %v2971, 0
    %v3398 = vsel %vm1688, %v2972, 0
    %v3401 = vsel %vm1688, %v2973, 0
    %v3404 = vsel %vm1688, %v2974, 0
    %v3407 = vsel %vm1688, %v2975, 0
    %v3410 = vsel %vm1688, %v2976, 0
    %v3413 = vsel %vm1688, %v2977, 0
    %v3416 = vsel %vm1688, %v2978, 0
    %v3419 = vsel %vm1688, %v2979, 0
    %v3422 = vsel %vm1688, %v2980, 0
    %v3425 = vsel %vm1688, %v2981, 0
    %v3428 = vsel %vm1688, %v2982, 0
    %v3431 = vsel %vm1688, %v2983, 0
    %v3434 = vsel %vm1688, %v2984, 0
    %v3437 = vsel %vm1688, %v2985, 0
    %v3440 = vsel %vm1688, %v2986, 0
    %v3443 = vsel %vm1688, %v2987, 0
    %3445 = vmatpush.msra.mxu0 0.0
    %3446 = vmatpush.msra.mxu0 0.0
    %3447 = vmatpush.msra.mxu0 0.0
    %3448 = vmatpush.msra.mxu0 0.0
    %3449 = vmatpush.msra.mxu0 0.0
    %3450 = vmatpush.msra.mxu0 0.0
    %3451 = vmatpush.msra.mxu0 0.0
    %3452 = vmatpush.msra.mxu0 0.0
    %3453 = vmatpush.msra.mxu0 0.0
    %3454 = vmatpush.msra.mxu0 0.0
    %3455 = vmatpush.msra.mxu0 0.0
    %3456 = vmatpush.msra.mxu0 0.0
    %3457 = vmatpush.msra.mxu0 %v2991
    %3458 = vmatpush.msra.mxu0 %v2990
    %3459 = vmatpush.msra.mxu0 %v2989
    %3460 = vmatpush.msra.mxu0 %v2988
    %3461 = vmatmul.f32.gmra.mxu0 %v3302
    %v3462 = vpop.f32.mrf.mxu0
    %v3463 = vadd.f32 %v3158, %v3462
    %3464 = vmatmul.f32.gmra.mxu0 %v3305
    %v3465 = vpop.f32.mrf.mxu0
    %v3466 = vadd.f32 %v3161, %v3465
    %3467 = vmatmul.f32.gmra.mxu0 %v3308
    %v3468 = vpop.f32.mrf.mxu0
    %v3469 = vadd.f32 %v3164, %v3468
    %3470 = vmatmul.f32.gmra.mxu0 %v3311
    %v3471 = vpop.f32.mrf.mxu0
    %v3472 = vadd.f32 %v3167, %v3471
    %3473 = vmatmul.f32.gmra.mxu0 %v3314
    %v3474 = vpop.f32.mrf.mxu0
    %v3475 = vadd.f32 %v3170, %v3474
    %3476 = vmatmul.f32.gmra.mxu0 %v3317
    %v3477 = vpop.f32.mrf.mxu0
    %v3478 = vadd.f32 %v3173, %v3477
    %3479 = vmatmul.f32.gmra.mxu0 %v3320
    %v3480 = vpop.f32.mrf.mxu0
    %v3481 = vadd.f32 %v3176, %v3480
    %3482 = vmatmul.f32.gmra.mxu0 %v3323
    %v3483 = vpop.f32.mrf.mxu0
    %v3484 = vadd.f32 %v3179, %v3483
    %3485 = vmatmul.f32.gmra.mxu0 %v3326
    %v3486 = vpop.f32.mrf.mxu0
    %v3487 = vadd.f32 %v3182, %v3486
    %3488 = vmatmul.f32.gmra.mxu0 %v3329
    %v3489 = vpop.f32.mrf.mxu0
    %v3490 = vadd.f32 %v3185, %v3489
    %3491 = vmatmul.f32.gmra.mxu0 %v3332
    %v3492 = vpop.f32.mrf.mxu0
    %v3493 = vadd.f32 %v3188, %v3492
    %3494 = vmatmul.f32.gmra.mxu0 %v3335
    %v3495 = vpop.f32.mrf.mxu0
    %v3496 = vadd.f32 %v3191, %v3495
    %3497 = vmatmul.f32.gmra.mxu0 %v3338
    %v3498 = vpop.f32.mrf.mxu0
    %v3499 = vadd.f32 %v3194, %v3498
    %3500 = vmatmul.f32.gmra.mxu0 %v3341
    %v3501 = vpop.f32.mrf.mxu0
    %v3502 = vadd.f32 %v3197, %v3501
    %3503 = vmatmul.f32.gmra.mxu0 %v3344
    %v3504 = vpop.f32.mrf.mxu0
    %v3505 = vadd.f32 %v3200, %v3504
    %3506 = vmatmul.f32.gmra.mxu0 %v3347
    %v3507 = vpop.f32.mrf.mxu0
    %v3508 = vadd.f32 %v3203, %v3507
    %3509 = vmatmul.f32.gmra.mxu0 %v3350
    %v3510 = vpop.f32.mrf.mxu0
    %v3511 = vadd.f32 %v3206, %v3510
    %3512 = vmatmul.f32.gmra.mxu0 %v3353
    %v3513 = vpop.f32.mrf.mxu0
    %v3514 = vadd.f32 %v3209, %v3513
    %3515 = vmatmul.f32.gmra.mxu0 %v3356
    %v3516 = vpop.f32.mrf.mxu0
    %v3517 = vadd.f32 %v3212, %v3516
    %3518 = vmatmul.f32.gmra.mxu0 %v3359
    %v3519 = vpop.f32.mrf.mxu0
    %v3520 = vadd.f32 %v3215, %v3519
    %3521 = vmatmul.f32.gmra.mxu0 %v3362
    %v3522 = vpop.f32.mrf.mxu0
    %v3523 = vadd.f32 %v3218, %v3522
    %3524 = vmatmul.f32.gmra.mxu0 %v3365
    %v3525 = vpop.f32.mrf.mxu0
    %v3526 = vadd.f32 %v3221, %v3525
    %3527 = vmatmul.f32.gmra.mxu0 %v3368
    %v3528 = vpop.f32.mrf.mxu0
    %v3529 = vadd.f32 %v3224, %v3528
    %3530 = vmatmul.f32.gmra.mxu0 %v3371
    %v3531 = vpop.f32.mrf.mxu0
    %v3532 = vadd.f32 %v3227, %v3531
    %3533 = vmatmul.f32.gmra.mxu0 %v3374
    %v3534 = vpop.f32.mrf.mxu0
    %v3535 = vadd.f32 %v3230, %v3534
    %3536 = vmatmul.f32.gmra.mxu0 %v3377
    %v3537 = vpop.f32.mrf.mxu0
    %v3538 = vadd.f32 %v3233, %v3537
    %3539 = vmatmul.f32.gmra.mxu0 %v3380
    %v3540 = vpop.f32.mrf.mxu0
    %v3541 = vadd.f32 %v3236, %v3540
    %3542 = vmatmul.f32.gmra.mxu0 %v3383
    %v3543 = vpop.f32.mrf.mxu0
    %v3544 = vadd.f32 %v3239, %v3543
    %3545 = vmatmul.f32.gmra.mxu0 %v3386
    %v3546 = vpop.f32.mrf.mxu0
    %v3547 = vadd.f32 %v3242, %v3546
    %3548 = vmatmul.f32.gmra.mxu0 %v3389
    %v3549 = vpop.f32.mrf.mxu0
    %v3550 = vadd.f32 %v3245, %v3549
    %3551 = vmatmul.f32.gmra.mxu0 %v3392
    %v3552 = vpop.f32.mrf.mxu0
    %v3553 = vadd.f32 %v3248, %v3552
    %3554 = vmatmul.f32.gmra.mxu0 %v3395
    %v3555 = vpop.f32.mrf.mxu0
    %v3556 = vadd.f32 %v3251, %v3555
    %3557 = vmatmul.f32.gmra.mxu0 %v3398
    %v3558 = vpop.f32.mrf.mxu0
    %v3559 = vadd.f32 %v3254, %v3558
    %3560 = vmatmul.f32.gmra.mxu0 %v3401
    %v3561 = vpop.f32.mrf.mxu0
    %v3562 = vadd.f32 %v3257, %v3561
    %3563 = vmatmul.f32.gmra.mxu0 %v3404
    %v3564 = vpop.f32.mrf.mxu0
    %v3565 = vadd.f32 %v3260, %v3564
    %3566 = vmatmul.f32.gmra.mxu0 %v3407
    %v3567 = vpop.f32.mrf.mxu0
    %v3568 = vadd.f32 %v3263, %v3567
    %3569 = vmatmul.f32.gmra.mxu0 %v3410
    %v3570 = vpop.f32.mrf.mxu0
    %v3571 = vadd.f32 %v3266, %v3570
    %3572 = vmatmul.f32.gmra.mxu0 %v3413
    %v3573 = vpop.f32.mrf.mxu0
    %v3574 = vadd.f32 %v3269, %v3573
    %3575 = vmatmul.f32.gmra.mxu0 %v3416
    %v3576 = vpop.f32.mrf.mxu0
    %v3577 = vadd.f32 %v3272, %v3576
    %3578 = vmatmul.f32.gmra.mxu0 %v3419
    %v3579 = vpop.f32.mrf.mxu0
    %v3580 = vadd.f32 %v3275, %v3579
    %3581 = vmatmul.f32.gmra.mxu0 %v3422
    %v3582 = vpop.f32.mrf.mxu0
    %v3583 = vadd.f32 %v3278, %v3582
    %3584 = vmatmul.f32.gmra.mxu0 %v3425
    %v3585 = vpop.f32.mrf.mxu0
    %v3586 = vadd.f32 %v3281, %v3585
    %3587 = vmatmul.f32.gmra.mxu0 %v3428
    %v3588 = vpop.f32.mrf.mxu0
    %v3589 = vadd.f32 %v3284, %v3588
    %3590 = vmatmul.f32.gmra.mxu0 %v3431
    %v3591 = vpop.f32.mrf.mxu0
    %v3592 = vadd.f32 %v3287, %v3591
    %3593 = vmatmul.f32.gmra.mxu0 %v3434
    %v3594 = vpop.f32.mrf.mxu0
    %v3595 = vadd.f32 %v3290, %v3594
    %3596 = vmatmul.f32.gmra.mxu0 %v3437
    %v3597 = vpop.f32.mrf.mxu0
    %v3598 = vadd.f32 %v3293, %v3597
    %3599 = vmatmul.f32.gmra.mxu0 %v3440
    %v3600 = vpop.f32.mrf.mxu0
    %v3601 = vadd.f32 %v3296, %v3600
    %3602 = vmatmul.f32.gmra.mxu0 %v3443
    %v3603 = vpop.f32.mrf.mxu0
    %v3604 = vadd.f32 %v3299, %v3603
    %3605 = vdwg.mxu0
    %v3606 = vld [vmem:[%s5] sm:$0x1]
    %v3608 = vperm.slane %v3606, 0
    %v3610 = vadd.f32 %v3463, %v3608
    %v3611 = vadd.f32 %v3466, %v3608
    %v3612 = vadd.f32 %v3469, %v3608
    %v3613 = vadd.f32 %v3472, %v3608
    %v3614 = vadd.f32 %v3475, %v3608
    %v3615 = vadd.f32 %v3478, %v3608
    %v3616 = vadd.f32 %v3481, %v3608
    %v3617 = vadd.f32 %v3484, %v3608
    %v3618 = vadd.f32 %v3487, %v3608
    %v3619 = vadd.f32 %v3490, %v3608
    %v3620 = vadd.f32 %v3493, %v3608
    %v3621 = vadd.f32 %v3496, %v3608
    %v3622 = vadd.f32 %v3499, %v3608
    %v3623 = vadd.f32 %v3502, %v3608
    %v3624 = vadd.f32 %v3505, %v3608
    %v3625 = vadd.f32 %v3508, %v3608
    %v3626 = vadd.f32 %v3511, %v3608
    %v3627 = vadd.f32 %v3514, %v3608
    %v3628 = vadd.f32 %v3517, %v3608
    %v3629 = vadd.f32 %v3520, %v3608
    %v3630 = vadd.f32 %v3523, %v3608
    %v3631 = vadd.f32 %v3526, %v3608
    %v3632 = vadd.f32 %v3529, %v3608
    %v3633 = vadd.f32 %v3532, %v3608
    %v3634 = vadd.f32 %v3535, %v3608
    %v3635 = vadd.f32 %v3538, %v3608
    %v3636 = vadd.f32 %v3541, %v3608
    %v3637 = vadd.f32 %v3544, %v3608
    %v3638 = vadd.f32 %v3547, %v3608
    %v3639 = vadd.f32 %v3550, %v3608
    %v3640 = vadd.f32 %v3553, %v3608
    %v3641 = vadd.f32 %v3556, %v3608
    %v3642 = vadd.f32 %v3559, %v3608
    %v3643 = vadd.f32 %v3562, %v3608
    %v3644 = vadd.f32 %v3565, %v3608
    %v3645 = vadd.f32 %v3568, %v3608
    %v3646 = vadd.f32 %v3571, %v3608
    %v3647 = vadd.f32 %v3574, %v3608
    %v3648 = vadd.f32 %v3577, %v3608
    %v3649 = vadd.f32 %v3580, %v3608
    %v3650 = vadd.f32 %v3583, %v3608
    %v3651 = vadd.f32 %v3586, %v3608
    %v3652 = vadd.f32 %v3589, %v3608
    %v3653 = vadd.f32 %v3592, %v3608
    %v3654 = vadd.f32 %v3595, %v3608
    %v3655 = vadd.f32 %v3598, %v3608
    %v3656 = vadd.f32 %v3601, %v3608
    %v3657 = vadd.f32 %v3604, %v3608
    %v3658 = vmul.f32 %v3610, 0.5
    %v3659 = vmul.f32 %v3611, 0.5
    %v3660 = vmul.f32 %v3612, 0.5
    %v3661 = vmul.f32 %v3613, 0.5
    %v3662 = vmul.f32 %v3614, 0.5
    %v3663 = vmul.f32 %v3615, 0.5
    %v3664 = vmul.f32 %v3616, 0.5
    %v3665 = vmul.f32 %v3617, 0.5
    %v3666 = vmul.f32 %v3618, 0.5
    %v3667 = vmul.f32 %v3619, 0.5
    %v3668 = vmul.f32 %v3620, 0.5
    %v3669 = vmul.f32 %v3621, 0.5
    %v3670 = vmul.f32 %v3622, 0.5
    %v3671 = vmul.f32 %v3623, 0.5
    %v3672 = vmul.f32 %v3624, 0.5
    %v3673 = vmul.f32 %v3625, 0.5
    %v3674 = vmul.f32 %v3626, 0.5
    %v3675 = vmul.f32 %v3627, 0.5
    %v3676 = vmul.f32 %v3628, 0.5
    %v3677 = vmul.f32 %v3629, 0.5
    %v3678 = vmul.f32 %v3630, 0.5
    %v3679 = vmul.f32 %v3631, 0.5
    %v3680 = vmul.f32 %v3632, 0.5
    %v3681 = vmul.f32 %v3633, 0.5
    %v3682 = vmul.f32 %v3634, 0.5
    %v3683 = vmul.f32 %v3635, 0.5
    %v3684 = vmul.f32 %v3636, 0.5
    %v3685 = vmul.f32 %v3637, 0.5
    %v3686 = vmul.f32 %v3638, 0.5
    %v3687 = vmul.f32 %v3639, 0.5
    %v3688 = vmul.f32 %v3640, 0.5
    %v3689 = vmul.f32 %v3641, 0.5
    %v3690 = vmul.f32 %v3642, 0.5
    %v3691 = vmul.f32 %v3643, 0.5
    %v3692 = vmul.f32 %v3644, 0.5
    %v3693 = vmul.f32 %v3645, 0.5
    %v3694 = vmul.f32 %v3646, 0.5
    %v3695 = vmul.f32 %v3647, 0.5
    %v3696 = vmul.f32 %v3648, 0.5
    %v3697 = vmul.f32 %v3649, 0.5
    %v3698 = vmul.f32 %v3650, 0.5
    %v3699 = vmul.f32 %v3651, 0.5
    %v3700 = vmul.f32 %v3652, 0.5
    %v3701 = vmul.f32 %v3653, 0.5
    %v3702 = vmul.f32 %v3654, 0.5
    %v3703 = vmul.f32 %v3655, 0.5
    %v3704 = vmul.f32 %v3656, 0.5
    %v3705 = vmul.f32 %v3657, 0.5
    %v3706 = vmul.f32 %v3610, 0.70710677
    %v3707 = vmul.f32 %v3611, 0.70710677
    %v3708 = vmul.f32 %v3612, 0.70710677
    %v3709 = vmul.f32 %v3613, 0.70710677
    %v3710 = vmul.f32 %v3614, 0.70710677
    %v3711 = vmul.f32 %v3615, 0.70710677
    %v3712 = vmul.f32 %v3616, 0.70710677
    %v3713 = vmul.f32 %v3617, 0.70710677
    %v3714 = vmul.f32 %v3618, 0.70710677
    %v3715 = vmul.f32 %v3619, 0.70710677
    %v3716 = vmul.f32 %v3620, 0.70710677
    %v3717 = vmul.f32 %v3621, 0.70710677
    %v3718 = vmul.f32 %v3622, 0.70710677
    %v3719 = vmul.f32 %v3623, 0.70710677
    %v3720 = vmul.f32 %v3624, 0.70710677
    %v3721 = vmul.f32 %v3625, 0.70710677
    %v3722 = vmul.f32 %v3626, 0.70710677
    %v3723 = vmul.f32 %v3627, 0.70710677
    %v3724 = vmul.f32 %v3628, 0.70710677
    %v3725 = vmul.f32 %v3629, 0.70710677
    %v3726 = vmul.f32 %v3630, 0.70710677
    %v3727 = vmul.f32 %v3631, 0.70710677
    %v3728 = vmul.f32 %v3632, 0.70710677
    %v3729 = vmul.f32 %v3633, 0.70710677
    %v3730 = vmul.f32 %v3634, 0.70710677
    %v3731 = vmul.f32 %v3635, 0.70710677
    %v3732 = vmul.f32 %v3636, 0.70710677
    %v3733 = vmul.f32 %v3637, 0.70710677
    %v3734 = vmul.f32 %v3638, 0.70710677
    %v3735 = vmul.f32 %v3639, 0.70710677
    %v3736 = vmul.f32 %v3640, 0.70710677
    %v3737 = vmul.f32 %v3641, 0.70710677
    %v3738 = vmul.f32 %v3642, 0.70710677
    %v3739 = vmul.f32 %v3643, 0.70710677
    %v3740 = vmul.f32 %v3644, 0.70710677
    %v3741 = vmul.f32 %v3645, 0.70710677
    %v3742 = vmul.f32 %v3646, 0.70710677
    %v3743 = vmul.f32 %v3647, 0.70710677
    %v3744 = vmul.f32 %v3648, 0.70710677
    %v3745 = vmul.f32 %v3649, 0.70710677
    %v3746 = vmul.f32 %v3650, 0.70710677
    %v3747 = vmul.f32 %v3651, 0.70710677
    %v3748 = vmul.f32 %v3652, 0.70710677
    %v3749 = vmul.f32 %v3653, 0.70710677
    %v3750 = vmul.f32 %v3654, 0.70710677
    %v3751 = vmul.f32 %v3655, 0.70710677
    %v3752 = vmul.f32 %v3656, 0.70710677
    %v3753 = vmul.f32 %v3657, 0.70710677
    %v3754 = vmul.f32 %v3706, %v3706
    %v3755 = vmin.f32 16.0, %v3754
    %v3756 = vmul.f32 %v3755, 2.1237322e-06
    %v3757 = vadd.f32 %v3756, 0.00028619796
    %v3758 = vmul.f32 %v3755, %v3757
    %v3759 = vadd.f32 %v3758, 0.0036580483
    %v3760 = vmul.f32 %v3755, %v3759
    %v3761 = vadd.f32 %v3760, 0.05243302
    %v3762 = vmul.f32 %v3755, %v3761
    %v3763 = vadd.f32 %v3762, 0.18741608
    %v3764 = vmul.f32 %v3755, %v3763
    %v3765 = vadd.f32 %v3764, 1.1283791
    %v3766 = vmul.f32 %v3706, %v3765
    %v3767 = vmul.f32 %v3755, 3.8918573e-05
    %v3768 = vadd.f32 %v3767, 0.001143296
    %v3769 = vmul.f32 %v3755, %v3768
    %v3770 = vadd.f32 %v3769, 0.014752088
    %v3771 = vmul.f32 %v3755, %v3770
    %v3772 = vadd.f32 %v3771, 0.112945676
    %v3773 = vmul.f32 %v3755, %v3772
    %v3774 = vadd.f32 %v3773, 0.4994258
    %v3775 = vmul.f32 %v3755, %v3774
    %v3776 = vadd.f32 %v3775, 1.0
    %v3777 = vrcp.pop %v3776
    %v3778 = vmul.f32 %v3776, %v3777
    %v3779 = vsub.f32 1.0, %v3778
    %v3780 = vmul.f32 %v3777, %v3779
    %v3781 = vadd.f32 %v3777, %v3780
    %vm3782 = vweird.f32 %v3776
    %vm3783 = vweird.f32 %v3777
    %vm3784 = vmor %vm3782, %vm3783
    %v3785 = vsel %vm3784, %v3777, %v3781
    %v3786 = vand.u32 2147483647, %v3776
    %vm3787 = vcmp.eq.f32.partialorder %v3786, 8.507059e+37
    %v3788 = vand.u32 %v3776, 2147483648
    %v3789 = vor.u32 1.1754944e-38, %v3788
    %v3790 = vsel %vm3787, %v3789, %v3785
    %v3791 = vmul.f32 %v3766, %v3790
    %v3792 = vmin.f32 %v3791, 1.0
    %v3793 = vmax.f32 %v3792, -1.0
    %v3794 = vmul.f32 %v3707, %v3707
    %v3795 = vmin.f32 16.0, %v3794
    %v3796 = vmul.f32 %v3795, 2.1237322e-06
    %v3797 = vadd.f32 %v3796, 0.00028619796
    %v3798 = vmul.f32 %v3795, %v3797
    %v3799 = vadd.f32 %v3798, 0.0036580483
    %v3800 = vmul.f32 %v3795, %v3799
    %v3801 = vadd.f32 %v3800, 0.05243302
    %v3802 = vmul.f32 %v3795, %v3801
    %v3803 = vadd.f32 %v3802, 0.18741608
    %v3804 = vmul.f32 %v3795, %v3803
    %v3805 = vadd.f32 %v3804, 1.1283791
    %v3806 = vmul.f32 %v3707, %v3805
    %v3807 = vmul.f32 %v3795, 3.8918573e-05
    %v3808 = vadd.f32 %v3807, 0.001143296
    %v3809 = vmul.f32 %v3795, %v3808
    %v3810 = vadd.f32 %v3809, 0.014752088
    %v3811 = vmul.f32 %v3795, %v3810
    %v3812 = vadd.f32 %v3811, 0.112945676
    %v3813 = vmul.f32 %v3795, %v3812
    %v3814 = vadd.f32 %v3813, 0.4994258
    %v3815 = vmul.f32 %v3795, %v3814
    %v3816 = vadd.f32 %v3815, 1.0
    %v3817 = vrcp.pop %v3816
    %v3818 = vmul.f32 %v3816, %v3817
    %v3819 = vsub.f32 1.0, %v3818
    %v3820 = vmul.f32 %v3817, %v3819
    %v3821 = vadd.f32 %v3817, %v3820
    %vm3822 = vweird.f32 %v3816
    %vm3823 = vweird.f32 %v3817
    %vm3824 = vmor %vm3822, %vm3823
    %v3825 = vsel %vm3824, %v3817, %v3821
    %v3826 = vand.u32 2147483647, %v3816
    %vm3827 = vcmp.eq.f32.partialorder %v3826, 8.507059e+37
    %v3828 = vand.u32 %v3816, 2147483648
    %v3829 = vor.u32 1.1754944e-38, %v3828
    %v3830 = vsel %vm3827, %v3829, %v3825
    %v3831 = vmul.f32 %v3806, %v3830
    %v3832 = vmin.f32 %v3831, 1.0
    %v3833 = vmax.f32 %v3832, -1.0
    %v3834 = vmul.f32 %v3708, %v3708
    %v3835 = vmin.f32 16.0, %v3834
    %v3836 = vmul.f32 %v3835, 2.1237322e-06
    %v3837 = vadd.f32 %v3836, 0.00028619796
    %v3838 = vmul.f32 %v3835, %v3837
    %v3839 = vadd.f32 %v3838, 0.0036580483
    %v3840 = vmul.f32 %v3835, %v3839
    %v3841 = vadd.f32 %v3840, 0.05243302
    %v3842 = vmul.f32 %v3835, %v3841
    %v3843 = vadd.f32 %v3842, 0.18741608
    %v3844 = vmul.f32 %v3835, %v3843
    %v3845 = vadd.f32 %v3844, 1.1283791
    %v3846 = vmul.f32 %v3708, %v3845
    %v3847 = vmul.f32 %v3835, 3.8918573e-05
    %v3848 = vadd.f32 %v3847, 0.001143296
    %v3849 = vmul.f32 %v3835, %v3848
    %v3850 = vadd.f32 %v3849, 0.014752088
    %v3851 = vmul.f32 %v3835, %v3850
    %v3852 = vadd.f32 %v3851, 0.112945676
    %v3853 = vmul.f32 %v3835, %v3852
    %v3854 = vadd.f32 %v3853, 0.4994258
    %v3855 = vmul.f32 %v3835, %v3854
    %v3856 = vadd.f32 %v3855, 1.0
    %v3857 = vrcp.pop %v3856
    %v3858 = vmul.f32 %v3856, %v3857
    %v3859 = vsub.f32 1.0, %v3858
    %v3860 = vmul.f32 %v3857, %v3859
    %v3861 = vadd.f32 %v3857, %v3860
    %vm3862 = vweird.f32 %v3856
    %vm3863 = vweird.f32 %v3857
    %vm3864 = vmor %vm3862, %vm3863
    %v3865 = vsel %vm3864, %v3857, %v3861
    %v3866 = vand.u32 2147483647, %v3856
    %vm3867 = vcmp.eq.f32.partialorder %v3866, 8.507059e+37
    %v3868 = vand.u32 %v3856, 2147483648
    %v3869 = vor.u32 1.1754944e-38, %v3868
    %v3870 = vsel %vm3867, %v3869, %v3865
    %v3871 = vmul.f32 %v3846, %v3870
    %v3872 = vmin.f32 %v3871, 1.0
    %v3873 = vmax.f32 %v3872, -1.0
    %v3874 = vmul.f32 %v3709, %v3709
    %v3875 = vmin.f32 16.0, %v3874
    %v3876 = vmul.f32 %v3875, 2.1237322e-06
    %v3877 = vadd.f32 %v3876, 0.00028619796
    %v3878 = vmul.f32 %v3875, %v3877
    %v3879 = vadd.f32 %v3878, 0.0036580483
    %v3880 = vmul.f32 %v3875, %v3879
    %v3881 = vadd.f32 %v3880, 0.05243302
    %v3882 = vmul.f32 %v3875, %v3881
    %v3883 = vadd.f32 %v3882, 0.18741608
    %v3884 = vmul.f32 %v3875, %v3883
    %v3885 = vadd.f32 %v3884, 1.1283791
    %v3886 = vmul.f32 %v3709, %v3885
    %v3887 = vmul.f32 %v3875, 3.8918573e-05
    %v3888 = vadd.f32 %v3887, 0.001143296
    %v3889 = vmul.f32 %v3875, %v3888
    %v3890 = vadd.f32 %v3889, 0.014752088
    %v3891 = vmul.f32 %v3875, %v3890
    %v3892 = vadd.f32 %v3891, 0.112945676
    %v3893 = vmul.f32 %v3875, %v3892
    %v3894 = vadd.f32 %v3893, 0.4994258
    %v3895 = vmul.f32 %v3875, %v3894
    %v3896 = vadd.f32 %v3895, 1.0
    %v3897 = vrcp.pop %v3896
    %v3898 = vmul.f32 %v3896, %v3897
    %v3899 = vsub.f32 1.0, %v3898
    %v3900 = vmul.f32 %v3897, %v3899
    %v3901 = vadd.f32 %v3897, %v3900
    %vm3902 = vweird.f32 %v3896
    %vm3903 = vweird.f32 %v3897
    %vm3904 = vmor %vm3902, %vm3903
    %v3905 = vsel %vm3904, %v3897, %v3901
    %v3906 = vand.u32 2147483647, %v3896
    %vm3907 = vcmp.eq.f32.partialorder %v3906, 8.507059e+37
    %v3908 = vand.u32 %v3896, 2147483648
    %v3909 = vor.u32 1.1754944e-38, %v3908
    %v3910 = vsel %vm3907, %v3909, %v3905
    %v3911 = vmul.f32 %v3886, %v3910
    %v3912 = vmin.f32 %v3911, 1.0
    %v3913 = vmax.f32 %v3912, -1.0
    %v3914 = vmul.f32 %v3710, %v3710
    %v3915 = vmin.f32 16.0, %v3914
    %v3916 = vmul.f32 %v3915, 2.1237322e-06
    %v3917 = vadd.f32 %v3916, 0.00028619796
    %v3918 = vmul.f32 %v3915, %v3917
    %v3919 = vadd.f32 %v3918, 0.0036580483
    %v3920 = vmul.f32 %v3915, %v3919
    %v3921 = vadd.f32 %v3920, 0.05243302
    %v3922 = vmul.f32 %v3915, %v3921
    %v3923 = vadd.f32 %v3922, 0.18741608
    %v3924 = vmul.f32 %v3915, %v3923
    %v3925 = vadd.f32 %v3924, 1.1283791
    %v3926 = vmul.f32 %v3710, %v3925
    %v3927 = vmul.f32 %v3915, 3.8918573e-05
    %v3928 = vadd.f32 %v3927, 0.001143296
    %v3929 = vmul.f32 %v3915, %v3928
    %v3930 = vadd.f32 %v3929, 0.014752088
    %v3931 = vmul.f32 %v3915, %v3930
    %v3932 = vadd.f32 %v3931, 0.112945676
    %v3933 = vmul.f32 %v3915, %v3932
    %v3934 = vadd.f32 %v3933, 0.4994258
    %v3935 = vmul.f32 %v3915, %v3934
    %v3936 = vadd.f32 %v3935, 1.0
    %v3937 = vrcp.pop %v3936
    %v3938 = vmul.f32 %v3936, %v3937
    %v3939 = vsub.f32 1.0, %v3938
    %v3940 = vmul.f32 %v3937, %v3939
    %v3941 = vadd.f32 %v3937, %v3940
    %vm3942 = vweird.f32 %v3936
    %vm3943 = vweird.f32 %v3937
    %vm3944 = vmor %vm3942, %vm3943
    %v3945 = vsel %vm3944, %v3937, %v3941
    %v3946 = vand.u32 2147483647, %v3936
    %vm3947 = vcmp.eq.f32.partialorder %v3946, 8.507059e+37
    %v3948 = vand.u32 %v3936, 2147483648
    %v3949 = vor.u32 1.1754944e-38, %v3948
    %v3950 = vsel %vm3947, %v3949, %v3945
    %v3951 = vmul.f32 %v3926, %v3950
    %v3952 = vmin.f32 %v3951, 1.0
    %v3953 = vmax.f32 %v3952, -1.0
    %v3954 = vmul.f32 %v3711, %v3711
    %v3955 = vmin.f32 16.0, %v3954
    %v3956 = vmul.f32 %v3955, 2.1237322e-06
    %v3957 = vadd.f32 %v3956, 0.00028619796
    %v3958 = vmul.f32 %v3955, %v3957
    %v3959 = vadd.f32 %v3958, 0.0036580483
    %v3960 = vmul.f32 %v3955, %v3959
    %v3961 = vadd.f32 %v3960, 0.05243302
    %v3962 = vmul.f32 %v3955, %v3961
    %v3963 = vadd.f32 %v3962, 0.18741608
    %v3964 = vmul.f32 %v3955, %v3963
    %v3965 = vadd.f32 %v3964, 1.1283791
    %v3966 = vmul.f32 %v3711, %v3965
    %v3967 = vmul.f32 %v3955, 3.8918573e-05
    %v3968 = vadd.f32 %v3967, 0.001143296
    %v3969 = vmul.f32 %v3955, %v3968
    %v3970 = vadd.f32 %v3969, 0.014752088
    %v3971 = vmul.f32 %v3955, %v3970
    %v3972 = vadd.f32 %v3971, 0.112945676
    %v3973 = vmul.f32 %v3955, %v3972
    %v3974 = vadd.f32 %v3973, 0.4994258
    %v3975 = vmul.f32 %v3955, %v3974
    %v3976 = vadd.f32 %v3975, 1.0
    %v3977 = vrcp.pop %v3976
    %v3978 = vmul.f32 %v3976, %v3977
    %v3979 = vsub.f32 1.0, %v3978
    %v3980 = vmul.f32 %v3977, %v3979
    %v3981 = vadd.f32 %v3977, %v3980
    %vm3982 = vweird.f32 %v3976
    %vm3983 = vweird.f32 %v3977
    %vm3984 = vmor %vm3982, %vm3983
    %v3985 = vsel %vm3984, %v3977, %v3981
    %v3986 = vand.u32 2147483647, %v3976
    %vm3987 = vcmp.eq.f32.partialorder %v3986, 8.507059e+37
    %v3988 = vand.u32 %v3976, 2147483648
    %v3989 = vor.u32 1.1754944e-38, %v3988
    %v3990 = vsel %vm3987, %v3989, %v3985
    %v3991 = vmul.f32 %v3966, %v3990
    %v3992 = vmin.f32 %v3991, 1.0
    %v3993 = vmax.f32 %v3992, -1.0
    %v3994 = vmul.f32 %v3712, %v3712
    %v3995 = vmin.f32 16.0, %v3994
    %v3996 = vmul.f32 %v3995, 2.1237322e-06
    %v3997 = vadd.f32 %v3996, 0.00028619796
    %v3998 = vmul.f32 %v3995, %v3997
    %v3999 = vadd.f32 %v3998, 0.0036580483
    %v4000 = vmul.f32 %v3995, %v3999
    %v4001 = vadd.f32 %v4000, 0.05243302
    %v4002 = vmul.f32 %v3995, %v4001
    %v4003 = vadd.f32 %v4002, 0.18741608
    %v4004 = vmul.f32 %v3995, %v4003
    %v4005 = vadd.f32 %v4004, 1.1283791
    %v4006 = vmul.f32 %v3712, %v4005
    %v4007 = vmul.f32 %v3995, 3.8918573e-05
    %v4008 = vadd.f32 %v4007, 0.001143296
    %v4009 = vmul.f32 %v3995, %v4008
    %v4010 = vadd.f32 %v4009, 0.014752088
    %v4011 = vmul.f32 %v3995, %v4010
    %v4012 = vadd.f32 %v4011, 0.112945676
    %v4013 = vmul.f32 %v3995, %v4012
    %v4014 = vadd.f32 %v4013, 0.4994258
    %v4015 = vmul.f32 %v3995, %v4014
    %v4016 = vadd.f32 %v4015, 1.0
    %v4017 = vrcp.pop %v4016
    %v4018 = vmul.f32 %v4016, %v4017
    %v4019 = vsub.f32 1.0, %v4018
    %v4020 = vmul.f32 %v4017, %v4019
    %v4021 = vadd.f32 %v4017, %v4020
    %vm4022 = vweird.f32 %v4016
    %vm4023 = vweird.f32 %v4017
    %vm4024 = vmor %vm4022, %vm4023
    %v4025 = vsel %vm4024, %v4017, %v4021
    %v4026 = vand.u32 2147483647, %v4016
    %vm4027 = vcmp.eq.f32.partialorder %v4026, 8.507059e+37
    %v4028 = vand.u32 %v4016, 2147483648
    %v4029 = vor.u32 1.1754944e-38, %v4028
    %v4030 = vsel %vm4027, %v4029, %v4025
    %v4031 = vmul.f32 %v4006, %v4030
    %v4032 = vmin.f32 %v4031, 1.0
    %v4033 = vmax.f32 %v4032, -1.0
    %v4034 = vmul.f32 %v3713, %v3713
    %v4035 = vmin.f32 16.0, %v4034
    %v4036 = vmul.f32 %v4035, 2.1237322e-06
    %v4037 = vadd.f32 %v4036, 0.00028619796
    %v4038 = vmul.f32 %v4035, %v4037
    %v4039 = vadd.f32 %v4038, 0.0036580483
    %v4040 = vmul.f32 %v4035, %v4039
    %v4041 = vadd.f32 %v4040, 0.05243302
    %v4042 = vmul.f32 %v4035, %v4041
    %v4043 = vadd.f32 %v4042, 0.18741608
    %v4044 = vmul.f32 %v4035, %v4043
    %v4045 = vadd.f32 %v4044, 1.1283791
    %v4046 = vmul.f32 %v3713, %v4045
    %v4047 = vmul.f32 %v4035, 3.8918573e-05
    %v4048 = vadd.f32 %v4047, 0.001143296
    %v4049 = vmul.f32 %v4035, %v4048
    %v4050 = vadd.f32 %v4049, 0.014752088
    %v4051 = vmul.f32 %v4035, %v4050
    %v4052 = vadd.f32 %v4051, 0.112945676
    %v4053 = vmul.f32 %v4035, %v4052
    %v4054 = vadd.f32 %v4053, 0.4994258
    %v4055 = vmul.f32 %v4035, %v4054
    %v4056 = vadd.f32 %v4055, 1.0
    %v4057 = vrcp.pop %v4056
    %v4058 = vmul.f32 %v4056, %v4057
    %v4059 = vsub.f32 1.0, %v4058
    %v4060 = vmul.f32 %v4057, %v4059
    %v4061 = vadd.f32 %v4057, %v4060
    %vm4062 = vweird.f32 %v4056
    %vm4063 = vweird.f32 %v4057
    %vm4064 = vmor %vm4062, %vm4063
    %v4065 = vsel %vm4064, %v4057, %v4061
    %v4066 = vand.u32 2147483647, %v4056
    %vm4067 = vcmp.eq.f32.partialorder %v4066, 8.507059e+37
    %v4068 = vand.u32 %v4056, 2147483648
    %v4069 = vor.u32 1.1754944e-38, %v4068
    %v4070 = vsel %vm4067, %v4069, %v4065
    %v4071 = vmul.f32 %v4046, %v4070
    %v4072 = vmin.f32 %v4071, 1.0
    %v4073 = vmax.f32 %v4072, -1.0
    %v4074 = vmul.f32 %v3714, %v3714
    %v4075 = vmin.f32 16.0, %v4074
    %v4076 = vmul.f32 %v4075, 2.1237322e-06
    %v4077 = vadd.f32 %v4076, 0.00028619796
    %v4078 = vmul.f32 %v4075, %v4077
    %v4079 = vadd.f32 %v4078, 0.0036580483
    %v4080 = vmul.f32 %v4075, %v4079
    %v4081 = vadd.f32 %v4080, 0.05243302
    %v4082 = vmul.f32 %v4075, %v4081
    %v4083 = vadd.f32 %v4082, 0.18741608
    %v4084 = vmul.f32 %v4075, %v4083
    %v4085 = vadd.f32 %v4084, 1.1283791
    %v4086 = vmul.f32 %v3714, %v4085
    %v4087 = vmul.f32 %v4075, 3.8918573e-05
    %v4088 = vadd.f32 %v4087, 0.001143296
    %v4089 = vmul.f32 %v4075, %v4088
    %v4090 = vadd.f32 %v4089, 0.014752088
    %v4091 = vmul.f32 %v4075, %v4090
    %v4092 = vadd.f32 %v4091, 0.112945676
    %v4093 = vmul.f32 %v4075, %v4092
    %v4094 = vadd.f32 %v4093, 0.4994258
    %v4095 = vmul.f32 %v4075, %v4094
    %v4096 = vadd.f32 %v4095, 1.0
    %v4097 = vrcp.pop %v4096
    %v4098 = vmul.f32 %v4096, %v4097
    %v4099 = vsub.f32 1.0, %v4098
    %v4100 = vmul.f32 %v4097, %v4099
    %v4101 = vadd.f32 %v4097, %v4100
    %vm4102 = vweird.f32 %v4096
    %vm4103 = vweird.f32 %v4097
    %vm4104 = vmor %vm4102, %vm4103
    %v4105 = vsel %vm4104, %v4097, %v4101
    %v4106 = vand.u32 2147483647, %v4096
    %vm4107 = vcmp.eq.f32.partialorder %v4106, 8.507059e+37
    %v4108 = vand.u32 %v4096, 2147483648
    %v4109 = vor.u32 1.1754944e-38, %v4108
    %v4110 = vsel %vm4107, %v4109, %v4105
    %v4111 = vmul.f32 %v4086, %v4110
    %v4112 = vmin.f32 %v4111, 1.0
    %v4113 = vmax.f32 %v4112, -1.0
    %v4114 = vmul.f32 %v3715, %v3715
    %v4115 = vmin.f32 16.0, %v4114
    %v4116 = vmul.f32 %v4115, 2.1237322e-06
    %v4117 = vadd.f32 %v4116, 0.00028619796
    %v4118 = vmul.f32 %v4115, %v4117
    %v4119 = vadd.f32 %v4118, 0.0036580483
    %v4120 = vmul.f32 %v4115, %v4119
    %v4121 = vadd.f32 %v4120, 0.05243302
    %v4122 = vmul.f32 %v4115, %v4121
    %v4123 = vadd.f32 %v4122, 0.18741608
    %v4124 = vmul.f32 %v4115, %v4123
    %v4125 = vadd.f32 %v4124, 1.1283791
    %v4126 = vmul.f32 %v3715, %v4125
    %v4127 = vmul.f32 %v4115, 3.8918573e-05
    %v4128 = vadd.f32 %v4127, 0.001143296
    %v4129 = vmul.f32 %v4115, %v4128
    %v4130 = vadd.f32 %v4129, 0.014752088
    %v4131 = vmul.f32 %v4115, %v4130
    %v4132 = vadd.f32 %v4131, 0.112945676
    %v4133 = vmul.f32 %v4115, %v4132
    %v4134 = vadd.f32 %v4133, 0.4994258
    %v4135 = vmul.f32 %v4115, %v4134
    %v4136 = vadd.f32 %v4135, 1.0
    %v4137 = vrcp.pop %v4136
    %v4138 = vmul.f32 %v4136, %v4137
    %v4139 = vsub.f32 1.0, %v4138
    %v4140 = vmul.f32 %v4137, %v4139
    %v4141 = vadd.f32 %v4137, %v4140
    %vm4142 = vweird.f32 %v4136
    %vm4143 = vweird.f32 %v4137
    %vm4144 = vmor %vm4142, %vm4143
    %v4145 = vsel %vm4144, %v4137, %v4141
    %v4146 = vand.u32 2147483647, %v4136
    %vm4147 = vcmp.eq.f32.partialorder %v4146, 8.507059e+37
    %v4148 = vand.u32 %v4136, 2147483648
    %v4149 = vor.u32 1.1754944e-38, %v4148
    %v4150 = vsel %vm4147, %v4149, %v4145
    %v4151 = vmul.f32 %v4126, %v4150
    %v4152 = vmin.f32 %v4151, 1.0
    %v4153 = vmax.f32 %v4152, -1.0
    %v4154 = vmul.f32 %v3716, %v3716
    %v4155 = vmin.f32 16.0, %v4154
    %v4156 = vmul.f32 %v4155, 2.1237322e-06
    %v4157 = vadd.f32 %v4156, 0.00028619796
    %v4158 = vmul.f32 %v4155, %v4157
    %v4159 = vadd.f32 %v4158, 0.0036580483
    %v4160 = vmul.f32 %v4155, %v4159
    %v4161 = vadd.f32 %v4160, 0.05243302
    %v4162 = vmul.f32 %v4155, %v4161
    %v4163 = vadd.f32 %v4162, 0.18741608
    %v4164 = vmul.f32 %v4155, %v4163
    %v4165 = vadd.f32 %v4164, 1.1283791
    %v4166 = vmul.f32 %v3716, %v4165
    %v4167 = vmul.f32 %v4155, 3.8918573e-05
    %v4168 = vadd.f32 %v4167, 0.001143296
    %v4169 = vmul.f32 %v4155, %v4168
    %v4170 = vadd.f32 %v4169, 0.014752088
    %v4171 = vmul.f32 %v4155, %v4170
    %v4172 = vadd.f32 %v4171, 0.112945676
    %v4173 = vmul.f32 %v4155, %v4172
    %v4174 = vadd.f32 %v4173, 0.4994258
    %v4175 = vmul.f32 %v4155, %v4174
    %v4176 = vadd.f32 %v4175, 1.0
    %v4177 = vrcp.pop %v4176
    %v4178 = vmul.f32 %v4176, %v4177
    %v4179 = vsub.f32 1.0, %v4178
    %v4180 = vmul.f32 %v4177, %v4179
    %v4181 = vadd.f32 %v4177, %v4180
    %vm4182 = vweird.f32 %v4176
    %vm4183 = vweird.f32 %v4177
    %vm4184 = vmor %vm4182, %vm4183
    %v4185 = vsel %vm4184, %v4177, %v4181
    %v4186 = vand.u32 2147483647, %v4176
    %vm4187 = vcmp.eq.f32.partialorder %v4186, 8.507059e+37
    %v4188 = vand.u32 %v4176, 2147483648
    %v4189 = vor.u32 1.1754944e-38, %v4188
    %v4190 = vsel %vm4187, %v4189, %v4185
    %v4191 = vmul.f32 %v4166, %v4190
    %v4192 = vmin.f32 %v4191, 1.0
    %v4193 = vmax.f32 %v4192, -1.0
    %v4194 = vmul.f32 %v3717, %v3717
    %v4195 = vmin.f32 16.0, %v4194
    %v4196 = vmul.f32 %v4195, 2.1237322e-06
    %v4197 = vadd.f32 %v4196, 0.00028619796
    %v4198 = vmul.f32 %v4195, %v4197
    %v4199 = vadd.f32 %v4198, 0.0036580483
    %v4200 = vmul.f32 %v4195, %v4199
    %v4201 = vadd.f32 %v4200, 0.05243302
    %v4202 = vmul.f32 %v4195, %v4201
    %v4203 = vadd.f32 %v4202, 0.18741608
    %v4204 = vmul.f32 %v4195, %v4203
    %v4205 = vadd.f32 %v4204, 1.1283791
    %v4206 = vmul.f32 %v3717, %v4205
    %v4207 = vmul.f32 %v4195, 3.8918573e-05
    %v4208 = vadd.f32 %v4207, 0.001143296
    %v4209 = vmul.f32 %v4195, %v4208
    %v4210 = vadd.f32 %v4209, 0.014752088
    %v4211 = vmul.f32 %v4195, %v4210
    %v4212 = vadd.f32 %v4211, 0.112945676
    %v4213 = vmul.f32 %v4195, %v4212
    %v4214 = vadd.f32 %v4213, 0.4994258
    %v4215 = vmul.f32 %v4195, %v4214
    %v4216 = vadd.f32 %v4215, 1.0
    %v4217 = vrcp.pop %v4216
    %v4218 = vmul.f32 %v4216, %v4217
    %v4219 = vsub.f32 1.0, %v4218
    %v4220 = vmul.f32 %v4217, %v4219
    %v4221 = vadd.f32 %v4217, %v4220
    %vm4222 = vweird.f32 %v4216
    %vm4223 = vweird.f32 %v4217
    %vm4224 = vmor %vm4222, %vm4223
    %v4225 = vsel %vm4224, %v4217, %v4221
    %v4226 = vand.u32 2147483647, %v4216
    %vm4227 = vcmp.eq.f32.partialorder %v4226, 8.507059e+37
    %v4228 = vand.u32 %v4216, 2147483648
    %v4229 = vor.u32 1.1754944e-38, %v4228
    %v4230 = vsel %vm4227, %v4229, %v4225
    %v4231 = vmul.f32 %v4206, %v4230
    %v4232 = vmin.f32 %v4231, 1.0
    %v4233 = vmax.f32 %v4232, -1.0
    %v4234 = vmul.f32 %v3718, %v3718
    %v4235 = vmin.f32 16.0, %v4234
    %v4236 = vmul.f32 %v4235, 2.1237322e-06
    %v4237 = vadd.f32 %v4236, 0.00028619796
    %v4238 = vmul.f32 %v4235, %v4237
    %v4239 = vadd.f32 %v4238, 0.0036580483
    %v4240 = vmul.f32 %v4235, %v4239
    %v4241 = vadd.f32 %v4240, 0.05243302
    %v4242 = vmul.f32 %v4235, %v4241
    %v4243 = vadd.f32 %v4242, 0.18741608
    %v4244 = vmul.f32 %v4235, %v4243
    %v4245 = vadd.f32 %v4244, 1.1283791
    %v4246 = vmul.f32 %v3718, %v4245
    %v4247 = vmul.f32 %v4235, 3.8918573e-05
    %v4248 = vadd.f32 %v4247, 0.001143296
    %v4249 = vmul.f32 %v4235, %v4248
    %v4250 = vadd.f32 %v4249, 0.014752088
    %v4251 = vmul.f32 %v4235, %v4250
    %v4252 = vadd.f32 %v4251, 0.112945676
    %v4253 = vmul.f32 %v4235, %v4252
    %v4254 = vadd.f32 %v4253, 0.4994258
    %v4255 = vmul.f32 %v4235, %v4254
    %v4256 = vadd.f32 %v4255, 1.0
    %v4257 = vrcp.pop %v4256
    %v4258 = vmul.f32 %v4256, %v4257
    %v4259 = vsub.f32 1.0, %v4258
    %v4260 = vmul.f32 %v4257, %v4259
    %v4261 = vadd.f32 %v4257, %v4260
    %vm4262 = vweird.f32 %v4256
    %vm4263 = vweird.f32 %v4257
    %vm4264 = vmor %vm4262, %vm4263
    %v4265 = vsel %vm4264, %v4257, %v4261
    %v4266 = vand.u32 2147483647, %v4256
    %vm4267 = vcmp.eq.f32.partialorder %v4266, 8.507059e+37
    %v4268 = vand.u32 %v4256, 2147483648
    %v4269 = vor.u32 1.1754944e-38, %v4268
    %v4270 = vsel %vm4267, %v4269, %v4265
    %v4271 = vmul.f32 %v4246, %v4270
    %v4272 = vmin.f32 %v4271, 1.0
    %v4273 = vmax.f32 %v4272, -1.0
    %v4274 = vmul.f32 %v3719, %v3719
    %v4275 = vmin.f32 16.0, %v4274
    %v4276 = vmul.f32 %v4275, 2.1237322e-06
    %v4277 = vadd.f32 %v4276, 0.00028619796
    %v4278 = vmul.f32 %v4275, %v4277
    %v4279 = vadd.f32 %v4278, 0.0036580483
    %v4280 = vmul.f32 %v4275, %v4279
    %v4281 = vadd.f32 %v4280, 0.05243302
    %v4282 = vmul.f32 %v4275, %v4281
    %v4283 = vadd.f32 %v4282, 0.18741608
    %v4284 = vmul.f32 %v4275, %v4283
    %v4285 = vadd.f32 %v4284, 1.1283791
    %v4286 = vmul.f32 %v3719, %v4285
    %v4287 = vmul.f32 %v4275, 3.8918573e-05
    %v4288 = vadd.f32 %v4287, 0.001143296
    %v4289 = vmul.f32 %v4275, %v4288
    %v4290 = vadd.f32 %v4289, 0.014752088
    %v4291 = vmul.f32 %v4275, %v4290
    %v4292 = vadd.f32 %v4291, 0.112945676
    %v4293 = vmul.f32 %v4275, %v4292
    %v4294 = vadd.f32 %v4293, 0.4994258
    %v4295 = vmul.f32 %v4275, %v4294
    %v4296 = vadd.f32 %v4295, 1.0
    %v4297 = vrcp.pop %v4296
    %v4298 = vmul.f32 %v4296, %v4297
    %v4299 = vsub.f32 1.0, %v4298
    %v4300 = vmul.f32 %v4297, %v4299
    %v4301 = vadd.f32 %v4297, %v4300
    %vm4302 = vweird.f32 %v4296
    %vm4303 = vweird.f32 %v4297
    %vm4304 = vmor %vm4302, %vm4303
    %v4305 = vsel %vm4304, %v4297, %v4301
    %v4306 = vand.u32 2147483647, %v4296
    %vm4307 = vcmp.eq.f32.partialorder %v4306, 8.507059e+37
    %v4308 = vand.u32 %v4296, 2147483648
    %v4309 = vor.u32 1.1754944e-38, %v4308
    %v4310 = vsel %vm4307, %v4309, %v4305
    %v4311 = vmul.f32 %v4286, %v4310
    %v4312 = vmin.f32 %v4311, 1.0
    %v4313 = vmax.f32 %v4312, -1.0
    %v4314 = vmul.f32 %v3720, %v3720
    %v4315 = vmin.f32 16.0, %v4314
    %v4316 = vmul.f32 %v4315, 2.1237322e-06
    %v4317 = vadd.f32 %v4316, 0.00028619796
    %v4318 = vmul.f32 %v4315, %v4317
    %v4319 = vadd.f32 %v4318, 0.0036580483
    %v4320 = vmul.f32 %v4315, %v4319
    %v4321 = vadd.f32 %v4320, 0.05243302
    %v4322 = vmul.f32 %v4315, %v4321
    %v4323 = vadd.f32 %v4322, 0.18741608
    %v4324 = vmul.f32 %v4315, %v4323
    %v4325 = vadd.f32 %v4324, 1.1283791
    %v4326 = vmul.f32 %v3720, %v4325
    %v4327 = vmul.f32 %v4315, 3.8918573e-05
    %v4328 = vadd.f32 %v4327, 0.001143296
    %v4329 = vmul.f32 %v4315, %v4328
    %v4330 = vadd.f32 %v4329, 0.014752088
    %v4331 = vmul.f32 %v4315, %v4330
    %v4332 = vadd.f32 %v4331, 0.112945676
    %v4333 = vmul.f32 %v4315, %v4332
    %v4334 = vadd.f32 %v4333, 0.4994258
    %v4335 = vmul.f32 %v4315, %v4334
    %v4336 = vadd.f32 %v4335, 1.0
    %v4337 = vrcp.pop %v4336
    %v4338 = vmul.f32 %v4336, %v4337
    %v4339 = vsub.f32 1.0, %v4338
    %v4340 = vmul.f32 %v4337, %v4339
    %v4341 = vadd.f32 %v4337, %v4340
    %vm4342 = vweird.f32 %v4336
    %vm4343 = vweird.f32 %v4337
    %vm4344 = vmor %vm4342, %vm4343
    %v4345 = vsel %vm4344, %v4337, %v4341
    %v4346 = vand.u32 2147483647, %v4336
    %vm4347 = vcmp.eq.f32.partialorder %v4346, 8.507059e+37
    %v4348 = vand.u32 %v4336, 2147483648
    %v4349 = vor.u32 1.1754944e-38, %v4348
    %v4350 = vsel %vm4347, %v4349, %v4345
    %v4351 = vmul.f32 %v4326, %v4350
    %v4352 = vmin.f32 %v4351, 1.0
    %v4353 = vmax.f32 %v4352, -1.0
    %v4354 = vmul.f32 %v3721, %v3721
    %v4355 = vmin.f32 16.0, %v4354
    %v4356 = vmul.f32 %v4355, 2.1237322e-06
    %v4357 = vadd.f32 %v4356, 0.00028619796
    %v4358 = vmul.f32 %v4355, %v4357
    %v4359 = vadd.f32 %v4358, 0.0036580483
    %v4360 = vmul.f32 %v4355, %v4359
    %v4361 = vadd.f32 %v4360, 0.05243302
    %v4362 = vmul.f32 %v4355, %v4361
    %v4363 = vadd.f32 %v4362, 0.18741608
    %v4364 = vmul.f32 %v4355, %v4363
    %v4365 = vadd.f32 %v4364, 1.1283791
    %v4366 = vmul.f32 %v3721, %v4365
    %v4367 = vmul.f32 %v4355, 3.8918573e-05
    %v4368 = vadd.f32 %v4367, 0.001143296
    %v4369 = vmul.f32 %v4355, %v4368
    %v4370 = vadd.f32 %v4369, 0.014752088
    %v4371 = vmul.f32 %v4355, %v4370
    %v4372 = vadd.f32 %v4371, 0.112945676
    %v4373 = vmul.f32 %v4355, %v4372
    %v4374 = vadd.f32 %v4373, 0.4994258
    %v4375 = vmul.f32 %v4355, %v4374
    %v4376 = vadd.f32 %v4375, 1.0
    %v4377 = vrcp.pop %v4376
    %v4378 = vmul.f32 %v4376, %v4377
    %v4379 = vsub.f32 1.0, %v4378
    %v4380 = vmul.f32 %v4377, %v4379
    %v4381 = vadd.f32 %v4377, %v4380
    %vm4382 = vweird.f32 %v4376
    %vm4383 = vweird.f32 %v4377
    %vm4384 = vmor %vm4382, %vm4383
    %v4385 = vsel %vm4384, %v4377, %v4381
    %v4386 = vand.u32 2147483647, %v4376
    %vm4387 = vcmp.eq.f32.partialorder %v4386, 8.507059e+37
    %v4388 = vand.u32 %v4376, 2147483648
    %v4389 = vor.u32 1.1754944e-38, %v4388
    %v4390 = vsel %vm4387, %v4389, %v4385
    %v4391 = vmul.f32 %v4366, %v4390
    %v4392 = vmin.f32 %v4391, 1.0
    %v4393 = vmax.f32 %v4392, -1.0
    %v4394 = vmul.f32 %v3722, %v3722
    %v4395 = vmin.f32 16.0, %v4394
    %v4396 = vmul.f32 %v4395, 2.1237322e-06
    %v4397 = vadd.f32 %v4396, 0.00028619796
    %v4398 = vmul.f32 %v4395, %v4397
    %v4399 = vadd.f32 %v4398, 0.0036580483
    %v4400 = vmul.f32 %v4395, %v4399
    %v4401 = vadd.f32 %v4400, 0.05243302
    %v4402 = vmul.f32 %v4395, %v4401
    %v4403 = vadd.f32 %v4402, 0.18741608
    %v4404 = vmul.f32 %v4395, %v4403
    %v4405 = vadd.f32 %v4404, 1.1283791
    %v4406 = vmul.f32 %v3722, %v4405
    %v4407 = vmul.f32 %v4395, 3.8918573e-05
    %v4408 = vadd.f32 %v4407, 0.001143296
    %v4409 = vmul.f32 %v4395, %v4408
    %v4410 = vadd.f32 %v4409, 0.014752088
    %v4411 = vmul.f32 %v4395, %v4410
    %v4412 = vadd.f32 %v4411, 0.112945676
    %v4413 = vmul.f32 %v4395, %v4412
    %v4414 = vadd.f32 %v4413, 0.4994258
    %v4415 = vmul.f32 %v4395, %v4414
    %v4416 = vadd.f32 %v4415, 1.0
    %v4417 = vrcp.pop %v4416
    %v4418 = vmul.f32 %v4416, %v4417
    %v4419 = vsub.f32 1.0, %v4418
    %v4420 = vmul.f32 %v4417, %v4419
    %v4421 = vadd.f32 %v4417, %v4420
    %vm4422 = vweird.f32 %v4416
    %vm4423 = vweird.f32 %v4417
    %vm4424 = vmor %vm4422, %vm4423
    %v4425 = vsel %vm4424, %v4417, %v4421
    %v4426 = vand.u32 2147483647, %v4416
    %vm4427 = vcmp.eq.f32.partialorder %v4426, 8.507059e+37
    %v4428 = vand.u32 %v4416, 2147483648
    %v4429 = vor.u32 1.1754944e-38, %v4428
    %v4430 = vsel %vm4427, %v4429, %v4425
    %v4431 = vmul.f32 %v4406, %v4430
    %v4432 = vmin.f32 %v4431, 1.0
    %v4433 = vmax.f32 %v4432, -1.0
    %v4434 = vmul.f32 %v3723, %v3723
    %v4435 = vmin.f32 16.0, %v4434
    %v4436 = vmul.f32 %v4435, 2.1237322e-06
    %v4437 = vadd.f32 %v4436, 0.00028619796
    %v4438 = vmul.f32 %v4435, %v4437
    %v4439 = vadd.f32 %v4438, 0.0036580483
    %v4440 = vmul.f32 %v4435, %v4439
    %v4441 = vadd.f32 %v4440, 0.05243302
    %v4442 = vmul.f32 %v4435, %v4441
    %v4443 = vadd.f32 %v4442, 0.18741608
    %v4444 = vmul.f32 %v4435, %v4443
    %v4445 = vadd.f32 %v4444, 1.1283791
    %v4446 = vmul.f32 %v3723, %v4445
    %v4447 = vmul.f32 %v4435, 3.8918573e-05
    %v4448 = vadd.f32 %v4447, 0.001143296
    %v4449 = vmul.f32 %v4435, %v4448
    %v4450 = vadd.f32 %v4449, 0.014752088
    %v4451 = vmul.f32 %v4435, %v4450
    %v4452 = vadd.f32 %v4451, 0.112945676
    %v4453 = vmul.f32 %v4435, %v4452
    %v4454 = vadd.f32 %v4453, 0.4994258
    %v4455 = vmul.f32 %v4435, %v4454
    %v4456 = vadd.f32 %v4455, 1.0
    %v4457 = vrcp.pop %v4456
    %v4458 = vmul.f32 %v4456, %v4457
    %v4459 = vsub.f32 1.0, %v4458
    %v4460 = vmul.f32 %v4457, %v4459
    %v4461 = vadd.f32 %v4457, %v4460
    %vm4462 = vweird.f32 %v4456
    %vm4463 = vweird.f32 %v4457
    %vm4464 = vmor %vm4462, %vm4463
    %v4465 = vsel %vm4464, %v4457, %v4461
    %v4466 = vand.u32 2147483647, %v4456
    %vm4467 = vcmp.eq.f32.partialorder %v4466, 8.507059e+37
    %v4468 = vand.u32 %v4456, 2147483648
    %v4469 = vor.u32 1.1754944e-38, %v4468
    %v4470 = vsel %vm4467, %v4469, %v4465
    %v4471 = vmul.f32 %v4446, %v4470
    %v4472 = vmin.f32 %v4471, 1.0
    %v4473 = vmax.f32 %v4472, -1.0
    %v4474 = vmul.f32 %v3724, %v3724
    %v4475 = vmin.f32 16.0, %v4474
    %v4476 = vmul.f32 %v4475, 2.1237322e-06
    %v4477 = vadd.f32 %v4476, 0.00028619796
    %v4478 = vmul.f32 %v4475, %v4477
    %v4479 = vadd.f32 %v4478, 0.0036580483
    %v4480 = vmul.f32 %v4475, %v4479
    %v4481 = vadd.f32 %v4480, 0.05243302
    %v4482 = vmul.f32 %v4475, %v4481
    %v4483 = vadd.f32 %v4482, 0.18741608
    %v4484 = vmul.f32 %v4475, %v4483
    %v4485 = vadd.f32 %v4484, 1.1283791
    %v4486 = vmul.f32 %v3724, %v4485
    %v4487 = vmul.f32 %v4475, 3.8918573e-05
    %v4488 = vadd.f32 %v4487, 0.001143296
    %v4489 = vmul.f32 %v4475, %v4488
    %v4490 = vadd.f32 %v4489, 0.014752088
    %v4491 = vmul.f32 %v4475, %v4490
    %v4492 = vadd.f32 %v4491, 0.112945676
    %v4493 = vmul.f32 %v4475, %v4492
    %v4494 = vadd.f32 %v4493, 0.4994258
    %v4495 = vmul.f32 %v4475, %v4494
    %v4496 = vadd.f32 %v4495, 1.0
    %v4497 = vrcp.pop %v4496
    %v4498 = vmul.f32 %v4496, %v4497
    %v4499 = vsub.f32 1.0, %v4498
    %v4500 = vmul.f32 %v4497, %v4499
    %v4501 = vadd.f32 %v4497, %v4500
    %vm4502 = vweird.f32 %v4496
    %vm4503 = vweird.f32 %v4497
    %vm4504 = vmor %vm4502, %vm4503
    %v4505 = vsel %vm4504, %v4497, %v4501
    %v4506 = vand.u32 2147483647, %v4496
    %vm4507 = vcmp.eq.f32.partialorder %v4506, 8.507059e+37
    %v4508 = vand.u32 %v4496, 2147483648
    %v4509 = vor.u32 1.1754944e-38, %v4508
    %v4510 = vsel %vm4507, %v4509, %v4505
    %v4511 = vmul.f32 %v4486, %v4510
    %v4512 = vmin.f32 %v4511, 1.0
    %v4513 = vmax.f32 %v4512, -1.0
    %v4514 = vmul.f32 %v3725, %v3725
    %v4515 = vmin.f32 16.0, %v4514
    %v4516 = vmul.f32 %v4515, 2.1237322e-06
    %v4517 = vadd.f32 %v4516, 0.00028619796
    %v4518 = vmul.f32 %v4515, %v4517
    %v4519 = vadd.f32 %v4518, 0.0036580483
    %v4520 = vmul.f32 %v4515, %v4519
    %v4521 = vadd.f32 %v4520, 0.05243302
    %v4522 = vmul.f32 %v4515, %v4521
    %v4523 = vadd.f32 %v4522, 0.18741608
    %v4524 = vmul.f32 %v4515, %v4523
    %v4525 = vadd.f32 %v4524, 1.1283791
    %v4526 = vmul.f32 %v3725, %v4525
    %v4527 = vmul.f32 %v4515, 3.8918573e-05
    %v4528 = vadd.f32 %v4527, 0.001143296
    %v4529 = vmul.f32 %v4515, %v4528
    %v4530 = vadd.f32 %v4529, 0.014752088
    %v4531 = vmul.f32 %v4515, %v4530
    %v4532 = vadd.f32 %v4531, 0.112945676
    %v4533 = vmul.f32 %v4515, %v4532
    %v4534 = vadd.f32 %v4533, 0.4994258
    %v4535 = vmul.f32 %v4515, %v4534
    %v4536 = vadd.f32 %v4535, 1.0
    %v4537 = vrcp.pop %v4536
    %v4538 = vmul.f32 %v4536, %v4537
    %v4539 = vsub.f32 1.0, %v4538
    %v4540 = vmul.f32 %v4537, %v4539
    %v4541 = vadd.f32 %v4537, %v4540
    %vm4542 = vweird.f32 %v4536
    %vm4543 = vweird.f32 %v4537
    %vm4544 = vmor %vm4542, %vm4543
    %v4545 = vsel %vm4544, %v4537, %v4541
    %v4546 = vand.u32 2147483647, %v4536
    %vm4547 = vcmp.eq.f32.partialorder %v4546, 8.507059e+37
    %v4548 = vand.u32 %v4536, 2147483648
    %v4549 = vor.u32 1.1754944e-38, %v4548
    %v4550 = vsel %vm4547, %v4549, %v4545
    %v4551 = vmul.f32 %v4526, %v4550
    %v4552 = vmin.f32 %v4551, 1.0
    %v4553 = vmax.f32 %v4552, -1.0
    %v4554 = vmul.f32 %v3726, %v3726
    %v4555 = vmin.f32 16.0, %v4554
    %v4556 = vmul.f32 %v4555, 2.1237322e-06
    %v4557 = vadd.f32 %v4556, 0.00028619796
    %v4558 = vmul.f32 %v4555, %v4557
    %v4559 = vadd.f32 %v4558, 0.0036580483
    %v4560 = vmul.f32 %v4555, %v4559
    %v4561 = vadd.f32 %v4560, 0.05243302
    %v4562 = vmul.f32 %v4555, %v4561
    %v4563 = vadd.f32 %v4562, 0.18741608
    %v4564 = vmul.f32 %v4555, %v4563
    %v4565 = vadd.f32 %v4564, 1.1283791
    %v4566 = vmul.f32 %v3726, %v4565
    %v4567 = vmul.f32 %v4555, 3.8918573e-05
    %v4568 = vadd.f32 %v4567, 0.001143296
    %v4569 = vmul.f32 %v4555, %v4568
    %v4570 = vadd.f32 %v4569, 0.014752088
    %v4571 = vmul.f32 %v4555, %v4570
    %v4572 = vadd.f32 %v4571, 0.112945676
    %v4573 = vmul.f32 %v4555, %v4572
    %v4574 = vadd.f32 %v4573, 0.4994258
    %v4575 = vmul.f32 %v4555, %v4574
    %v4576 = vadd.f32 %v4575, 1.0
    %v4577 = vrcp.pop %v4576
    %v4578 = vmul.f32 %v4576, %v4577
    %v4579 = vsub.f32 1.0, %v4578
    %v4580 = vmul.f32 %v4577, %v4579
    %v4581 = vadd.f32 %v4577, %v4580
    %vm4582 = vweird.f32 %v4576
    %vm4583 = vweird.f32 %v4577
    %vm4584 = vmor %vm4582, %vm4583
    %v4585 = vsel %vm4584, %v4577, %v4581
    %v4586 = vand.u32 2147483647, %v4576
    %vm4587 = vcmp.eq.f32.partialorder %v4586, 8.507059e+37
    %v4588 = vand.u32 %v4576, 2147483648
    %v4589 = vor.u32 1.1754944e-38, %v4588
    %v4590 = vsel %vm4587, %v4589, %v4585
    %v4591 = vmul.f32 %v4566, %v4590
    %v4592 = vmin.f32 %v4591, 1.0
    %v4593 = vmax.f32 %v4592, -1.0
    %v4594 = vmul.f32 %v3727, %v3727
    %v4595 = vmin.f32 16.0, %v4594
    %v4596 = vmul.f32 %v4595, 2.1237322e-06
    %v4597 = vadd.f32 %v4596, 0.00028619796
    %v4598 = vmul.f32 %v4595, %v4597
    %v4599 = vadd.f32 %v4598, 0.0036580483
    %v4600 = vmul.f32 %v4595, %v4599
    %v4601 = vadd.f32 %v4600, 0.05243302
    %v4602 = vmul.f32 %v4595, %v4601
    %v4603 = vadd.f32 %v4602, 0.18741608
    %v4604 = vmul.f32 %v4595, %v4603
    %v4605 = vadd.f32 %v4604, 1.1283791
    %v4606 = vmul.f32 %v3727, %v4605
    %v4607 = vmul.f32 %v4595, 3.8918573e-05
    %v4608 = vadd.f32 %v4607, 0.001143296
    %v4609 = vmul.f32 %v4595, %v4608
    %v4610 = vadd.f32 %v4609, 0.014752088
    %v4611 = vmul.f32 %v4595, %v4610
    %v4612 = vadd.f32 %v4611, 0.112945676
    %v4613 = vmul.f32 %v4595, %v4612
    %v4614 = vadd.f32 %v4613, 0.4994258
    %v4615 = vmul.f32 %v4595, %v4614
    %v4616 = vadd.f32 %v4615, 1.0
    %v4617 = vrcp.pop %v4616
    %v4618 = vmul.f32 %v4616, %v4617
    %v4619 = vsub.f32 1.0, %v4618
    %v4620 = vmul.f32 %v4617, %v4619
    %v4621 = vadd.f32 %v4617, %v4620
    %vm4622 = vweird.f32 %v4616
    %vm4623 = vweird.f32 %v4617
    %vm4624 = vmor %vm4622, %vm4623
    %v4625 = vsel %vm4624, %v4617, %v4621
    %v4626 = vand.u32 2147483647, %v4616
    %vm4627 = vcmp.eq.f32.partialorder %v4626, 8.507059e+37
    %v4628 = vand.u32 %v4616, 2147483648
    %v4629 = vor.u32 1.1754944e-38, %v4628
    %v4630 = vsel %vm4627, %v4629, %v4625
    %v4631 = vmul.f32 %v4606, %v4630
    %v4632 = vmin.f32 %v4631, 1.0
    %v4633 = vmax.f32 %v4632, -1.0
    %v4634 = vmul.f32 %v3728, %v3728
    %v4635 = vmin.f32 16.0, %v4634
    %v4636 = vmul.f32 %v4635, 2.1237322e-06
    %v4637 = vadd.f32 %v4636, 0.00028619796
    %v4638 = vmul.f32 %v4635, %v4637
    %v4639 = vadd.f32 %v4638, 0.0036580483
    %v4640 = vmul.f32 %v4635, %v4639
    %v4641 = vadd.f32 %v4640, 0.05243302
    %v4642 = vmul.f32 %v4635, %v4641
    %v4643 = vadd.f32 %v4642, 0.18741608
    %v4644 = vmul.f32 %v4635, %v4643
    %v4645 = vadd.f32 %v4644, 1.1283791
    %v4646 = vmul.f32 %v3728, %v4645
    %v4647 = vmul.f32 %v4635, 3.8918573e-05
    %v4648 = vadd.f32 %v4647, 0.001143296
    %v4649 = vmul.f32 %v4635, %v4648
    %v4650 = vadd.f32 %v4649, 0.014752088
    %v4651 = vmul.f32 %v4635, %v4650
    %v4652 = vadd.f32 %v4651, 0.112945676
    %v4653 = vmul.f32 %v4635, %v4652
    %v4654 = vadd.f32 %v4653, 0.4994258
    %v4655 = vmul.f32 %v4635, %v4654
    %v4656 = vadd.f32 %v4655, 1.0
    %v4657 = vrcp.pop %v4656
    %v4658 = vmul.f32 %v4656, %v4657
    %v4659 = vsub.f32 1.0, %v4658
    %v4660 = vmul.f32 %v4657, %v4659
    %v4661 = vadd.f32 %v4657, %v4660
    %vm4662 = vweird.f32 %v4656
    %vm4663 = vweird.f32 %v4657
    %vm4664 = vmor %vm4662, %vm4663
    %v4665 = vsel %vm4664, %v4657, %v4661
    %v4666 = vand.u32 2147483647, %v4656
    %vm4667 = vcmp.eq.f32.partialorder %v4666, 8.507059e+37
    %v4668 = vand.u32 %v4656, 2147483648
    %v4669 = vor.u32 1.1754944e-38, %v4668
    %v4670 = vsel %vm4667, %v4669, %v4665
    %v4671 = vmul.f32 %v4646, %v4670
    %v4672 = vmin.f32 %v4671, 1.0
    %v4673 = vmax.f32 %v4672, -1.0
    %v4674 = vmul.f32 %v3729, %v3729
    %v4675 = vmin.f32 16.0, %v4674
    %v4676 = vmul.f32 %v4675, 2.1237322e-06
    %v4677 = vadd.f32 %v4676, 0.00028619796
    %v4678 = vmul.f32 %v4675, %v4677
    %v4679 = vadd.f32 %v4678, 0.0036580483
    %v4680 = vmul.f32 %v4675, %v4679
    %v4681 = vadd.f32 %v4680, 0.05243302
    %v4682 = vmul.f32 %v4675, %v4681
    %v4683 = vadd.f32 %v4682, 0.18741608
    %v4684 = vmul.f32 %v4675, %v4683
    %v4685 = vadd.f32 %v4684, 1.1283791
    %v4686 = vmul.f32 %v3729, %v4685
    %v4687 = vmul.f32 %v4675, 3.8918573e-05
    %v4688 = vadd.f32 %v4687, 0.001143296
    %v4689 = vmul.f32 %v4675, %v4688
    %v4690 = vadd.f32 %v4689, 0.014752088
    %v4691 = vmul.f32 %v4675, %v4690
    %v4692 = vadd.f32 %v4691, 0.112945676
    %v4693 = vmul.f32 %v4675, %v4692
    %v4694 = vadd.f32 %v4693, 0.4994258
    %v4695 = vmul.f32 %v4675, %v4694
    %v4696 = vadd.f32 %v4695, 1.0
    %v4697 = vrcp.pop %v4696
    %v4698 = vmul.f32 %v4696, %v4697
    %v4699 = vsub.f32 1.0, %v4698
    %v4700 = vmul.f32 %v4697, %v4699
    %v4701 = vadd.f32 %v4697, %v4700
    %vm4702 = vweird.f32 %v4696
    %vm4703 = vweird.f32 %v4697
    %vm4704 = vmor %vm4702, %vm4703
    %v4705 = vsel %vm4704, %v4697, %v4701
    %v4706 = vand.u32 2147483647, %v4696
    %vm4707 = vcmp.eq.f32.partialorder %v4706, 8.507059e+37
    %v4708 = vand.u32 %v4696, 2147483648
    %v4709 = vor.u32 1.1754944e-38, %v4708
    %v4710 = vsel %vm4707, %v4709, %v4705
    %v4711 = vmul.f32 %v4686, %v4710
    %v4712 = vmin.f32 %v4711, 1.0
    %v4713 = vmax.f32 %v4712, -1.0
    %v4714 = vmul.f32 %v3730, %v3730
    %v4715 = vmin.f32 16.0, %v4714
    %v4716 = vmul.f32 %v4715, 2.1237322e-06
    %v4717 = vadd.f32 %v4716, 0.00028619796
    %v4718 = vmul.f32 %v4715, %v4717
    %v4719 = vadd.f32 %v4718, 0.0036580483
    %v4720 = vmul.f32 %v4715, %v4719
    %v4721 = vadd.f32 %v4720, 0.05243302
    %v4722 = vmul.f32 %v4715, %v4721
    %v4723 = vadd.f32 %v4722, 0.18741608
    %v4724 = vmul.f32 %v4715, %v4723
    %v4725 = vadd.f32 %v4724, 1.1283791
    %v4726 = vmul.f32 %v3730, %v4725
    %v4727 = vmul.f32 %v4715, 3.8918573e-05
    %v4728 = vadd.f32 %v4727, 0.001143296
    %v4729 = vmul.f32 %v4715, %v4728
    %v4730 = vadd.f32 %v4729, 0.014752088
    %v4731 = vmul.f32 %v4715, %v4730
    %v4732 = vadd.f32 %v4731, 0.112945676
    %v4733 = vmul.f32 %v4715, %v4732
    %v4734 = vadd.f32 %v4733, 0.4994258
    %v4735 = vmul.f32 %v4715, %v4734
    %v4736 = vadd.f32 %v4735, 1.0
    %v4737 = vrcp.pop %v4736
    %v4738 = vmul.f32 %v4736, %v4737
    %v4739 = vsub.f32 1.0, %v4738
    %v4740 = vmul.f32 %v4737, %v4739
    %v4741 = vadd.f32 %v4737, %v4740
    %vm4742 = vweird.f32 %v4736
    %vm4743 = vweird.f32 %v4737
    %vm4744 = vmor %vm4742, %vm4743
    %v4745 = vsel %vm4744, %v4737, %v4741
    %v4746 = vand.u32 2147483647, %v4736
    %vm4747 = vcmp.eq.f32.partialorder %v4746, 8.507059e+37
    %v4748 = vand.u32 %v4736, 2147483648
    %v4749 = vor.u32 1.1754944e-38, %v4748
    %v4750 = vsel %vm4747, %v4749, %v4745
    %v4751 = vmul.f32 %v4726, %v4750
    %v4752 = vmin.f32 %v4751, 1.0
    %v4753 = vmax.f32 %v4752, -1.0
    %v4754 = vmul.f32 %v3731, %v3731
    %v4755 = vmin.f32 16.0, %v4754
    %v4756 = vmul.f32 %v4755, 2.1237322e-06
    %v4757 = vadd.f32 %v4756, 0.00028619796
    %v4758 = vmul.f32 %v4755, %v4757
    %v4759 = vadd.f32 %v4758, 0.0036580483
    %v4760 = vmul.f32 %v4755, %v4759
    %v4761 = vadd.f32 %v4760, 0.05243302
    %v4762 = vmul.f32 %v4755, %v4761
    %v4763 = vadd.f32 %v4762, 0.18741608
    %v4764 = vmul.f32 %v4755, %v4763
    %v4765 = vadd.f32 %v4764, 1.1283791
    %v4766 = vmul.f32 %v3731, %v4765
    %v4767 = vmul.f32 %v4755, 3.8918573e-05
    %v4768 = vadd.f32 %v4767, 0.001143296
    %v4769 = vmul.f32 %v4755, %v4768
    %v4770 = vadd.f32 %v4769, 0.014752088
    %v4771 = vmul.f32 %v4755, %v4770
    %v4772 = vadd.f32 %v4771, 0.112945676
    %v4773 = vmul.f32 %v4755, %v4772
    %v4774 = vadd.f32 %v4773, 0.4994258
    %v4775 = vmul.f32 %v4755, %v4774
    %v4776 = vadd.f32 %v4775, 1.0
    %v4777 = vrcp.pop %v4776
    %v4778 = vmul.f32 %v4776, %v4777
    %v4779 = vsub.f32 1.0, %v4778
    %v4780 = vmul.f32 %v4777, %v4779
    %v4781 = vadd.f32 %v4777, %v4780
    %vm4782 = vweird.f32 %v4776
    %vm4783 = vweird.f32 %v4777
    %vm4784 = vmor %vm4782, %vm4783
    %v4785 = vsel %vm4784, %v4777, %v4781
    %v4786 = vand.u32 2147483647, %v4776
    %vm4787 = vcmp.eq.f32.partialorder %v4786, 8.507059e+37
    %v4788 = vand.u32 %v4776, 2147483648
    %v4789 = vor.u32 1.1754944e-38, %v4788
    %v4790 = vsel %vm4787, %v4789, %v4785
    %v4791 = vmul.f32 %v4766, %v4790
    %v4792 = vmin.f32 %v4791, 1.0
    %v4793 = vmax.f32 %v4792, -1.0
    %v4794 = vmul.f32 %v3732, %v3732
    %v4795 = vmin.f32 16.0, %v4794
    %v4796 = vmul.f32 %v4795, 2.1237322e-06
    %v4797 = vadd.f32 %v4796, 0.00028619796
    %v4798 = vmul.f32 %v4795, %v4797
    %v4799 = vadd.f32 %v4798, 0.0036580483
    %v4800 = vmul.f32 %v4795, %v4799
    %v4801 = vadd.f32 %v4800, 0.05243302
    %v4802 = vmul.f32 %v4795, %v4801
    %v4803 = vadd.f32 %v4802, 0.18741608
    %v4804 = vmul.f32 %v4795, %v4803
    %v4805 = vadd.f32 %v4804, 1.1283791
    %v4806 = vmul.f32 %v3732, %v4805
    %v4807 = vmul.f32 %v4795, 3.8918573e-05
    %v4808 = vadd.f32 %v4807, 0.001143296
    %v4809 = vmul.f32 %v4795, %v4808
    %v4810 = vadd.f32 %v4809, 0.014752088
    %v4811 = vmul.f32 %v4795, %v4810
    %v4812 = vadd.f32 %v4811, 0.112945676
    %v4813 = vmul.f32 %v4795, %v4812
    %v4814 = vadd.f32 %v4813, 0.4994258
    %v4815 = vmul.f32 %v4795, %v4814
    %v4816 = vadd.f32 %v4815, 1.0
    %v4817 = vrcp.pop %v4816
    %v4818 = vmul.f32 %v4816, %v4817
    %v4819 = vsub.f32 1.0, %v4818
    %v4820 = vmul.f32 %v4817, %v4819
    %v4821 = vadd.f32 %v4817, %v4820
    %vm4822 = vweird.f32 %v4816
    %vm4823 = vweird.f32 %v4817
    %vm4824 = vmor %vm4822, %vm4823
    %v4825 = vsel %vm4824, %v4817, %v4821
    %v4826 = vand.u32 2147483647, %v4816
    %vm4827 = vcmp.eq.f32.partialorder %v4826, 8.507059e+37
    %v4828 = vand.u32 %v4816, 2147483648
    %v4829 = vor.u32 1.1754944e-38, %v4828
    %v4830 = vsel %vm4827, %v4829, %v4825
    %v4831 = vmul.f32 %v4806, %v4830
    %v4832 = vmin.f32 %v4831, 1.0
    %v4833 = vmax.f32 %v4832, -1.0
    %v4834 = vmul.f32 %v3733, %v3733
    %v4835 = vmin.f32 16.0, %v4834
    %v4836 = vmul.f32 %v4835, 2.1237322e-06
    %v4837 = vadd.f32 %v4836, 0.00028619796
    %v4838 = vmul.f32 %v4835, %v4837
    %v4839 = vadd.f32 %v4838, 0.0036580483
    %v4840 = vmul.f32 %v4835, %v4839
    %v4841 = vadd.f32 %v4840, 0.05243302
    %v4842 = vmul.f32 %v4835, %v4841
    %v4843 = vadd.f32 %v4842, 0.18741608
    %v4844 = vmul.f32 %v4835, %v4843
    %v4845 = vadd.f32 %v4844, 1.1283791
    %v4846 = vmul.f32 %v3733, %v4845
    %v4847 = vmul.f32 %v4835, 3.8918573e-05
    %v4848 = vadd.f32 %v4847, 0.001143296
    %v4849 = vmul.f32 %v4835, %v4848
    %v4850 = vadd.f32 %v4849, 0.014752088
    %v4851 = vmul.f32 %v4835, %v4850
    %v4852 = vadd.f32 %v4851, 0.112945676
    %v4853 = vmul.f32 %v4835, %v4852
    %v4854 = vadd.f32 %v4853, 0.4994258
    %v4855 = vmul.f32 %v4835, %v4854
    %v4856 = vadd.f32 %v4855, 1.0
    %v4857 = vrcp.pop %v4856
    %v4858 = vmul.f32 %v4856, %v4857
    %v4859 = vsub.f32 1.0, %v4858
    %v4860 = vmul.f32 %v4857, %v4859
    %v4861 = vadd.f32 %v4857, %v4860
    %vm4862 = vweird.f32 %v4856
    %vm4863 = vweird.f32 %v4857
    %vm4864 = vmor %vm4862, %vm4863
    %v4865 = vsel %vm4864, %v4857, %v4861
    %v4866 = vand.u32 2147483647, %v4856
    %vm4867 = vcmp.eq.f32.partialorder %v4866, 8.507059e+37
    %v4868 = vand.u32 %v4856, 2147483648
    %v4869 = vor.u32 1.1754944e-38, %v4868
    %v4870 = vsel %vm4867, %v4869, %v4865
    %v4871 = vmul.f32 %v4846, %v4870
    %v4872 = vmin.f32 %v4871, 1.0
    %v4873 = vmax.f32 %v4872, -1.0
    %v4874 = vmul.f32 %v3734, %v3734
    %v4875 = vmin.f32 16.0, %v4874
    %v4876 = vmul.f32 %v4875, 2.1237322e-06
    %v4877 = vadd.f32 %v4876, 0.00028619796
    %v4878 = vmul.f32 %v4875, %v4877
    %v4879 = vadd.f32 %v4878, 0.0036580483
    %v4880 = vmul.f32 %v4875, %v4879
    %v4881 = vadd.f32 %v4880, 0.05243302
    %v4882 = vmul.f32 %v4875, %v4881
    %v4883 = vadd.f32 %v4882, 0.18741608
    %v4884 = vmul.f32 %v4875, %v4883
    %v4885 = vadd.f32 %v4884, 1.1283791
    %v4886 = vmul.f32 %v3734, %v4885
    %v4887 = vmul.f32 %v4875, 3.8918573e-05
    %v4888 = vadd.f32 %v4887, 0.001143296
    %v4889 = vmul.f32 %v4875, %v4888
    %v4890 = vadd.f32 %v4889, 0.014752088
    %v4891 = vmul.f32 %v4875, %v4890
    %v4892 = vadd.f32 %v4891, 0.112945676
    %v4893 = vmul.f32 %v4875, %v4892
    %v4894 = vadd.f32 %v4893, 0.4994258
    %v4895 = vmul.f32 %v4875, %v4894
    %v4896 = vadd.f32 %v4895, 1.0
    %v4897 = vrcp.pop %v4896
    %v4898 = vmul.f32 %v4896, %v4897
    %v4899 = vsub.f32 1.0, %v4898
    %v4900 = vmul.f32 %v4897, %v4899
    %v4901 = vadd.f32 %v4897, %v4900
    %vm4902 = vweird.f32 %v4896
    %vm4903 = vweird.f32 %v4897
    %vm4904 = vmor %vm4902, %vm4903
    %v4905 = vsel %vm4904, %v4897, %v4901
    %v4906 = vand.u32 2147483647, %v4896
    %vm4907 = vcmp.eq.f32.partialorder %v4906, 8.507059e+37
    %v4908 = vand.u32 %v4896, 2147483648
    %v4909 = vor.u32 1.1754944e-38, %v4908
    %v4910 = vsel %vm4907, %v4909, %v4905
    %v4911 = vmul.f32 %v4886, %v4910
    %v4912 = vmin.f32 %v4911, 1.0
    %v4913 = vmax.f32 %v4912, -1.0
    %v4914 = vmul.f32 %v3735, %v3735
    %v4915 = vmin.f32 16.0, %v4914
    %v4916 = vmul.f32 %v4915, 2.1237322e-06
    %v4917 = vadd.f32 %v4916, 0.00028619796
    %v4918 = vmul.f32 %v4915, %v4917
    %v4919 = vadd.f32 %v4918, 0.0036580483
    %v4920 = vmul.f32 %v4915, %v4919
    %v4921 = vadd.f32 %v4920, 0.05243302
    %v4922 = vmul.f32 %v4915, %v4921
    %v4923 = vadd.f32 %v4922, 0.18741608
    %v4924 = vmul.f32 %v4915, %v4923
    %v4925 = vadd.f32 %v4924, 1.1283791
    %v4926 = vmul.f32 %v3735, %v4925
    %v4927 = vmul.f32 %v4915, 3.8918573e-05
    %v4928 = vadd.f32 %v4927, 0.001143296
    %v4929 = vmul.f32 %v4915, %v4928
    %v4930 = vadd.f32 %v4929, 0.014752088
    %v4931 = vmul.f32 %v4915, %v4930
    %v4932 = vadd.f32 %v4931, 0.112945676
    %v4933 = vmul.f32 %v4915, %v4932
    %v4934 = vadd.f32 %v4933, 0.4994258
    %v4935 = vmul.f32 %v4915, %v4934
    %v4936 = vadd.f32 %v4935, 1.0
    %v4937 = vrcp.pop %v4936
    %v4938 = vmul.f32 %v4936, %v4937
    %v4939 = vsub.f32 1.0, %v4938
    %v4940 = vmul.f32 %v4937, %v4939
    %v4941 = vadd.f32 %v4937, %v4940
    %vm4942 = vweird.f32 %v4936
    %vm4943 = vweird.f32 %v4937
    %vm4944 = vmor %vm4942, %vm4943
    %v4945 = vsel %vm4944, %v4937, %v4941
    %v4946 = vand.u32 2147483647, %v4936
    %vm4947 = vcmp.eq.f32.partialorder %v4946, 8.507059e+37
    %v4948 = vand.u32 %v4936, 2147483648
    %v4949 = vor.u32 1.1754944e-38, %v4948
    %v4950 = vsel %vm4947, %v4949, %v4945
    %v4951 = vmul.f32 %v4926, %v4950
    %v4952 = vmin.f32 %v4951, 1.0
    %v4953 = vmax.f32 %v4952, -1.0
    %v4954 = vmul.f32 %v3736, %v3736
    %v4955 = vmin.f32 16.0, %v4954
    %v4956 = vmul.f32 %v4955, 2.1237322e-06
    %v4957 = vadd.f32 %v4956, 0.00028619796
    %v4958 = vmul.f32 %v4955, %v4957
    %v4959 = vadd.f32 %v4958, 0.0036580483
    %v4960 = vmul.f32 %v4955, %v4959
    %v4961 = vadd.f32 %v4960, 0.05243302
    %v4962 = vmul.f32 %v4955, %v4961
    %v4963 = vadd.f32 %v4962, 0.18741608
    %v4964 = vmul.f32 %v4955, %v4963
    %v4965 = vadd.f32 %v4964, 1.1283791
    %v4966 = vmul.f32 %v3736, %v4965
    %v4967 = vmul.f32 %v4955, 3.8918573e-05
    %v4968 = vadd.f32 %v4967, 0.001143296
    %v4969 = vmul.f32 %v4955, %v4968
    %v4970 = vadd.f32 %v4969, 0.014752088
    %v4971 = vmul.f32 %v4955, %v4970
    %v4972 = vadd.f32 %v4971, 0.112945676
    %v4973 = vmul.f32 %v4955, %v4972
    %v4974 = vadd.f32 %v4973, 0.4994258
    %v4975 = vmul.f32 %v4955, %v4974
    %v4976 = vadd.f32 %v4975, 1.0
    %v4977 = vrcp.pop %v4976
    %v4978 = vmul.f32 %v4976, %v4977
    %v4979 = vsub.f32 1.0, %v4978
    %v4980 = vmul.f32 %v4977, %v4979
    %v4981 = vadd.f32 %v4977, %v4980
    %vm4982 = vweird.f32 %v4976
    %vm4983 = vweird.f32 %v4977
    %vm4984 = vmor %vm4982, %vm4983
    %v4985 = vsel %vm4984, %v4977, %v4981
    %v4986 = vand.u32 2147483647, %v4976
    %vm4987 = vcmp.eq.f32.partialorder %v4986, 8.507059e+37
    %v4988 = vand.u32 %v4976, 2147483648
    %v4989 = vor.u32 1.1754944e-38, %v4988
    %v4990 = vsel %vm4987, %v4989, %v4985
    %v4991 = vmul.f32 %v4966, %v4990
    %v4992 = vmin.f32 %v4991, 1.0
    %v4993 = vmax.f32 %v4992, -1.0
    %v4994 = vmul.f32 %v3737, %v3737
    %v4995 = vmin.f32 16.0, %v4994
    %v4996 = vmul.f32 %v4995, 2.1237322e-06
    %v4997 = vadd.f32 %v4996, 0.00028619796
    %v4998 = vmul.f32 %v4995, %v4997
    %v4999 = vadd.f32 %v4998, 0.0036580483
    %v5000 = vmul.f32 %v4995, %v4999
    %v5001 = vadd.f32 %v5000, 0.05243302
    %v5002 = vmul.f32 %v4995, %v5001
    %v5003 = vadd.f32 %v5002, 0.18741608
    %v5004 = vmul.f32 %v4995, %v5003
    %v5005 = vadd.f32 %v5004, 1.1283791
    %v5006 = vmul.f32 %v3737, %v5005
    %v5007 = vmul.f32 %v4995, 3.8918573e-05
    %v5008 = vadd.f32 %v5007, 0.001143296
    %v5009 = vmul.f32 %v4995, %v5008
    %v5010 = vadd.f32 %v5009, 0.014752088
    %v5011 = vmul.f32 %v4995, %v5010
    %v5012 = vadd.f32 %v5011, 0.112945676
    %v5013 = vmul.f32 %v4995, %v5012
    %v5014 = vadd.f32 %v5013, 0.4994258
    %v5015 = vmul.f32 %v4995, %v5014
    %v5016 = vadd.f32 %v5015, 1.0
    %v5017 = vrcp.pop %v5016
    %v5018 = vmul.f32 %v5016, %v5017
    %v5019 = vsub.f32 1.0, %v5018
    %v5020 = vmul.f32 %v5017, %v5019
    %v5021 = vadd.f32 %v5017, %v5020
    %vm5022 = vweird.f32 %v5016
    %vm5023 = vweird.f32 %v5017
    %vm5024 = vmor %vm5022, %vm5023
    %v5025 = vsel %vm5024, %v5017, %v5021
    %v5026 = vand.u32 2147483647, %v5016
    %vm5027 = vcmp.eq.f32.partialorder %v5026, 8.507059e+37
    %v5028 = vand.u32 %v5016, 2147483648
    %v5029 = vor.u32 1.1754944e-38, %v5028
    %v5030 = vsel %vm5027, %v5029, %v5025
    %v5031 = vmul.f32 %v5006, %v5030
    %v5032 = vmin.f32 %v5031, 1.0
    %v5033 = vmax.f32 %v5032, -1.0
    %v5034 = vmul.f32 %v3738, %v3738
    %v5035 = vmin.f32 16.0, %v5034
    %v5036 = vmul.f32 %v5035, 2.1237322e-06
    %v5037 = vadd.f32 %v5036, 0.00028619796
    %v5038 = vmul.f32 %v5035, %v5037
    %v5039 = vadd.f32 %v5038, 0.0036580483
    %v5040 = vmul.f32 %v5035, %v5039
    %v5041 = vadd.f32 %v5040, 0.05243302
    %v5042 = vmul.f32 %v5035, %v5041
    %v5043 = vadd.f32 %v5042, 0.18741608
    %v5044 = vmul.f32 %v5035, %v5043
    %v5045 = vadd.f32 %v5044, 1.1283791
    %v5046 = vmul.f32 %v3738, %v5045
    %v5047 = vmul.f32 %v5035, 3.8918573e-05
    %v5048 = vadd.f32 %v5047, 0.001143296
    %v5049 = vmul.f32 %v5035, %v5048
    %v5050 = vadd.f32 %v5049, 0.014752088
    %v5051 = vmul.f32 %v5035, %v5050
    %v5052 = vadd.f32 %v5051, 0.112945676
    %v5053 = vmul.f32 %v5035, %v5052
    %v5054 = vadd.f32 %v5053, 0.4994258
    %v5055 = vmul.f32 %v5035, %v5054
    %v5056 = vadd.f32 %v5055, 1.0
    %v5057 = vrcp.pop %v5056
    %v5058 = vmul.f32 %v5056, %v5057
    %v5059 = vsub.f32 1.0, %v5058
    %v5060 = vmul.f32 %v5057, %v5059
    %v5061 = vadd.f32 %v5057, %v5060
    %vm5062 = vweird.f32 %v5056
    %vm5063 = vweird.f32 %v5057
    %vm5064 = vmor %vm5062, %vm5063
    %v5065 = vsel %vm5064, %v5057, %v5061
    %v5066 = vand.u32 2147483647, %v5056
    %vm5067 = vcmp.eq.f32.partialorder %v5066, 8.507059e+37
    %v5068 = vand.u32 %v5056, 2147483648
    %v5069 = vor.u32 1.1754944e-38, %v5068
    %v5070 = vsel %vm5067, %v5069, %v5065
    %v5071 = vmul.f32 %v5046, %v5070
    %v5072 = vmin.f32 %v5071, 1.0
    %v5073 = vmax.f32 %v5072, -1.0
    %v5074 = vmul.f32 %v3739, %v3739
    %v5075 = vmin.f32 16.0, %v5074
    %v5076 = vmul.f32 %v5075, 2.1237322e-06
    %v5077 = vadd.f32 %v5076, 0.00028619796
    %v5078 = vmul.f32 %v5075, %v5077
    %v5079 = vadd.f32 %v5078, 0.0036580483
    %v5080 = vmul.f32 %v5075, %v5079
    %v5081 = vadd.f32 %v5080, 0.05243302
    %v5082 = vmul.f32 %v5075, %v5081
    %v5083 = vadd.f32 %v5082, 0.18741608
    %v5084 = vmul.f32 %v5075, %v5083
    %v5085 = vadd.f32 %v5084, 1.1283791
    %v5086 = vmul.f32 %v3739, %v5085
    %v5087 = vmul.f32 %v5075, 3.8918573e-05
    %v5088 = vadd.f32 %v5087, 0.001143296
    %v5089 = vmul.f32 %v5075, %v5088
    %v5090 = vadd.f32 %v5089, 0.014752088
    %v5091 = vmul.f32 %v5075, %v5090
    %v5092 = vadd.f32 %v5091, 0.112945676
    %v5093 = vmul.f32 %v5075, %v5092
    %v5094 = vadd.f32 %v5093, 0.4994258
    %v5095 = vmul.f32 %v5075, %v5094
    %v5096 = vadd.f32 %v5095, 1.0
    %v5097 = vrcp.pop %v5096
    %v5098 = vmul.f32 %v5096, %v5097
    %v5099 = vsub.f32 1.0, %v5098
    %v5100 = vmul.f32 %v5097, %v5099
    %v5101 = vadd.f32 %v5097, %v5100
    %vm5102 = vweird.f32 %v5096
    %vm5103 = vweird.f32 %v5097
    %vm5104 = vmor %vm5102, %vm5103
    %v5105 = vsel %vm5104, %v5097, %v5101
    %v5106 = vand.u32 2147483647, %v5096
    %vm5107 = vcmp.eq.f32.partialorder %v5106, 8.507059e+37
    %v5108 = vand.u32 %v5096, 2147483648
    %v5109 = vor.u32 1.1754944e-38, %v5108
    %v5110 = vsel %vm5107, %v5109, %v5105
    %v5111 = vmul.f32 %v5086, %v5110
    %v5112 = vmin.f32 %v5111, 1.0
    %v5113 = vmax.f32 %v5112, -1.0
    %v5114 = vmul.f32 %v3740, %v3740
    %v5115 = vmin.f32 16.0, %v5114
    %v5116 = vmul.f32 %v5115, 2.1237322e-06
    %v5117 = vadd.f32 %v5116, 0.00028619796
    %v5118 = vmul.f32 %v5115, %v5117
    %v5119 = vadd.f32 %v5118, 0.0036580483
    %v5120 = vmul.f32 %v5115, %v5119
    %v5121 = vadd.f32 %v5120, 0.05243302
    %v5122 = vmul.f32 %v5115, %v5121
    %v5123 = vadd.f32 %v5122, 0.18741608
    %v5124 = vmul.f32 %v5115, %v5123
    %v5125 = vadd.f32 %v5124, 1.1283791
    %v5126 = vmul.f32 %v3740, %v5125
    %v5127 = vmul.f32 %v5115, 3.8918573e-05
    %v5128 = vadd.f32 %v5127, 0.001143296
    %v5129 = vmul.f32 %v5115, %v5128
    %v5130 = vadd.f32 %v5129, 0.014752088
    %v5131 = vmul.f32 %v5115, %v5130
    %v5132 = vadd.f32 %v5131, 0.112945676
    %v5133 = vmul.f32 %v5115, %v5132
    %v5134 = vadd.f32 %v5133, 0.4994258
    %v5135 = vmul.f32 %v5115, %v5134
    %v5136 = vadd.f32 %v5135, 1.0
    %v5137 = vrcp.pop %v5136
    %v5138 = vmul.f32 %v5136, %v5137
    %v5139 = vsub.f32 1.0, %v5138
    %v5140 = vmul.f32 %v5137, %v5139
    %v5141 = vadd.f32 %v5137, %v5140
    %vm5142 = vweird.f32 %v5136
    %vm5143 = vweird.f32 %v5137
    %vm5144 = vmor %vm5142, %vm5143
    %v5145 = vsel %vm5144, %v5137, %v5141
    %v5146 = vand.u32 2147483647, %v5136
    %vm5147 = vcmp.eq.f32.partialorder %v5146, 8.507059e+37
    %v5148 = vand.u32 %v5136, 2147483648
    %v5149 = vor.u32 1.1754944e-38, %v5148
    %v5150 = vsel %vm5147, %v5149, %v5145
    %v5151 = vmul.f32 %v5126, %v5150
    %v5152 = vmin.f32 %v5151, 1.0
    %v5153 = vmax.f32 %v5152, -1.0
    %v5154 = vmul.f32 %v3741, %v3741
    %v5155 = vmin.f32 16.0, %v5154
    %v5156 = vmul.f32 %v5155, 2.1237322e-06
    %v5157 = vadd.f32 %v5156, 0.00028619796
    %v5158 = vmul.f32 %v5155, %v5157
    %v5159 = vadd.f32 %v5158, 0.0036580483
    %v5160 = vmul.f32 %v5155, %v5159
    %v5161 = vadd.f32 %v5160, 0.05243302
    %v5162 = vmul.f32 %v5155, %v5161
    %v5163 = vadd.f32 %v5162, 0.18741608
    %v5164 = vmul.f32 %v5155, %v5163
    %v5165 = vadd.f32 %v5164, 1.1283791
    %v5166 = vmul.f32 %v3741, %v5165
    %v5167 = vmul.f32 %v5155, 3.8918573e-05
    %v5168 = vadd.f32 %v5167, 0.001143296
    %v5169 = vmul.f32 %v5155, %v5168
    %v5170 = vadd.f32 %v5169, 0.014752088
    %v5171 = vmul.f32 %v5155, %v5170
    %v5172 = vadd.f32 %v5171, 0.112945676
    %v5173 = vmul.f32 %v5155, %v5172
    %v5174 = vadd.f32 %v5173, 0.4994258
    %v5175 = vmul.f32 %v5155, %v5174
    %v5176 = vadd.f32 %v5175, 1.0
    %v5177 = vrcp.pop %v5176
    %v5178 = vmul.f32 %v5176, %v5177
    %v5179 = vsub.f32 1.0, %v5178
    %v5180 = vmul.f32 %v5177, %v5179
    %v5181 = vadd.f32 %v5177, %v5180
    %vm5182 = vweird.f32 %v5176
    %vm5183 = vweird.f32 %v5177
    %vm5184 = vmor %vm5182, %vm5183
    %v5185 = vsel %vm5184, %v5177, %v5181
    %v5186 = vand.u32 2147483647, %v5176
    %vm5187 = vcmp.eq.f32.partialorder %v5186, 8.507059e+37
    %v5188 = vand.u32 %v5176, 2147483648
    %v5189 = vor.u32 1.1754944e-38, %v5188
    %v5190 = vsel %vm5187, %v5189, %v5185
    %v5191 = vmul.f32 %v5166, %v5190
    %v5192 = vmin.f32 %v5191, 1.0
    %v5193 = vmax.f32 %v5192, -1.0
    %v5194 = vmul.f32 %v3742, %v3742
    %v5195 = vmin.f32 16.0, %v5194
    %v5196 = vmul.f32 %v5195, 2.1237322e-06
    %v5197 = vadd.f32 %v5196, 0.00028619796
    %v5198 = vmul.f32 %v5195, %v5197
    %v5199 = vadd.f32 %v5198, 0.0036580483
    %v5200 = vmul.f32 %v5195, %v5199
    %v5201 = vadd.f32 %v5200, 0.05243302
    %v5202 = vmul.f32 %v5195, %v5201
    %v5203 = vadd.f32 %v5202, 0.18741608
    %v5204 = vmul.f32 %v5195, %v5203
    %v5205 = vadd.f32 %v5204, 1.1283791
    %v5206 = vmul.f32 %v3742, %v5205
    %v5207 = vmul.f32 %v5195, 3.8918573e-05
    %v5208 = vadd.f32 %v5207, 0.001143296
    %v5209 = vmul.f32 %v5195, %v5208
    %v5210 = vadd.f32 %v5209, 0.014752088
    %v5211 = vmul.f32 %v5195, %v5210
    %v5212 = vadd.f32 %v5211, 0.112945676
    %v5213 = vmul.f32 %v5195, %v5212
    %v5214 = vadd.f32 %v5213, 0.4994258
    %v5215 = vmul.f32 %v5195, %v5214
    %v5216 = vadd.f32 %v5215, 1.0
    %v5217 = vrcp.pop %v5216
    %v5218 = vmul.f32 %v5216, %v5217
    %v5219 = vsub.f32 1.0, %v5218
    %v5220 = vmul.f32 %v5217, %v5219
    %v5221 = vadd.f32 %v5217, %v5220
    %vm5222 = vweird.f32 %v5216
    %vm5223 = vweird.f32 %v5217
    %vm5224 = vmor %vm5222, %vm5223
    %v5225 = vsel %vm5224, %v5217, %v5221
    %v5226 = vand.u32 2147483647, %v5216
    %vm5227 = vcmp.eq.f32.partialorder %v5226, 8.507059e+37
    %v5228 = vand.u32 %v5216, 2147483648
    %v5229 = vor.u32 1.1754944e-38, %v5228
    %v5230 = vsel %vm5227, %v5229, %v5225
    %v5231 = vmul.f32 %v5206, %v5230
    %v5232 = vmin.f32 %v5231, 1.0
    %v5233 = vmax.f32 %v5232, -1.0
    %v5234 = vmul.f32 %v3743, %v3743
    %v5235 = vmin.f32 16.0, %v5234
    %v5236 = vmul.f32 %v5235, 2.1237322e-06
    %v5237 = vadd.f32 %v5236, 0.00028619796
    %v5238 = vmul.f32 %v5235, %v5237
    %v5239 = vadd.f32 %v5238, 0.0036580483
    %v5240 = vmul.f32 %v5235, %v5239
    %v5241 = vadd.f32 %v5240, 0.05243302
    %v5242 = vmul.f32 %v5235, %v5241
    %v5243 = vadd.f32 %v5242, 0.18741608
    %v5244 = vmul.f32 %v5235, %v5243
    %v5245 = vadd.f32 %v5244, 1.1283791
    %v5246 = vmul.f32 %v3743, %v5245
    %v5247 = vmul.f32 %v5235, 3.8918573e-05
    %v5248 = vadd.f32 %v5247, 0.001143296
    %v5249 = vmul.f32 %v5235, %v5248
    %v5250 = vadd.f32 %v5249, 0.014752088
    %v5251 = vmul.f32 %v5235, %v5250
    %v5252 = vadd.f32 %v5251, 0.112945676
    %v5253 = vmul.f32 %v5235, %v5252
    %v5254 = vadd.f32 %v5253, 0.4994258
    %v5255 = vmul.f32 %v5235, %v5254
    %v5256 = vadd.f32 %v5255, 1.0
    %v5257 = vrcp.pop %v5256
    %v5258 = vmul.f32 %v5256, %v5257
    %v5259 = vsub.f32 1.0, %v5258
    %v5260 = vmul.f32 %v5257, %v5259
    %v5261 = vadd.f32 %v5257, %v5260
    %vm5262 = vweird.f32 %v5256
    %vm5263 = vweird.f32 %v5257
    %vm5264 = vmor %vm5262, %vm5263
    %v5265 = vsel %vm5264, %v5257, %v5261
    %v5266 = vand.u32 2147483647, %v5256
    %vm5267 = vcmp.eq.f32.partialorder %v5266, 8.507059e+37
    %v5268 = vand.u32 %v5256, 2147483648
    %v5269 = vor.u32 1.1754944e-38, %v5268
    %v5270 = vsel %vm5267, %v5269, %v5265
    %v5271 = vmul.f32 %v5246, %v5270
    %v5272 = vmin.f32 %v5271, 1.0
    %v5273 = vmax.f32 %v5272, -1.0
    %v5274 = vmul.f32 %v3744, %v3744
    %v5275 = vmin.f32 16.0, %v5274
    %v5276 = vmul.f32 %v5275, 2.1237322e-06
    %v5277 = vadd.f32 %v5276, 0.00028619796
    %v5278 = vmul.f32 %v5275, %v5277
    %v5279 = vadd.f32 %v5278, 0.0036580483
    %v5280 = vmul.f32 %v5275, %v5279
    %v5281 = vadd.f32 %v5280, 0.05243302
    %v5282 = vmul.f32 %v5275, %v5281
    %v5283 = vadd.f32 %v5282, 0.18741608
    %v5284 = vmul.f32 %v5275, %v5283
    %v5285 = vadd.f32 %v5284, 1.1283791
    %v5286 = vmul.f32 %v3744, %v5285
    %v5287 = vmul.f32 %v5275, 3.8918573e-05
    %v5288 = vadd.f32 %v5287, 0.001143296
    %v5289 = vmul.f32 %v5275, %v5288
    %v5290 = vadd.f32 %v5289, 0.014752088
    %v5291 = vmul.f32 %v5275, %v5290
    %v5292 = vadd.f32 %v5291, 0.112945676
    %v5293 = vmul.f32 %v5275, %v5292
    %v5294 = vadd.f32 %v5293, 0.4994258
    %v5295 = vmul.f32 %v5275, %v5294
    %v5296 = vadd.f32 %v5295, 1.0
    %v5297 = vrcp.pop %v5296
    %v5298 = vmul.f32 %v5296, %v5297
    %v5299 = vsub.f32 1.0, %v5298
    %v5300 = vmul.f32 %v5297, %v5299
    %v5301 = vadd.f32 %v5297, %v5300
    %vm5302 = vweird.f32 %v5296
    %vm5303 = vweird.f32 %v5297
    %vm5304 = vmor %vm5302, %vm5303
    %v5305 = vsel %vm5304, %v5297, %v5301
    %v5306 = vand.u32 2147483647, %v5296
    %vm5307 = vcmp.eq.f32.partialorder %v5306, 8.507059e+37
    %v5308 = vand.u32 %v5296, 2147483648
    %v5309 = vor.u32 1.1754944e-38, %v5308
    %v5310 = vsel %vm5307, %v5309, %v5305
    %v5311 = vmul.f32 %v5286, %v5310
    %v5312 = vmin.f32 %v5311, 1.0
    %v5313 = vmax.f32 %v5312, -1.0
    %v5314 = vmul.f32 %v3745, %v3745
    %v5315 = vmin.f32 16.0, %v5314
    %v5316 = vmul.f32 %v5315, 2.1237322e-06
    %v5317 = vadd.f32 %v5316, 0.00028619796
    %v5318 = vmul.f32 %v5315, %v5317
    %v5319 = vadd.f32 %v5318, 0.0036580483
    %v5320 = vmul.f32 %v5315, %v5319
    %v5321 = vadd.f32 %v5320, 0.05243302
    %v5322 = vmul.f32 %v5315, %v5321
    %v5323 = vadd.f32 %v5322, 0.18741608
    %v5324 = vmul.f32 %v5315, %v5323
    %v5325 = vadd.f32 %v5324, 1.1283791
    %v5326 = vmul.f32 %v3745, %v5325
    %v5327 = vmul.f32 %v5315, 3.8918573e-05
    %v5328 = vadd.f32 %v5327, 0.001143296
    %v5329 = vmul.f32 %v5315, %v5328
    %v5330 = vadd.f32 %v5329, 0.014752088
    %v5331 = vmul.f32 %v5315, %v5330
    %v5332 = vadd.f32 %v5331, 0.112945676
    %v5333 = vmul.f32 %v5315, %v5332
    %v5334 = vadd.f32 %v5333, 0.4994258
    %v5335 = vmul.f32 %v5315, %v5334
    %v5336 = vadd.f32 %v5335, 1.0
    %v5337 = vrcp.pop %v5336
    %v5338 = vmul.f32 %v5336, %v5337
    %v5339 = vsub.f32 1.0, %v5338
    %v5340 = vmul.f32 %v5337, %v5339
    %v5341 = vadd.f32 %v5337, %v5340
    %vm5342 = vweird.f32 %v5336
    %vm5343 = vweird.f32 %v5337
    %vm5344 = vmor %vm5342, %vm5343
    %v5345 = vsel %vm5344, %v5337, %v5341
    %v5346 = vand.u32 2147483647, %v5336
    %vm5347 = vcmp.eq.f32.partialorder %v5346, 8.507059e+37
    %v5348 = vand.u32 %v5336, 2147483648
    %v5349 = vor.u32 1.1754944e-38, %v5348
    %v5350 = vsel %vm5347, %v5349, %v5345
    %v5351 = vmul.f32 %v5326, %v5350
    %v5352 = vmin.f32 %v5351, 1.0
    %v5353 = vmax.f32 %v5352, -1.0
    %v5354 = vmul.f32 %v3746, %v3746
    %v5355 = vmin.f32 16.0, %v5354
    %v5356 = vmul.f32 %v5355, 2.1237322e-06
    %v5357 = vadd.f32 %v5356, 0.00028619796
    %v5358 = vmul.f32 %v5355, %v5357
    %v5359 = vadd.f32 %v5358, 0.0036580483
    %v5360 = vmul.f32 %v5355, %v5359
    %v5361 = vadd.f32 %v5360, 0.05243302
    %v5362 = vmul.f32 %v5355, %v5361
    %v5363 = vadd.f32 %v5362, 0.18741608
    %v5364 = vmul.f32 %v5355, %v5363
    %v5365 = vadd.f32 %v5364, 1.1283791
    %v5366 = vmul.f32 %v3746, %v5365
    %v5367 = vmul.f32 %v5355, 3.8918573e-05
    %v5368 = vadd.f32 %v5367, 0.001143296
    %v5369 = vmul.f32 %v5355, %v5368
    %v5370 = vadd.f32 %v5369, 0.014752088
    %v5371 = vmul.f32 %v5355, %v5370
    %v5372 = vadd.f32 %v5371, 0.112945676
    %v5373 = vmul.f32 %v5355, %v5372
    %v5374 = vadd.f32 %v5373, 0.4994258
    %v5375 = vmul.f32 %v5355, %v5374
    %v5376 = vadd.f32 %v5375, 1.0
    %v5377 = vrcp.pop %v5376
    %v5378 = vmul.f32 %v5376, %v5377
    %v5379 = vsub.f32 1.0, %v5378
    %v5380 = vmul.f32 %v5377, %v5379
    %v5381 = vadd.f32 %v5377, %v5380
    %vm5382 = vweird.f32 %v5376
    %vm5383 = vweird.f32 %v5377
    %vm5384 = vmor %vm5382, %vm5383
    %v5385 = vsel %vm5384, %v5377, %v5381
    %v5386 = vand.u32 2147483647, %v5376
    %vm5387 = vcmp.eq.f32.partialorder %v5386, 8.507059e+37
    %v5388 = vand.u32 %v5376, 2147483648
    %v5389 = vor.u32 1.1754944e-38, %v5388
    %v5390 = vsel %vm5387, %v5389, %v5385
    %v5391 = vmul.f32 %v5366, %v5390
    %v5392 = vmin.f32 %v5391, 1.0
    %v5393 = vmax.f32 %v5392, -1.0
    %v5394 = vmul.f32 %v3747, %v3747
    %v5395 = vmin.f32 16.0, %v5394
    %v5396 = vmul.f32 %v5395, 2.1237322e-06
    %v5397 = vadd.f32 %v5396, 0.00028619796
    %v5398 = vmul.f32 %v5395, %v5397
    %v5399 = vadd.f32 %v5398, 0.0036580483
    %v5400 = vmul.f32 %v5395, %v5399
    %v5401 = vadd.f32 %v5400, 0.05243302
    %v5402 = vmul.f32 %v5395, %v5401
    %v5403 = vadd.f32 %v5402, 0.18741608
    %v5404 = vmul.f32 %v5395, %v5403
    %v5405 = vadd.f32 %v5404, 1.1283791
    %v5406 = vmul.f32 %v3747, %v5405
    %v5407 = vmul.f32 %v5395, 3.8918573e-05
    %v5408 = vadd.f32 %v5407, 0.001143296
    %v5409 = vmul.f32 %v5395, %v5408
    %v5410 = vadd.f32 %v5409, 0.014752088
    %v5411 = vmul.f32 %v5395, %v5410
    %v5412 = vadd.f32 %v5411, 0.112945676
    %v5413 = vmul.f32 %v5395, %v5412
    %v5414 = vadd.f32 %v5413, 0.4994258
    %v5415 = vmul.f32 %v5395, %v5414
    %v5416 = vadd.f32 %v5415, 1.0
    %v5417 = vrcp.pop %v5416
    %v5418 = vmul.f32 %v5416, %v5417
    %v5419 = vsub.f32 1.0, %v5418
    %v5420 = vmul.f32 %v5417, %v5419
    %v5421 = vadd.f32 %v5417, %v5420
    %vm5422 = vweird.f32 %v5416
    %vm5423 = vweird.f32 %v5417
    %vm5424 = vmor %vm5422, %vm5423
    %v5425 = vsel %vm5424, %v5417, %v5421
    %v5426 = vand.u32 2147483647, %v5416
    %vm5427 = vcmp.eq.f32.partialorder %v5426, 8.507059e+37
    %v5428 = vand.u32 %v5416, 2147483648
    %v5429 = vor.u32 1.1754944e-38, %v5428
    %v5430 = vsel %vm5427, %v5429, %v5425
    %v5431 = vmul.f32 %v5406, %v5430
    %v5432 = vmin.f32 %v5431, 1.0
    %v5433 = vmax.f32 %v5432, -1.0
    %v5434 = vmul.f32 %v3748, %v3748
    %v5435 = vmin.f32 16.0, %v5434
    %v5436 = vmul.f32 %v5435, 2.1237322e-06
    %v5437 = vadd.f32 %v5436, 0.00028619796
    %v5438 = vmul.f32 %v5435, %v5437
    %v5439 = vadd.f32 %v5438, 0.0036580483
    %v5440 = vmul.f32 %v5435, %v5439
    %v5441 = vadd.f32 %v5440, 0.05243302
    %v5442 = vmul.f32 %v5435, %v5441
    %v5443 = vadd.f32 %v5442, 0.18741608
    %v5444 = vmul.f32 %v5435, %v5443
    %v5445 = vadd.f32 %v5444, 1.1283791
    %v5446 = vmul.f32 %v3748, %v5445
    %v5447 = vmul.f32 %v5435, 3.8918573e-05
    %v5448 = vadd.f32 %v5447, 0.001143296
    %v5449 = vmul.f32 %v5435, %v5448
    %v5450 = vadd.f32 %v5449, 0.014752088
    %v5451 = vmul.f32 %v5435, %v5450
    %v5452 = vadd.f32 %v5451, 0.112945676
    %v5453 = vmul.f32 %v5435, %v5452
    %v5454 = vadd.f32 %v5453, 0.4994258
    %v5455 = vmul.f32 %v5435, %v5454
    %v5456 = vadd.f32 %v5455, 1.0
    %v5457 = vrcp.pop %v5456
    %v5458 = vmul.f32 %v5456, %v5457
    %v5459 = vsub.f32 1.0, %v5458
    %v5460 = vmul.f32 %v5457, %v5459
    %v5461 = vadd.f32 %v5457, %v5460
    %vm5462 = vweird.f32 %v5456
    %vm5463 = vweird.f32 %v5457
    %vm5464 = vmor %vm5462, %vm5463
    %v5465 = vsel %vm5464, %v5457, %v5461
    %v5466 = vand.u32 2147483647, %v5456
    %vm5467 = vcmp.eq.f32.partialorder %v5466, 8.507059e+37
    %v5468 = vand.u32 %v5456, 2147483648
    %v5469 = vor.u32 1.1754944e-38, %v5468
    %v5470 = vsel %vm5467, %v5469, %v5465
    %v5471 = vmul.f32 %v5446, %v5470
    %v5472 = vmin.f32 %v5471, 1.0
    %v5473 = vmax.f32 %v5472, -1.0
    %v5474 = vmul.f32 %v3749, %v3749
    %v5475 = vmin.f32 16.0, %v5474
    %v5476 = vmul.f32 %v5475, 2.1237322e-06
    %v5477 = vadd.f32 %v5476, 0.00028619796
    %v5478 = vmul.f32 %v5475, %v5477
    %v5479 = vadd.f32 %v5478, 0.0036580483
    %v5480 = vmul.f32 %v5475, %v5479
    %v5481 = vadd.f32 %v5480, 0.05243302
    %v5482 = vmul.f32 %v5475, %v5481
    %v5483 = vadd.f32 %v5482, 0.18741608
    %v5484 = vmul.f32 %v5475, %v5483
    %v5485 = vadd.f32 %v5484, 1.1283791
    %v5486 = vmul.f32 %v3749, %v5485
    %v5487 = vmul.f32 %v5475, 3.8918573e-05
    %v5488 = vadd.f32 %v5487, 0.001143296
    %v5489 = vmul.f32 %v5475, %v5488
    %v5490 = vadd.f32 %v5489, 0.014752088
    %v5491 = vmul.f32 %v5475, %v5490
    %v5492 = vadd.f32 %v5491, 0.112945676
    %v5493 = vmul.f32 %v5475, %v5492
    %v5494 = vadd.f32 %v5493, 0.4994258
    %v5495 = vmul.f32 %v5475, %v5494
    %v5496 = vadd.f32 %v5495, 1.0
    %v5497 = vrcp.pop %v5496
    %v5498 = vmul.f32 %v5496, %v5497
    %v5499 = vsub.f32 1.0, %v5498
    %v5500 = vmul.f32 %v5497, %v5499
    %v5501 = vadd.f32 %v5497, %v5500
    %vm5502 = vweird.f32 %v5496
    %vm5503 = vweird.f32 %v5497
    %vm5504 = vmor %vm5502, %vm5503
    %v5505 = vsel %vm5504, %v5497, %v5501
    %v5506 = vand.u32 2147483647, %v5496
    %vm5507 = vcmp.eq.f32.partialorder %v5506, 8.507059e+37
    %v5508 = vand.u32 %v5496, 2147483648
    %v5509 = vor.u32 1.1754944e-38, %v5508
    %v5510 = vsel %vm5507, %v5509, %v5505
    %v5511 = vmul.f32 %v5486, %v5510
    %v5512 = vmin.f32 %v5511, 1.0
    %v5513 = vmax.f32 %v5512, -1.0
    %v5514 = vmul.f32 %v3750, %v3750
    %v5515 = vmin.f32 16.0, %v5514
    %v5516 = vmul.f32 %v5515, 2.1237322e-06
    %v5517 = vadd.f32 %v5516, 0.00028619796
    %v5518 = vmul.f32 %v5515, %v5517
    %v5519 = vadd.f32 %v5518, 0.0036580483
    %v5520 = vmul.f32 %v5515, %v5519
    %v5521 = vadd.f32 %v5520, 0.05243302
    %v5522 = vmul.f32 %v5515, %v5521
    %v5523 = vadd.f32 %v5522, 0.18741608
    %v5524 = vmul.f32 %v5515, %v5523
    %v5525 = vadd.f32 %v5524, 1.1283791
    %v5526 = vmul.f32 %v3750, %v5525
    %v5527 = vmul.f32 %v5515, 3.8918573e-05
    %v5528 = vadd.f32 %v5527, 0.001143296
    %v5529 = vmul.f32 %v5515, %v5528
    %v5530 = vadd.f32 %v5529, 0.014752088
    %v5531 = vmul.f32 %v5515, %v5530
    %v5532 = vadd.f32 %v5531, 0.112945676
    %v5533 = vmul.f32 %v5515, %v5532
    %v5534 = vadd.f32 %v5533, 0.4994258
    %v5535 = vmul.f32 %v5515, %v5534
    %v5536 = vadd.f32 %v5535, 1.0
    %v5537 = vrcp.pop %v5536
    %v5538 = vmul.f32 %v5536, %v5537
    %v5539 = vsub.f32 1.0, %v5538
    %v5540 = vmul.f32 %v5537, %v5539
    %v5541 = vadd.f32 %v5537, %v5540
    %vm5542 = vweird.f32 %v5536
    %vm5543 = vweird.f32 %v5537
    %vm5544 = vmor %vm5542, %vm5543
    %v5545 = vsel %vm5544, %v5537, %v5541
    %v5546 = vand.u32 2147483647, %v5536
    %vm5547 = vcmp.eq.f32.partialorder %v5546, 8.507059e+37
    %v5548 = vand.u32 %v5536, 2147483648
    %v5549 = vor.u32 1.1754944e-38, %v5548
    %v5550 = vsel %vm5547, %v5549, %v5545
    %v5551 = vmul.f32 %v5526, %v5550
    %v5552 = vmin.f32 %v5551, 1.0
    %v5553 = vmax.f32 %v5552, -1.0
    %v5554 = vmul.f32 %v3751, %v3751
    %v5555 = vmin.f32 16.0, %v5554
    %v5556 = vmul.f32 %v5555, 2.1237322e-06
    %v5557 = vadd.f32 %v5556, 0.00028619796
    %v5558 = vmul.f32 %v5555, %v5557
    %v5559 = vadd.f32 %v5558, 0.0036580483
    %v5560 = vmul.f32 %v5555, %v5559
    %v5561 = vadd.f32 %v5560, 0.05243302
    %v5562 = vmul.f32 %v5555, %v5561
    %v5563 = vadd.f32 %v5562, 0.18741608
    %v5564 = vmul.f32 %v5555, %v5563
    %v5565 = vadd.f32 %v5564, 1.1283791
    %v5566 = vmul.f32 %v3751, %v5565
    %v5567 = vmul.f32 %v5555, 3.8918573e-05
    %v5568 = vadd.f32 %v5567, 0.001143296
    %v5569 = vmul.f32 %v5555, %v5568
    %v5570 = vadd.f32 %v5569, 0.014752088
    %v5571 = vmul.f32 %v5555, %v5570
    %v5572 = vadd.f32 %v5571, 0.112945676
    %v5573 = vmul.f32 %v5555, %v5572
    %v5574 = vadd.f32 %v5573, 0.4994258
    %v5575 = vmul.f32 %v5555, %v5574
    %v5576 = vadd.f32 %v5575, 1.0
    %v5577 = vrcp.pop %v5576
    %v5578 = vmul.f32 %v5576, %v5577
    %v5579 = vsub.f32 1.0, %v5578
    %v5580 = vmul.f32 %v5577, %v5579
    %v5581 = vadd.f32 %v5577, %v5580
    %vm5582 = vweird.f32 %v5576
    %vm5583 = vweird.f32 %v5577
    %vm5584 = vmor %vm5582, %vm5583
    %v5585 = vsel %vm5584, %v5577, %v5581
    %v5586 = vand.u32 2147483647, %v5576
    %vm5587 = vcmp.eq.f32.partialorder %v5586, 8.507059e+37
    %v5588 = vand.u32 %v5576, 2147483648
    %v5589 = vor.u32 1.1754944e-38, %v5588
    %v5590 = vsel %vm5587, %v5589, %v5585
    %v5591 = vmul.f32 %v5566, %v5590
    %v5592 = vmin.f32 %v5591, 1.0
    %v5593 = vmax.f32 %v5592, -1.0
    %v5594 = vmul.f32 %v3752, %v3752
    %v5595 = vmin.f32 16.0, %v5594
    %v5596 = vmul.f32 %v5595, 2.1237322e-06
    %v5597 = vadd.f32 %v5596, 0.00028619796
    %v5598 = vmul.f32 %v5595, %v5597
    %v5599 = vadd.f32 %v5598, 0.0036580483
    %v5600 = vmul.f32 %v5595, %v5599
    %v5601 = vadd.f32 %v5600, 0.05243302
    %v5602 = vmul.f32 %v5595, %v5601
    %v5603 = vadd.f32 %v5602, 0.18741608
    %v5604 = vmul.f32 %v5595, %v5603
    %v5605 = vadd.f32 %v5604, 1.1283791
    %v5606 = vmul.f32 %v3752, %v5605
    %v5607 = vmul.f32 %v5595, 3.8918573e-05
    %v5608 = vadd.f32 %v5607, 0.001143296
    %v5609 = vmul.f32 %v5595, %v5608
    %v5610 = vadd.f32 %v5609, 0.014752088
    %v5611 = vmul.f32 %v5595, %v5610
    %v5612 = vadd.f32 %v5611, 0.112945676
    %v5613 = vmul.f32 %v5595, %v5612
    %v5614 = vadd.f32 %v5613, 0.4994258
    %v5615 = vmul.f32 %v5595, %v5614
    %v5616 = vadd.f32 %v5615, 1.0
    %v5617 = vrcp.pop %v5616
    %v5618 = vmul.f32 %v5616, %v5617
    %v5619 = vsub.f32 1.0, %v5618
    %v5620 = vmul.f32 %v5617, %v5619
    %v5621 = vadd.f32 %v5617, %v5620
    %vm5622 = vweird.f32 %v5616
    %vm5623 = vweird.f32 %v5617
    %vm5624 = vmor %vm5622, %vm5623
    %v5625 = vsel %vm5624, %v5617, %v5621
    %v5626 = vand.u32 2147483647, %v5616
    %vm5627 = vcmp.eq.f32.partialorder %v5626, 8.507059e+37
    %v5628 = vand.u32 %v5616, 2147483648
    %v5629 = vor.u32 1.1754944e-38, %v5628
    %v5630 = vsel %vm5627, %v5629, %v5625
    %v5631 = vmul.f32 %v5606, %v5630
    %v5632 = vmin.f32 %v5631, 1.0
    %v5633 = vmax.f32 %v5632, -1.0
    %v5634 = vmul.f32 %v3753, %v3753
    %v5635 = vmin.f32 16.0, %v5634
    %v5636 = vmul.f32 %v5635, 2.1237322e-06
    %v5637 = vadd.f32 %v5636, 0.00028619796
    %v5638 = vmul.f32 %v5635, %v5637
    %v5639 = vadd.f32 %v5638, 0.0036580483
    %v5640 = vmul.f32 %v5635, %v5639
    %v5641 = vadd.f32 %v5640, 0.05243302
    %v5642 = vmul.f32 %v5635, %v5641
    %v5643 = vadd.f32 %v5642, 0.18741608
    %v5644 = vmul.f32 %v5635, %v5643
    %v5645 = vadd.f32 %v5644, 1.1283791
    %v5646 = vmul.f32 %v3753, %v5645
    %v5647 = vmul.f32 %v5635, 3.8918573e-05
    %v5648 = vadd.f32 %v5647, 0.001143296
    %v5649 = vmul.f32 %v5635, %v5648
    %v5650 = vadd.f32 %v5649, 0.014752088
    %v5651 = vmul.f32 %v5635, %v5650
    %v5652 = vadd.f32 %v5651, 0.112945676
    %v5653 = vmul.f32 %v5635, %v5652
    %v5654 = vadd.f32 %v5653, 0.4994258
    %v5655 = vmul.f32 %v5635, %v5654
    %v5656 = vadd.f32 %v5655, 1.0
    %v5657 = vrcp.pop %v5656
    %v5658 = vmul.f32 %v5656, %v5657
    %v5659 = vsub.f32 1.0, %v5658
    %v5660 = vmul.f32 %v5657, %v5659
    %v5661 = vadd.f32 %v5657, %v5660
    %vm5662 = vweird.f32 %v5656
    %vm5663 = vweird.f32 %v5657
    %vm5664 = vmor %vm5662, %vm5663
    %v5665 = vsel %vm5664, %v5657, %v5661
    %v5666 = vand.u32 2147483647, %v5656
    %vm5667 = vcmp.eq.f32.partialorder %v5666, 8.507059e+37
    %v5668 = vand.u32 %v5656, 2147483648
    %v5669 = vor.u32 1.1754944e-38, %v5668
    %v5670 = vsel %vm5667, %v5669, %v5665
    %v5671 = vmul.f32 %v5646, %v5670
    %v5672 = vmin.f32 %v5671, 1.0
    %v5673 = vmax.f32 %v5672, -1.0
    %v5674 = vadd.f32 %v3793, 1.0
    %v5675 = vadd.f32 %v3833, 1.0
    %v5676 = vadd.f32 %v3873, 1.0
    %v5677 = vadd.f32 %v3913, 1.0
    %v5678 = vadd.f32 %v3953, 1.0
    %v5679 = vadd.f32 %v3993, 1.0
    %v5680 = vadd.f32 %v4033, 1.0
    %v5681 = vadd.f32 %v4073, 1.0
    %v5682 = vadd.f32 %v4113, 1.0
    %v5683 = vadd.f32 %v4153, 1.0
    %v5684 = vadd.f32 %v4193, 1.0
    %v5685 = vadd.f32 %v4233, 1.0
    %v5686 = vadd.f32 %v4273, 1.0
    %v5687 = vadd.f32 %v4313, 1.0
    %v5688 = vadd.f32 %v4353, 1.0
    %v5689 = vadd.f32 %v4393, 1.0
    %v5690 = vadd.f32 %v4433, 1.0
    %v5691 = vadd.f32 %v4473, 1.0
    %v5692 = vadd.f32 %v4513, 1.0
    %v5693 = vadd.f32 %v4553, 1.0
    %v5694 = vadd.f32 %v4593, 1.0
    %v5695 = vadd.f32 %v4633, 1.0
    %v5696 = vadd.f32 %v4673, 1.0
    %v5697 = vadd.f32 %v4713, 1.0
    %v5698 = vadd.f32 %v4753, 1.0
    %v5699 = vadd.f32 %v4793, 1.0
    %v5700 = vadd.f32 %v4833, 1.0
    %v5701 = vadd.f32 %v4873, 1.0
    %v5702 = vadd.f32 %v4913, 1.0
    %v5703 = vadd.f32 %v4953, 1.0
    %v5704 = vadd.f32 %v4993, 1.0
    %v5705 = vadd.f32 %v5033, 1.0
    %v5706 = vadd.f32 %v5073, 1.0
    %v5707 = vadd.f32 %v5113, 1.0
    %v5708 = vadd.f32 %v5153, 1.0
    %v5709 = vadd.f32 %v5193, 1.0
    %v5710 = vadd.f32 %v5233, 1.0
    %v5711 = vadd.f32 %v5273, 1.0
    %v5712 = vadd.f32 %v5313, 1.0
    %v5713 = vadd.f32 %v5353, 1.0
    %v5714 = vadd.f32 %v5393, 1.0
    %v5715 = vadd.f32 %v5433, 1.0
    %v5716 = vadd.f32 %v5473, 1.0
    %v5717 = vadd.f32 %v5513, 1.0
    %v5718 = vadd.f32 %v5553, 1.0
    %v5719 = vadd.f32 %v5593, 1.0
    %v5720 = vadd.f32 %v5633, 1.0
    %v5721 = vadd.f32 %v5673, 1.0
    %v5722 = vmul.f32 %v3658, %v5674
    %v5723 = vmul.f32 %v3659, %v5675
    %v5724 = vmul.f32 %v3660, %v5676
    %v5725 = vmul.f32 %v3661, %v5677
    %v5726 = vmul.f32 %v3662, %v5678
    %v5727 = vmul.f32 %v3663, %v5679
    %v5728 = vmul.f32 %v3664, %v5680
    %v5729 = vmul.f32 %v3665, %v5681
    %v5730 = vmul.f32 %v3666, %v5682
    %v5731 = vmul.f32 %v3667, %v5683
    %v5732 = vmul.f32 %v3668, %v5684
    %v5733 = vmul.f32 %v3669, %v5685
    %v5734 = vmul.f32 %v3670, %v5686
    %v5735 = vmul.f32 %v3671, %v5687
    %v5736 = vmul.f32 %v3672, %v5688
    %v5737 = vmul.f32 %v3673, %v5689
    %v5738 = vmul.f32 %v3674, %v5690
    %v5739 = vmul.f32 %v3675, %v5691
    %v5740 = vmul.f32 %v3676, %v5692
    %v5741 = vmul.f32 %v3677, %v5693
    %v5742 = vmul.f32 %v3678, %v5694
    %v5743 = vmul.f32 %v3679, %v5695
    %v5744 = vmul.f32 %v3680, %v5696
    %v5745 = vmul.f32 %v3681, %v5697
    %v5746 = vmul.f32 %v3682, %v5698
    %v5747 = vmul.f32 %v3683, %v5699
    %v5748 = vmul.f32 %v3684, %v5700
    %v5749 = vmul.f32 %v3685, %v5701
    %v5750 = vmul.f32 %v3686, %v5702
    %v5751 = vmul.f32 %v3687, %v5703
    %v5752 = vmul.f32 %v3688, %v5704
    %v5753 = vmul.f32 %v3689, %v5705
    %v5754 = vmul.f32 %v3690, %v5706
    %v5755 = vmul.f32 %v3691, %v5707
    %v5756 = vmul.f32 %v3692, %v5708
    %v5757 = vmul.f32 %v3693, %v5709
    %v5758 = vmul.f32 %v3694, %v5710
    %v5759 = vmul.f32 %v3695, %v5711
    %v5760 = vmul.f32 %v3696, %v5712
    %v5761 = vmul.f32 %v3697, %v5713
    %v5762 = vmul.f32 %v3698, %v5714
    %v5763 = vmul.f32 %v3699, %v5715
    %v5764 = vmul.f32 %v3700, %v5716
    %v5765 = vmul.f32 %v3701, %v5717
    %v5766 = vmul.f32 %v3702, %v5718
    %v5767 = vmul.f32 %v3703, %v5719
    %v5768 = vmul.f32 %v3704, %v5720
    %v5769 = vmul.f32 %v3705, %v5721
    %v5770 = vld [vmem:[%s6] sm:$0xff]
    %v5771 = vld [vmem:[%s6 + $0x8] sm:$0xff]
    %v5772 = vld [vmem:[%s6 + $0x10] sm:$0xff]
    %v5773 = vld [vmem:[%s6 + $0x18] sm:$0xff]
    %v5774 = vld [vmem:[%s6 + $0x20] sm:$0xff]
    %v5775 = vld [vmem:[%s6 + $0x28] sm:$0xff]
    %v5776 = vld [vmem:[%s6 + $0x30] sm:$0xff]
    %v5777 = vld [vmem:[%s6 + $0x38] sm:$0xff]
    %v5778 = vld [vmem:[%s7] sm:$0x1]
    %v5780 = vperm.slane %v5778, 0
    %vm5782 = vcmask 523264
    %v5784 = vsel %vm5782, %v5722, 0
    %v5787 = vsel %vm5782, %v5723, 0
    %v5790 = vsel %vm5782, %v5724, 0
    %v5793 = vsel %vm5782, %v5725, 0
    %v5796 = vsel %vm5782, %v5726, 0
    %v5799 = vsel %vm5782, %v5727, 0
    %v5802 = vsel %vm5782, %v5728, 0
    %v5805 = vsel %vm5782, %v5729, 0
    %v5808 = vsel %vm5782, %v5730, 0
    %v5811 = vsel %vm5782, %v5731, 0
    %v5814 = vsel %vm5782, %v5732, 0
    %v5817 = vsel %vm5782, %v5733, 0
    %v5820 = vsel %vm5782, %v5734, 0
    %v5823 = vsel %vm5782, %v5735, 0
    %v5826 = vsel %vm5782, %v5736, 0
    %v5829 = vsel %vm5782, %v5737, 0
    %v5832 = vsel %vm5782, %v5738, 0
    %v5835 = vsel %vm5782, %v5739, 0
    %v5838 = vsel %vm5782, %v5740, 0
    %v5841 = vsel %vm5782, %v5741, 0
    %v5844 = vsel %vm5782, %v5742, 0
    %v5847 = vsel %vm5782, %v5743, 0
    %v5850 = vsel %vm5782, %v5744, 0
    %v5853 = vsel %vm5782, %v5745, 0
    %v5856 = vsel %vm5782, %v5746, 0
    %v5859 = vsel %vm5782, %v5747, 0
    %v5862 = vsel %vm5782, %v5748, 0
    %v5865 = vsel %vm5782, %v5749, 0
    %v5868 = vsel %vm5782, %v5750, 0
    %v5871 = vsel %vm5782, %v5751, 0
    %v5874 = vsel %vm5782, %v5752, 0
    %v5877 = vsel %vm5782, %v5753, 0
    %v5880 = vsel %vm5782, %v5754, 0
    %v5883 = vsel %vm5782, %v5755, 0
    %v5886 = vsel %vm5782, %v5756, 0
    %v5889 = vsel %vm5782, %v5757, 0
    %v5892 = vsel %vm5782, %v5758, 0
    %v5895 = vsel %vm5782, %v5759, 0
    %v5898 = vsel %vm5782, %v5760, 0
    %v5901 = vsel %vm5782, %v5761, 0
    %v5904 = vsel %vm5782, %v5762, 0
    %v5907 = vsel %vm5782, %v5763, 0
    %v5910 = vsel %vm5782, %v5764, 0
    %v5913 = vsel %vm5782, %v5765, 0
    %v5916 = vsel %vm5782, %v5766, 0
    %v5919 = vsel %vm5782, %v5767, 0
    %v5922 = vsel %vm5782, %v5768, 0
    %v5925 = vsel %vm5782, %v5769, 0
    %5927 = vmatpush.msra.mxu0 0.0
    %5928 = vmatpush.msra.mxu0 0.0
    %5929 = vmatpush.msra.mxu0 0.0
    %5930 = vmatpush.msra.mxu0 0.0
    %5931 = vmatpush.msra.mxu0 0.0
    %5932 = vmatpush.msra.mxu0 0.0
    %5933 = vmatpush.msra.mxu0 0.0
    %5934 = vmatpush.msra.mxu0 0.0
    %5935 = vmatpush.msra.mxu0 %v5777
    %5936 = vmatpush.msra.mxu0 %v5776
    %5937 = vmatpush.msra.mxu0 %v5775
    %5938 = vmatpush.msra.mxu0 %v5774
    %5939 = vmatpush.msra.mxu0 %v5773
    %5940 = vmatpush.msra.mxu0 %v5772
    %5941 = vmatpush.msra.mxu0 %v5771
    %5942 = vmatpush.msra.mxu0 %v5770
    %5943 = vmatmul.f32.gmra.mxu0 %v5784
    %v5944 = vpop.f32.mrf.mxu0
    %v5945 = vadd.f32 %v5780, %v5944
    %5946 = vmatmul.f32.gmra.mxu0 %v5787
    %v5947 = vpop.f32.mrf.mxu0
    %v5948 = vadd.f32 %v5780, %v5947
    %5949 = vmatmul.f32.gmra.mxu0 %v5790
    %v5950 = vpop.f32.mrf.mxu0
    %v5951 = vadd.f32 %v5780, %v5950
    %5952 = vmatmul.f32.gmra.mxu0 %v5793
    %v5953 = vpop.f32.mrf.mxu0
    %v5954 = vadd.f32 %v5780, %v5953
    %5955 = vmatmul.f32.gmra.mxu0 %v5796
    %v5956 = vpop.f32.mrf.mxu0
    %v5957 = vadd.f32 %v5780, %v5956
    %5958 = vmatmul.f32.gmra.mxu0 %v5799
    %v5959 = vpop.f32.mrf.mxu0
    %v5960 = vadd.f32 %v5780, %v5959
    %5961 = vmatmul.f32.gmra.mxu0 %v5802
    %v5962 = vpop.f32.mrf.mxu0
    %v5963 = vadd.f32 %v5780, %v5962
    %5964 = vmatmul.f32.gmra.mxu0 %v5805
    %v5965 = vpop.f32.mrf.mxu0
    %v5966 = vadd.f32 %v5780, %v5965
    %5967 = vmatmul.f32.gmra.mxu0 %v5808
    %v5968 = vpop.f32.mrf.mxu0
    %v5969 = vadd.f32 %v5780, %v5968
    %5970 = vmatmul.f32.gmra.mxu0 %v5811
    %v5971 = vpop.f32.mrf.mxu0
    %v5972 = vadd.f32 %v5780, %v5971
    %5973 = vmatmul.f32.gmra.mxu0 %v5814
    %v5974 = vpop.f32.mrf.mxu0
    %v5975 = vadd.f32 %v5780, %v5974
    %5976 = vmatmul.f32.gmra.mxu0 %v5817
    %v5977 = vpop.f32.mrf.mxu0
    %v5978 = vadd.f32 %v5780, %v5977
    %5979 = vmatmul.f32.gmra.mxu0 %v5820
    %v5980 = vpop.f32.mrf.mxu0
    %v5981 = vadd.f32 %v5780, %v5980
    %5982 = vmatmul.f32.gmra.mxu0 %v5823
    %v5983 = vpop.f32.mrf.mxu0
    %v5984 = vadd.f32 %v5780, %v5983
    %5985 = vmatmul.f32.gmra.mxu0 %v5826
    %v5986 = vpop.f32.mrf.mxu0
    %v5987 = vadd.f32 %v5780, %v5986
    %5988 = vmatmul.f32.gmra.mxu0 %v5829
    %v5989 = vpop.f32.mrf.mxu0
    %v5990 = vadd.f32 %v5780, %v5989
    %5991 = vmatmul.f32.gmra.mxu0 %v5832
    %v5992 = vpop.f32.mrf.mxu0
    %v5993 = vadd.f32 %v5780, %v5992
    %5994 = vmatmul.f32.gmra.mxu0 %v5835
    %v5995 = vpop.f32.mrf.mxu0
    %v5996 = vadd.f32 %v5780, %v5995
    %5997 = vmatmul.f32.gmra.mxu0 %v5838
    %v5998 = vpop.f32.mrf.mxu0
    %v5999 = vadd.f32 %v5780, %v5998
    %6000 = vmatmul.f32.gmra.mxu0 %v5841
    %v6001 = vpop.f32.mrf.mxu0
    %v6002 = vadd.f32 %v5780, %v6001
    %6003 = vmatmul.f32.gmra.mxu0 %v5844
    %v6004 = vpop.f32.mrf.mxu0
    %v6005 = vadd.f32 %v5780, %v6004
    %6006 = vmatmul.f32.gmra.mxu0 %v5847
    %v6007 = vpop.f32.mrf.mxu0
    %v6008 = vadd.f32 %v5780, %v6007
    %6009 = vmatmul.f32.gmra.mxu0 %v5850
    %v6010 = vpop.f32.mrf.mxu0
    %v6011 = vadd.f32 %v5780, %v6010
    %6012 = vmatmul.f32.gmra.mxu0 %v5853
    %v6013 = vpop.f32.mrf.mxu0
    %v6014 = vadd.f32 %v5780, %v6013
    %6015 = vmatmul.f32.gmra.mxu0 %v5856
    %v6016 = vpop.f32.mrf.mxu0
    %v6017 = vadd.f32 %v5780, %v6016
    %6018 = vmatmul.f32.gmra.mxu0 %v5859
    %v6019 = vpop.f32.mrf.mxu0
    %v6020 = vadd.f32 %v5780, %v6019
    %6021 = vmatmul.f32.gmra.mxu0 %v5862
    %v6022 = vpop.f32.mrf.mxu0
    %v6023 = vadd.f32 %v5780, %v6022
    %6024 = vmatmul.f32.gmra.mxu0 %v5865
    %v6025 = vpop.f32.mrf.mxu0
    %v6026 = vadd.f32 %v5780, %v6025
    %6027 = vmatmul.f32.gmra.mxu0 %v5868
    %v6028 = vpop.f32.mrf.mxu0
    %v6029 = vadd.f32 %v5780, %v6028
    %6030 = vmatmul.f32.gmra.mxu0 %v5871
    %v6031 = vpop.f32.mrf.mxu0
    %v6032 = vadd.f32 %v5780, %v6031
    %6033 = vmatmul.f32.gmra.mxu0 %v5874
    %v6034 = vpop.f32.mrf.mxu0
    %v6035 = vadd.f32 %v5780, %v6034
    %6036 = vmatmul.f32.gmra.mxu0 %v5877
    %v6037 = vpop.f32.mrf.mxu0
    %v6038 = vadd.f32 %v5780, %v6037
    %6039 = vmatmul.f32.gmra.mxu0 %v5880
    %v6040 = vpop.f32.mrf.mxu0
    %v6041 = vadd.f32 %v5780, %v6040
    %6042 = vmatmul.f32.gmra.mxu0 %v5883
    %v6043 = vpop.f32.mrf.mxu0
    %v6044 = vadd.f32 %v5780, %v6043
    %6045 = vmatmul.f32.gmra.mxu0 %v5886
    %v6046 = vpop.f32.mrf.mxu0
    %v6047 = vadd.f32 %v5780, %v6046
    %6048 = vmatmul.f32.gmra.mxu0 %v5889
    %v6049 = vpop.f32.mrf.mxu0
    %v6050 = vadd.f32 %v5780, %v6049
    %6051 = vmatmul.f32.gmra.mxu0 %v5892
    %v6052 = vpop.f32.mrf.mxu0
    %v6053 = vadd.f32 %v5780, %v6052
    %6054 = vmatmul.f32.gmra.mxu0 %v5895
    %v6055 = vpop.f32.mrf.mxu0
    %v6056 = vadd.f32 %v5780, %v6055
    %6057 = vmatmul.f32.gmra.mxu0 %v5898
    %v6058 = vpop.f32.mrf.mxu0
    %v6059 = vadd.f32 %v5780, %v6058
    %6060 = vmatmul.f32.gmra.mxu0 %v5901
    %v6061 = vpop.f32.mrf.mxu0
    %v6062 = vadd.f32 %v5780, %v6061
    %6063 = vmatmul.f32.gmra.mxu0 %v5904
    %v6064 = vpop.f32.mrf.mxu0
    %v6065 = vadd.f32 %v5780, %v6064
    %6066 = vmatmul.f32.gmra.mxu0 %v5907
    %v6067 = vpop.f32.mrf.mxu0
    %v6068 = vadd.f32 %v5780, %v6067
    %6069 = vmatmul.f32.gmra.mxu0 %v5910
    %v6070 = vpop.f32.mrf.mxu0
    %v6071 = vadd.f32 %v5780, %v6070
    %6072 = vmatmul.f32.gmra.mxu0 %v5913
    %v6073 = vpop.f32.mrf.mxu0
    %v6074 = vadd.f32 %v5780, %v6073
    %6075 = vmatmul.f32.gmra.mxu0 %v5916
    %v6076 = vpop.f32.mrf.mxu0
    %v6077 = vadd.f32 %v5780, %v6076
    %6078 = vmatmul.f32.gmra.mxu0 %v5919
    %v6079 = vpop.f32.mrf.mxu0
    %v6080 = vadd.f32 %v5780, %v6079
    %6081 = vmatmul.f32.gmra.mxu0 %v5922
    %v6082 = vpop.f32.mrf.mxu0
    %v6083 = vadd.f32 %v5780, %v6082
    %6084 = vmatmul.f32.gmra.mxu0 %v5925
    %v6085 = vpop.f32.mrf.mxu0
    %v6086 = vadd.f32 %v5780, %v6085
    %6087 = vdwg.mxu0
    %6088 = vst.msk [vmem:[%s8] sm:$0xff] %vm1688, %v5945
    %6089 = vst.msk [vmem:[%s8 + $0x8] sm:$0xff] %vm1688, %v5948
    %6090 = vst.msk [vmem:[%s8 + $0x10] sm:$0xff] %vm1688, %v5951
    %6091 = vst.msk [vmem:[%s8 + $0x18] sm:$0xff] %vm1688, %v5954
    %6092 = vst.msk [vmem:[%s8 + $0x20] sm:$0xff] %vm1688, %v5957
    %6093 = vst.msk [vmem:[%s8 + $0x28] sm:$0xff] %vm1688, %v5960
    %6094 = vst.msk [vmem:[%s8 + $0x30] sm:$0xff] %vm1688, %v5963
    %6095 = vst.msk [vmem:[%s8 + $0x38] sm:$0xff] %vm1688, %v5966
    %6096 = vst.msk [vmem:[%s8 + $0x40] sm:$0xff] %vm1688, %v5969
    %6097 = vst.msk [vmem:[%s8 + $0x48] sm:$0xff] %vm1688, %v5972
    %6098 = vst.msk [vmem:[%s8 + $0x50] sm:$0xff] %vm1688, %v5975
    %6099 = vst.msk [vmem:[%s8 + $0x58] sm:$0xff] %vm1688, %v5978
    %6100 = vst.msk [vmem:[%s8 + $0x60] sm:$0xff] %vm1688, %v5981
    %6101 = vst.msk [vmem:[%s8 + $0x68] sm:$0xff] %vm1688, %v5984
    %6102 = vst.msk [vmem:[%s8 + $0x70] sm:$0xff] %vm1688, %v5987
    %6103 = vst.msk [vmem:[%s8 + $0x78] sm:$0xff] %vm1688, %v5990
    %6104 = vst.msk [vmem:[%s8 + $0x80] sm:$0xff] %vm1688, %v5993
    %6105 = vst.msk [vmem:[%s8 + $0x88] sm:$0xff] %vm1688, %v5996
    %6106 = vst.msk [vmem:[%s8 + $0x90] sm:$0xff] %vm1688, %v5999
    %6107 = vst.msk [vmem:[%s8 + $0x98] sm:$0xff] %vm1688, %v6002
    %6108 = vst.msk [vmem:[%s8 + $0xa0] sm:$0xff] %vm1688, %v6005
    %6109 = vst.msk [vmem:[%s8 + $0xa8] sm:$0xff] %vm1688, %v6008
    %6110 = vst.msk [vmem:[%s8 + $0xb0] sm:$0xff] %vm1688, %v6011
    %6111 = vst.msk [vmem:[%s8 + $0xb8] sm:$0xff] %vm1688, %v6014
    %6112 = vst.msk [vmem:[%s8 + $0xc0] sm:$0xff] %vm1688, %v6017
    %6113 = vst.msk [vmem:[%s8 + $0xc8] sm:$0xff] %vm1688, %v6020
    %6114 = vst.msk [vmem:[%s8 + $0xd0] sm:$0xff] %vm1688, %v6023
    %6115 = vst.msk [vmem:[%s8 + $0xd8] sm:$0xff] %vm1688, %v6026
    %6116 = vst.msk [vmem:[%s8 + $0xe0] sm:$0xff] %vm1688, %v6029
    %6117 = vst.msk [vmem:[%s8 + $0xe8] sm:$0xff] %vm1688, %v6032
    %6118 = vst.msk [vmem:[%s8 + $0xf0] sm:$0xff] %vm1688, %v6035
    %6119 = vst.msk [vmem:[%s8 + $0xf8] sm:$0xff] %vm1688, %v6038
    %6120 = vst.msk [vmem:[%s8 + $0x100] sm:$0xff] %vm1688, %v6041
    %6121 = vst.msk [vmem:[%s8 + $0x108] sm:$0xff] %vm1688, %v6044
    %6122 = vst.msk [vmem:[%s8 + $0x110] sm:$0xff] %vm1688, %v6047
    %6123 = vst.msk [vmem:[%s8 + $0x118] sm:$0xff] %vm1688, %v6050
    %6124 = vst.msk [vmem:[%s8 + $0x120] sm:$0xff] %vm1688, %v6053
    %6125 = vst.msk [vmem:[%s8 + $0x128] sm:$0xff] %vm1688, %v6056
    %6126 = vst.msk [vmem:[%s8 + $0x130] sm:$0xff] %vm1688, %v6059
    %6127 = vst.msk [vmem:[%s8 + $0x138] sm:$0xff] %vm1688, %v6062
    %6128 = vst.msk [vmem:[%s8 + $0x140] sm:$0xff] %vm1688, %v6065
    %6129 = vst.msk [vmem:[%s8 + $0x148] sm:$0xff] %vm1688, %v6068
    %6130 = vst.msk [vmem:[%s8 + $0x150] sm:$0xff] %vm1688, %v6071
    %6131 = vst.msk [vmem:[%s8 + $0x158] sm:$0xff] %vm1688, %v6074
    %6132 = vst.msk [vmem:[%s8 + $0x160] sm:$0xff] %vm1688, %v6077
    %6133 = vst.msk [vmem:[%s8 + $0x168] sm:$0xff] %vm1688, %v6080
    %6134 = vst.msk [vmem:[%s8 + $0x170] sm:$0xff] %vm1688, %v6083
    %6135 = vst.msk [vmem:[%s8 + $0x178] sm:$0xff] %vm1688, %v6086
  $region41: #{tpu_custom_call.1} parent=0 // pred_fallthru
    _
  // Predicated region
  $region42: #{tpu_custom_call.1} parent=0 // pred_check
    _
  $region43: #{tpu_custom_call.1} parent=0 // pred_check_branch
    %6137 = sbr.rel (0) target = $region45
  $region44: #{tpu_custom_call.1} parent=0 // pred_region
    _
  $region45: #{tpu_custom_call.1} parent=0 // pred_fallthru
    _
  // Predicated region
  $region46: #{tpu_custom_call.1} parent=0 // pred_check
    _
  $region47: #{tpu_custom_call.1} parent=0 // pred_check_branch
    %6139 = sbr.rel (0) target = $region49
  $region48: #{tpu_custom_call.1} parent=0 // pred_region
    _
  $region49: #{tpu_custom_call.1} parent=0 // pred_fallthru
    _

</llo_original>
